<compile_context>
chip_gen: v7x
topology: tpu7x:2x2x1
jax: 0.10.0
libtpu: 0.0.40
codegen_flags: <defaults>
</compile_context>

<pallas_src>
import jax
import jax.numpy as jnp
from jax.experimental import pallas as pl
from jax.experimental.pallas import tpu as pltpu


def se_kernel(x_se_ref, w1t_ref, b1_ref, w2_ref, x_ref, o_ref):
    # conv2d71 (1x1) as a row-form GEMV on the MXU with f32 accumulation.
    # w1t_ref is [C, C_mid+1]; its last column is zero and b1's last entry is 1,
    # so after the ReLU the last lane of h is exactly 1.0 (used to fold b2 in).
    h = jnp.dot(x_se_ref[...].astype(jnp.bfloat16), w1t_ref[...],
                preferred_element_type=jnp.float32)            # [1, C_mid+1]
    h = jnp.maximum(h + b1_ref[...], 0.0)                      # relu55

    # conv2d72 (1x1) for this channel tile, computed directly in column
    # orientation (channels on sublanes): broadcast-multiply + lane reduction.
    # w2_ref block is [TILE_C, C_mid+1]; its last column holds b2, which pairs
    # with h's trailing 1.0 so the bias is included in the reduction.
    z = jnp.sum(w2_ref[...].astype(jnp.float32) * h,
                axis=-1, keepdims=True)                        # [TILE_C, 1]
    s = jax.nn.sigmoid(z)                                      # sigmoid13

    # mul: gate the NCHW-native activation [TILE_C, H*W] with the per-channel
    # column [TILE_C, 1] (broadcast over the spatial lane axis).
    o_ref[...] = x_ref[...] * s


def prepare_params(w1_pt, b1, w2_pt, b2, weight_dtype=jnp.bfloat16):
    """One-time parameter prep (would be done at model-load time in practice)."""
    C_mid, C = w1_pt.shape[0], w1_pt.shape[1]
    w1 = w1_pt.reshape(C_mid, C)
    w2 = w2_pt.reshape(C, C_mid)
    # [C, C_mid+1]: w1^T plus a zero column (the "bias-carrier" lane).
    w1t_aug = jnp.concatenate([w1.T, jnp.zeros((C, 1), w1.dtype)],
                              axis=1).astype(weight_dtype)
    # [1, C_mid+1]: b1 plus a trailing 1.0 so h's last lane is exactly 1.0.
    b1_aug = jnp.concatenate([b1, jnp.ones((1,), b1.dtype)]).reshape(
        1, C_mid + 1).astype(jnp.float32)
    # [C, C_mid+1]: w2 with b2 folded in as the last column.
    w2_aug = jnp.concatenate([w2, b2.reshape(C, 1)], axis=1).astype(weight_dtype)
    return w1t_aug, b1_aug, w2_aug


def _pick_tile_c(c, max_tiles=8):
    """Largest channel tile that divides C, is a multiple of 8, and gives >=2 steps."""
    for n in range(2, max_tiles + 1):
        if c % n == 0 and (c // n) % 8 == 0:
            return c // n
    return c  # fall back to a single grid step


def se_block(x224_nchw, x223_nchw, w1t_aug, b1_aug, w2_aug, donate_main=False):
    """x224_nchw: [1, C, 1, 1]; x223_nchw: [1, C, H, W]; params from prepare_params."""
    N, C, H, W = x223_nchw.shape
    assert N == 1
    HW = H * W
    C_mid1 = w1t_aug.shape[1]          # C_mid + 1

    # Free views only (no transposes, no copies).
    x_se = x224_nchw.reshape(1, C)     # [1, C]
    x_main = x223_nchw.reshape(C, HW)  # [C, H*W], NCHW-native

    tile_c = _pick_tile_c(C)
    grid = (C // tile_c,)

    extra = {}
    if donate_main:
        # Enable when x223 is a dead intermediate inside a larger jit: gates the
        # activation in place and avoids a second ~1 MB HBM buffer. Left off by
        # default because aliasing a live user input forces XLA to insert a copy.
        extra["input_output_aliases"] = {4: 0}

    out = pl.pallas_call(
        se_kernel,
        out_shape=jax.ShapeDtypeStruct((C, HW), x223_nchw.dtype),
        grid_spec=pltpu.PrefetchScalarGridSpec(
            num_scalar_prefetch=0,
            grid=grid,
            in_specs=[
                pl.BlockSpec((1, C), lambda i: (0, 0)),          # x_se (resident)
                pl.BlockSpec((C, C_mid1), lambda i: (0, 0)),     # w1t_aug (resident)
                pl.BlockSpec((1, C_mid1), lambda i: (0, 0)),     # b1_aug (resident)
                pl.BlockSpec((tile_c, C_mid1), lambda i: (i, 0)),  # w2_aug block
                pl.BlockSpec((tile_c, HW), lambda i: (i, 0)),      # x_main block
            ],
            out_specs=pl.BlockSpec((tile_c, HW), lambda i: (i, 0)),
        ),
        compiler_params=pltpu.CompilerParams(
            dimension_semantics=("parallel",)),
        cost_estimate=pl.CostEstimate(
            flops=4 * C * C_mid1 + C * HW,
            transcendentals=C,
            bytes_accessed=(x_se.size * 4 + w1t_aug.size * 2 + b1_aug.size * 4
                            + w2_aug.size * 2 + 2 * C * HW * 4)),
        **extra,
    )(x_se, w1t_aug, b1_aug, w2_aug, x_main)

    # Free view back to NCHW.
    return out.reshape(1, C, H, W)


def reference(x224_nchw, x223_nchw, w1_pt, b1, w2_pt, b2):
    """Pure-f32 JAX reference matching the PyTorch module semantics."""
    C_mid, C = w1_pt.shape[0], w1_pt.shape[1]
    v = x224_nchw.reshape(1, C)
    h = jnp.maximum(v @ w1_pt.reshape(C_mid, C).T + b1[None, :], 0.0)
    s = jax.nn.sigmoid(h @ w2_pt.reshape(C, C_mid).T + b2[None, :])
    return x223_nchw * s.reshape(1, C, 1, 1)


if __name__ == "__main__":
    C, C_mid, H, W = 1232, 308, 14, 14
    key = jax.random.PRNGKey(0)
    k1, k2, k3, k4, k5, k6 = jax.random.split(key, 6)

    # Deterministic synthetic parameters (shapes from the module's __init__).
    w1_pt = jax.random.normal(k1, (C_mid, C, 1, 1), jnp.float32) * 0.02
    b1 = jax.random.normal(k2, (C_mid,), jnp.float32) * 0.02
    w2_pt = jax.random.normal(k3, (C, C_mid, 1, 1), jnp.float32) * 0.02
    b2 = jax.random.normal(k4, (C,), jnp.float32) * 0.02

    # Inputs matching the module's forward signature.
    x224 = jax.random.normal(k5, (1, C, 1, 1), jnp.float32)   # squeezed input
    x223 = jax.random.normal(k6, (1, C, H, W), jnp.float32)   # main activation

    # One-time weight prep (layout + bf16), outside the per-call hot path.
    w1t_aug, b1_aug, w2_aug = prepare_params(w1_pt, b1, w2_pt, b2)

    se_fn = jax.jit(se_block)
    out = jax.block_until_ready(se_fn(x224, x223, w1t_aug, b1_aug, w2_aug))
    ref = jax.block_until_ready(reference(x224, x223, w1_pt, b1, w2_pt, b2))

    assert out.shape == (1, C, H, W), out.shape
    # bf16 weights (per perf review) => slightly looser tolerance than pure f32.
    assert jnp.allclose(out, ref, atol=2e-2, rtol=2e-2), float(jnp.max(jnp.abs(out - ref)))

    print("KERNEL_OK")
</pallas_src>

<mosaic_0001>
module attributes {stable_mosaic.version = 11 : i64} {
  func.func @se_kernel(%arg0: i32, %arg1: memref<1x1232xf32, #tpu.memory_space<vmem>>, %arg2: memref<1232x309xbf16, #tpu.memory_space<vmem>>, %arg3: memref<1x309xf32, #tpu.memory_space<vmem>>, %arg4: memref<616x309xbf16, #tpu.memory_space<vmem>>, %arg5: memref<616x196xf32, #tpu.memory_space<vmem>>, %arg6: memref<616x196xf32, #tpu.memory_space<vmem>>) attributes {dimension_semantics = [#tpu.dimension_semantics<parallel>], iteration_bounds = array<i64: 2>, scalar_prefetch = 0 : i64, scratch_operands = 0 : i64, tpu.core_type = #tpu.core_type<tc>, window_params = [{pipeline_mode = #tpu.pipeline_mode<synchronous>, transform_indices = @transform_0, window_bounds = array<i64: 1, 1232>}, {pipeline_mode = #tpu.pipeline_mode<synchronous>, transform_indices = @transform_1, window_bounds = array<i64: 1232, 309>}, {pipeline_mode = #tpu.pipeline_mode<synchronous>, transform_indices = @transform_2, window_bounds = array<i64: 1, 309>}, {transform_indices = @transform_3, window_bounds = array<i64: 616, 309>}, {transform_indices = @transform_4, window_bounds = array<i64: 616, 196>}, {transform_indices = @transform_5, window_bounds = array<i64: 616, 196>}]} {
    %c0 = arith.constant 0 : index
    %c0_0 = arith.constant 0 : index
    %0 = vector.load %arg1[%c0, %c0_0] : memref<1x1232xf32, #tpu.memory_space<vmem>>, vector<1x1232xf32>
    %1 = arith.truncf %0 : vector<1x1232xf32> to vector<1x1232xbf16>
    %c0_1 = arith.constant 0 : index
    %c0_2 = arith.constant 0 : index
    %2 = vector.load %arg2[%c0_1, %c0_2] : memref<1232x309xbf16, #tpu.memory_space<vmem>>, vector<1232x309xbf16>
    %cst = arith.constant dense<0.000000e+00> : vector<1x309xf32>
    %3 = tpu.matmul %1, %2, %cst {dimension_numbers = #tpu.dot_dimension_numbers<[1], [0], [0], [1], [0, 0, 1, 1], [], []>} : vector<1x1232xbf16>, vector<1232x309xbf16>, vector<1x309xf32> -> vector<1x309xf32>
    %c0_3 = arith.constant 0 : index
    %c0_4 = arith.constant 0 : index
    %4 = vector.load %arg3[%c0_3, %c0_4] : memref<1x309xf32, #tpu.memory_space<vmem>>, vector<1x309xf32>
    %5 = arith.addf %3, %4 : vector<1x309xf32>
    %cst_5 = arith.constant 0.000000e+00 : f32
    %6 = vector.broadcast %cst_5 : f32 to vector<1x309xf32>
    %7 = arith.maximumf %5, %6 : vector<1x309xf32>
    %c0_6 = arith.constant 0 : index
    %c0_7 = arith.constant 0 : index
    %8 = vector.load %arg4[%c0_6, %c0_7] : memref<616x309xbf16, #tpu.memory_space<vmem>>, vector<616x309xbf16>
    %9 = arith.extf %8 : vector<616x309xbf16> to vector<616x309xf32>
    %10 = vector.broadcast %7 : vector<1x309xf32> to vector<616x309xf32>
    %11 = arith.mulf %9, %10 : vector<616x309xf32>
    %cst_8 = arith.constant dense<0.000000e+00> : vector<616xf32>
    %12 = vector.multi_reduction <add>, %11, %cst_8 [1] : vector<616x309xf32> to vector<616xf32>
    %13 = vector.shape_cast %12 : vector<616xf32> to vector<616x1xf32>
    %14 = arith.negf %13 : vector<616x1xf32>
    %15 = math.exp %14 : vector<616x1xf32>
    %cst_9 = arith.constant 1.000000e+00 : f32
    %16 = vector.broadcast %cst_9 : f32 to vector<616x1xf32>
    %17 = arith.addf %16, %15 : vector<616x1xf32>
    %18 = arith.divf %16, %17 : vector<616x1xf32>
    %c0_10 = arith.constant 0 : index
    %c0_11 = arith.constant 0 : index
    %19 = vector.load %arg5[%c0_10, %c0_11] : memref<616x196xf32, #tpu.memory_space<vmem>>, vector<616x196xf32>
    %20 = vector.broadcast %18 : vector<616x1xf32> to vector<616x196xf32>
    %21 = arith.mulf %19, %20 : vector<616x196xf32>
    %c0_12 = arith.constant 0 : index
    %c0_13 = arith.constant 0 : index
    %22 = vector.load %arg6[%c0_12, %c0_13] : memref<616x196xf32, #tpu.memory_space<vmem>>, vector<616x196xf32>
    tpu.vector_store %arg6[%c0_12, %c0_13], %21 {strides = array<i32>} : memref<616x196xf32, #tpu.memory_space<vmem>>, vector<616x196xf32>,
    return
  }
  func.func @transform_0(%arg0: i32) -> (i32, i32) {
    %c0_i32 = arith.constant 0 : i32
    %c0_i32_0 = arith.constant 0 : i32
    %c0_i32_1 = arith.constant 0 : i32
    return %c0_i32, %c0_i32_0 : i32, i32
  }
  func.func @transform_1(%arg0: i32) -> (i32, i32) {
    %c0_i32 = arith.constant 0 : i32
    %c0_i32_0 = arith.constant 0 : i32
    %c0_i32_1 = arith.constant 0 : i32
    return %c0_i32, %c0_i32_0 : i32, i32
  }
  func.func @transform_2(%arg0: i32) -> (i32, i32) {
    %c0_i32 = arith.constant 0 : i32
    %c0_i32_0 = arith.constant 0 : i32
    %c0_i32_1 = arith.constant 0 : i32
    return %c0_i32, %c0_i32_0 : i32, i32
  }
  func.func @transform_3(%arg0: i32) -> (i32, i32) {
    %c0_i32 = arith.constant 0 : i32
    %c0_i32_0 = arith.constant 0 : i32
    return %arg0, %c0_i32 : i32, i32
  }
  func.func @transform_4(%arg0: i32) -> (i32, i32) {
    %c0_i32 = arith.constant 0 : i32
    %c0_i32_0 = arith.constant 0 : i32
    return %arg0, %c0_i32 : i32, i32
  }
  func.func @transform_5(%arg0: i32) -> (i32, i32) {
    %c0_i32 = arith.constant 0 : i32
    %c0_i32_0 = arith.constant 0 : i32
    return %arg0, %c0_i32 : i32, i32
  }
}

</mosaic_0001>

<llo_original>
// kernel: se_block.1
$region0: #{se_block.1}
  #allocation0 [shape = 'u32[]', space=smem, size = 0x4, offset = 0x4, fixed_abs, tag = 'smem constant byte address 0x4 - core index']
  #allocation1 [shape = 'u32[144,128]{1,0:T(1,128)}', space=vmem, size = 0x12000, scoped, tag = 'internal scratch']
  %s0 = inlined_call_operand.vmem [shape: f32[1,1232], index: 0, kind: input, shape index: {}]
  %s1 = inlined_call_operand.vmem [shape: bf16[1232,309], index: 1, kind: input, shape index: {}]
  %s2 = inlined_call_operand.vmem [shape: f32[1,309], index: 2, kind: input, shape index: {}]
  %s3 = inlined_call_operand.vmem [shape: bf16[1232,309], index: 3, kind: input, shape index: {}]
  %s4 = inlined_call_operand.vmem [shape: f32[1232,196], index: 4, kind: input, shape index: {}]
  %s5 = inlined_call_operand.vmem [shape: f32[1232,196], index: 5, kind: output, shape index: {}]
  %s6 = sld [smem:[#allocation0]]
  $region53: #{se_block.1} parent=0
    _
  %s8 = ssub.s32 1, %s6
  %s9 = scalar_select 0, %s8, %s6
  loop: start=0, step=1, limit=4
  $region2: #{se_block.1} parent=0 // loop_pre_header
    _
  $region3: #{se_block.1} parent=0 // loop_header
    %s11 = sphi 0, %s15
    %p12 = scmp.ge.s32.totalorder %s11, 4
    %s19 = sphi 0, %s19
    %s21 = sphi 0, %s19
    %s22 = sphi 0, %s21
    %s36 = sphi 0, %s22
    %s40 = sphi 0, %s40
    %s42 = sphi 0, %s40
    %s43 = sphi 0, %s42
    %s57 = sphi 0, %s43
    %s61 = sphi 0, %s61
    %s63 = sphi 0, %s61
    %s64 = sphi 0, %s63
    %s78 = sphi 0, %s64
    %s84 = sphi 0, %s86
    %s87 = sphi 0, %s84
    %s88 = sphi 0, %s87
    %s104 = sphi 0, %s88
    %s110 = sphi 0, %s112
    %s113 = sphi 0, %s110
    %s114 = sphi 0, %s113
    %s130 = sphi 0, %s114
    %s136 = sphi 0, %s138
    %s139 = sphi 0, %s136
    %s140 = sphi 0, %s139
    %s156 = sphi 0, %s140
  $region4: #{se_block.1} parent=0 // loop_header_branch
    %14 = sbr.rel (%p12) target = $region8
  $region5: #{se_block.1} parent=0 // loop_body
    %s16 = ssub.s32 %s11, 1
    %s17 = ssub.s32 %s11, 2
    %s18 = sadd.s32 %s11, 1
    %s20 = sadd.s32 %s19, 1
    %p23 = scmp.eq.s32.totalorder %s11, 1
    %p24 = scmp.ne.s32.totalorder %s19, %s21
    %p25 = scmp.eq.s32.totalorder %s11, 0
    %p26 = por %p24, %p25
    %p27 = scmp.ne.s32.totalorder %s19, %s21
    %p28 = scmp.eq.s32.totalorder %s16, 1
    %p29 = por %p27, %p28
    %p30 = scmp.ne.s32.totalorder %s21, %s22
    %p31 = scmp.eq.s32.totalorder %s16, 0
    %p32 = por %p30, %p31
    %p33 = scmp.ne.s32.totalorder %s21, %s22
    %p34 = scmp.eq.s32.totalorder %s17, 1
    %p35 = por %p33, %p34
    %p37 = scmp.ne.s32.totalorder %s22, %s36
    %p38 = scmp.eq.s32.totalorder %s17, 0
    %p39 = por %p37, %p38
    %s41 = sadd.s32 %s40, 1
    %p44 = scmp.eq.s32.totalorder %s11, 1
    %p45 = scmp.ne.s32.totalorder %s40, %s42
    %p46 = scmp.eq.s32.totalorder %s11, 0
    %p47 = por %p45, %p46
    %p48 = scmp.ne.s32.totalorder %s40, %s42
    %p49 = scmp.eq.s32.totalorder %s16, 1
    %p50 = por %p48, %p49
    %p51 = scmp.ne.s32.totalorder %s42, %s43
    %p52 = scmp.eq.s32.totalorder %s16, 0
    %p53 = por %p51, %p52
    %p54 = scmp.ne.s32.totalorder %s42, %s43
    %p55 = scmp.eq.s32.totalorder %s17, 1
    %p56 = por %p54, %p55
    %p58 = scmp.ne.s32.totalorder %s43, %s57
    %p59 = scmp.eq.s32.totalorder %s17, 0
    %p60 = por %p58, %p59
    %s62 = sadd.s32 %s61, 1
    %p65 = scmp.eq.s32.totalorder %s11, 1
    %p66 = scmp.ne.s32.totalorder %s61, %s63
    %p67 = scmp.eq.s32.totalorder %s11, 0
    %p68 = por %p66, %p67
    %p69 = scmp.ne.s32.totalorder %s61, %s63
    %p70 = scmp.eq.s32.totalorder %s16, 1
    %p71 = por %p69, %p70
    %p72 = scmp.ne.s32.totalorder %s63, %s64
    %p73 = scmp.eq.s32.totalorder %s16, 0
    %p74 = por %p72, %p73
    %p75 = scmp.ne.s32.totalorder %s63, %s64
    %p76 = scmp.eq.s32.totalorder %s17, 1
    %p77 = por %p75, %p76
    %p79 = scmp.ne.s32.totalorder %s64, %s78
    %p80 = scmp.eq.s32.totalorder %s17, 0
    %p81 = por %p79, %p80
    %s82 = ssub.s32 %s11, %s18
    %p83 = scmp.eq.s32.totalorder %s82, 0
    %s85 = sadd.s32 %s84, 1
    %s86 = scalar_select %p83, %s84, %s85
    %p89 = pneg %p83
    %p90 = scmp.eq.s32.totalorder %s11, 1
    %p91 = por %p89, %p90
    %p92 = scmp.ne.s32.totalorder %s84, %s87
    %p93 = scmp.eq.s32.totalorder %s11, 0
    %p94 = por %p92, %p93
    %p95 = scmp.ne.s32.totalorder %s84, %s87
    %p96 = scmp.eq.s32.totalorder %s16, 1
    %p97 = por %p95, %p96
    %p98 = scmp.ne.s32.totalorder %s87, %s88
    %p99 = scmp.eq.s32.totalorder %s16, 0
    %p100 = por %p98, %p99
    %p101 = scmp.ne.s32.totalorder %s87, %s88
    %p102 = scmp.eq.s32.totalorder %s17, 1
    %p103 = por %p101, %p102
    %p105 = scmp.ne.s32.totalorder %s88, %s104
    %p106 = scmp.eq.s32.totalorder %s17, 0
    %p107 = por %p105, %p106
    %s108 = ssub.s32 %s11, %s18
    %p109 = scmp.eq.s32.totalorder %s108, 0
    %s111 = sadd.s32 %s110, 1
    %s112 = scalar_select %p109, %s110, %s111
    %p115 = pneg %p109
    %p116 = scmp.eq.s32.totalorder %s11, 1
    %p117 = por %p115, %p116
    %p118 = scmp.ne.s32.totalorder %s110, %s113
    %p119 = scmp.eq.s32.totalorder %s11, 0
    %p120 = por %p118, %p119
    %p121 = scmp.ne.s32.totalorder %s110, %s113
    %p122 = scmp.eq.s32.totalorder %s16, 1
    %p123 = por %p121, %p122
    %p124 = scmp.ne.s32.totalorder %s113, %s114
    %p125 = scmp.eq.s32.totalorder %s16, 0
    %p126 = por %p124, %p125
    %p127 = scmp.ne.s32.totalorder %s113, %s114
    %p128 = scmp.eq.s32.totalorder %s17, 1
    %p129 = por %p127, %p128
    %p131 = scmp.ne.s32.totalorder %s114, %s130
    %p132 = scmp.eq.s32.totalorder %s17, 0
    %p133 = por %p131, %p132
    %s134 = ssub.s32 %s11, %s18
    %p135 = scmp.eq.s32.totalorder %s134, 0
    %s137 = sadd.s32 %s136, 1
    %s138 = scalar_select %p135, %s136, %s137
    %p141 = pneg %p135
    %p142 = scmp.eq.s32.totalorder %s11, 1
    %p143 = por %p141, %p142
    %p144 = scmp.ne.s32.totalorder %s136, %s139
    %p145 = scmp.eq.s32.totalorder %s11, 0
    %p146 = por %p144, %p145
    %p147 = scmp.ne.s32.totalorder %s136, %s139
    %p148 = scmp.eq.s32.totalorder %s16, 1
    %p149 = por %p147, %p148
    %p150 = scmp.ne.s32.totalorder %s139, %s140
    %p151 = scmp.eq.s32.totalorder %s16, 0
    %p152 = por %p150, %p151
    %p153 = scmp.ne.s32.totalorder %s139, %s140
    %p154 = scmp.eq.s32.totalorder %s17, 1
    %p155 = por %p153, %p154
    %p157 = scmp.ne.s32.totalorder %s140, %s156
    %p158 = scmp.eq.s32.totalorder %s17, 0
    %p159 = por %p157, %p158
    %p160 = scmp.le.s32.totalorder 1, %s11
    %p161 = scmp.lt.s32.totalorder %s11, 3
    %p162 = pnand %p160, %p161
    %p163 = pneg %p162
    // Predicated region
    $region9: #{se_block.1} parent=5 // pred_check
      _
    $region10: #{se_block.1} parent=5 // pred_check_branch
      %165 = sbr.rel (%p162) target = $region12
    $region11: #{se_block.1} parent=5 // pred_region
      %s166 = ssub.s32 %s11, 1
      // Predicated region
      $region13: #{se_block.1} parent=11 // pred_check
        %p167 = pneg %p32
      $region14: #{se_block.1} parent=11 // pred_check_branch
        %169 = sbr.rel (%p167) target = $region16
      $region15: #{se_block.1} parent=11 // pred_region
        _
      $region16: #{se_block.1} parent=11 // pred_fallthru
        _
      // Predicated region
      $region17: #{se_block.1} parent=11 // pred_check
        %p170 = pneg %p53
      $region18: #{se_block.1} parent=11 // pred_check_branch
        %172 = sbr.rel (%p170) target = $region20
      $region19: #{se_block.1} parent=11 // pred_region
        _
      $region20: #{se_block.1} parent=11 // pred_fallthru
        _
      // Predicated region
      $region21: #{se_block.1} parent=11 // pred_check
        %p173 = pneg %p74
      $region22: #{se_block.1} parent=11 // pred_check_branch
        %175 = sbr.rel (%p173) target = $region24
      $region23: #{se_block.1} parent=11 // pred_region
        _
      $region24: #{se_block.1} parent=11 // pred_fallthru
        _
    $region12: #{se_block.1} parent=5 // pred_fallthru
      _
    %p176 = scmp.lt.s32.totalorder %s11, 2
    // Predicated region
    $region25: #{se_block.1} parent=5 // pred_check
      %p177 = pneg %p176
    $region26: #{se_block.1} parent=5 // pred_check_branch
      %179 = sbr.rel (%p177) target = $region28
    $region27: #{se_block.1} parent=5 // pred_region
      // Predicated region
      $region29: #{se_block.1} parent=27 // pred_check
        %p180 = pneg %p94
      $region30: #{se_block.1} parent=27 // pred_check_branch
        %182 = sbr.rel (%p180) target = $region32
      $region31: #{se_block.1} parent=27 // pred_region
        %s183 = smul.u32 77, %s11
        %p184 = scmp.lt.s32.totalorder %s183, 153
        %s185 = scalar_select %p184, %s183, 153
        %s186 = smul.addr %s185, 3
        %s187 = smul.addr %s186, 4
        %s188 = scalar_lea.vmem %s3, %s187
        %s189 = smul.u32 77, %s11
      $region32: #{se_block.1} parent=27 // pred_fallthru
        _
      // Predicated region
      $region33: #{se_block.1} parent=27 // pred_check
        %p190 = pneg %p120
      $region34: #{se_block.1} parent=27 // pred_check_branch
        %192 = sbr.rel (%p190) target = $region36
      $region35: #{se_block.1} parent=27 // pred_region
        %s193 = smul.u32 77, %s11
        %p194 = scmp.lt.s32.totalorder %s193, 153
        %s195 = scalar_select %p194, %s193, 153
        %s196 = smul.addr %s195, 2
        %s197 = smul.addr %s196, 8
        %s198 = scalar_lea.vmem %s4, %s197
        %s199 = smul.u32 77, %s11
      $region36: #{se_block.1} parent=27 // pred_fallthru
        _
    $region28: #{se_block.1} parent=5 // pred_fallthru
      _
    %p200 = scmp.le.s32.totalorder 1, %s11
    %p201 = scmp.lt.s32.totalorder %s11, 3
    %p202 = pnand %p200, %p201
    %p203 = pneg %p202
    // Predicated region
    $region37: #{se_block.1} parent=5 // pred_check
      _
    $region38: #{se_block.1} parent=5 // pred_check_branch
      %205 = sbr.rel (%p202) target = $region40
    $region39: #{se_block.1} parent=5 // pred_region
      %s206 = ssub.s32 %s11, 1
      %p207 = pneg %p32
      %p208 = pneg %p29
      %p209 = pneg %p53
      %p210 = pneg %p50
      %p211 = pneg %p74
      %p212 = pneg %p71
      %s213 = smul.u32 77, %s16
      %p214 = scmp.lt.s32.totalorder %s213, 153
      %s215 = scalar_select %p214, %s213, 153
      %s216 = smul.addr %s215, 3
      %s217 = smul.addr %s216, 4
      %s218 = scalar_lea.vmem %s3, %s217
      %p219 = pneg %p100
      %p220 = pneg %p97
      %s221 = smul.u32 77, %s16
      %p222 = scmp.lt.s32.totalorder %s221, 153
      %s223 = scalar_select %p222, %s221, 153
      %s224 = smul.addr %s223, 2
      %s225 = smul.addr %s224, 8
      %s226 = scalar_lea.vmem %s4, %s225
      %p227 = pneg %p126
      %p228 = pneg %p123
      %p229 = pneg %p152
      %p230 = pneg %p149
      %s231 = smul.u32 77, %s16
      %p232 = scmp.lt.s32.totalorder %s231, 153
      %s233 = scalar_select %p232, %s231, 153
      %s234 = smul.addr %s233, 2
      %s235 = smul.addr %s234, 8
      %s236 = scalar_lea.vmem %s5, %s235
      %s237 = smul.u32 77, %s16
      %p238 = scmp.lt.s32.totalorder %s237, 153
      %s239 = scalar_select %p238, %s237, 153
      %s240 = smul.addr %s239, 3
      %s241 = smul.addr %s240, 4
      %s242 = scalar_lea.vmem %s3, %s241
      %s243 = smul.u32 77, %s16
      %s244 = smul.u32 77, %s16
      %p245 = scmp.lt.s32.totalorder %s244, 153
      %s246 = scalar_select %p245, %s244, 153
      %s247 = smul.addr %s246, 2
      %s248 = smul.addr %s247, 8
      %s249 = scalar_lea.vmem %s4, %s248
      %s250 = smul.u32 77, %s16
      %s251 = smul.u32 77, %s16
      %p252 = scmp.lt.s32.totalorder %s251, 153
      %s253 = scalar_select %p252, %s251, 153
      %s254 = smul.addr %s253, 2
      %s255 = smul.addr %s254, 8
      %s256 = scalar_lea.vmem %s5, %s255
      %s257 = smul.u32 77, %s16
      %v259 = vld [vmem:[%s0] sm:$0xff]
      %v260 = vld [vmem:[%s0 + $0x8] sm:$0x3]
      %v263 = vlaneseq
      %v264 = vshrl.u32 %v263, 7
      %v265 = vsub.s32 0, %v264
      %v266 = vrot.slane %v259, %v265
      %v267 = vlaneseq
      %v268 = vshrl.u32 %v267, 7
      %v269 = vsub.s32 1, %v268
      %v270 = vrot.slane %v259, %v269
      %v271 = vlaneseq
      %v272 = vshrl.u32 %v271, 7
      %v273 = vsub.s32 2, %v272
      %v274 = vrot.slane %v259, %v273
      %v275 = vlaneseq
      %v276 = vshrl.u32 %v275, 7
      %v277 = vsub.s32 3, %v276
      %v278 = vrot.slane %v259, %v277
      %v279 = vlaneseq
      %v280 = vshrl.u32 %v279, 7
      %v281 = vsub.s32 4, %v280
      %v282 = vrot.slane %v259, %v281
      %v283 = vlaneseq
      %v284 = vshrl.u32 %v283, 7
      %v285 = vsub.s32 5, %v284
      %v286 = vrot.slane %v259, %v285
      %v287 = vlaneseq
      %v288 = vshrl.u32 %v287, 7
      %v289 = vsub.s32 6, %v288
      %v290 = vrot.slane %v259, %v289
      %v291 = vlaneseq
      %v292 = vshrl.u32 %v291, 7
      %v293 = vsub.s32 7, %v292
      %v294 = vrot.slane %v259, %v293
      %v295 = vlaneseq
      %v296 = vshrl.u32 %v295, 7
      %v297 = vsub.s32 0, %v296
      %v298 = vrot.slane %v260, %v297
      %v299 = vlaneseq
      %v300 = vshrl.u32 %v299, 7
      %v301 = vsub.s32 1, %v300
      %v302 = vrot.slane %v260, %v301
      %v313 = vpack.c.bf16 %v266, %v266
      %v314 = vpack.c.bf16 %v270, %v270
      %v315 = vpack.c.bf16 %v274, %v274
      %v316 = vpack.c.bf16 %v278, %v278
      %v317 = vpack.c.bf16 %v282, %v282
      %v318 = vpack.c.bf16 %v286, %v286
      %v319 = vpack.c.bf16 %v290, %v290
      %v320 = vpack.c.bf16 %v294, %v294
      %v321 = vpack.c.bf16 %v298, %v298
      %v322 = vpack.c.bf16 %v302, %v302
      %v323 = vld [vmem:[%s1] sm:$0xff]
      %v324 = vld [vmem:[%s1 + $0x8] sm:$0xf]
      %v325 = vld [vmem:[%s1 + $0xc] sm:$0xff]
      %v326 = vld [vmem:[%s1 + $0x14] sm:$0xf]
      %v327 = vld [vmem:[%s1 + $0x18] sm:$0xff]
      %v328 = vld [vmem:[%s1 + $0x20] sm:$0xf]
      %v329 = vld [vmem:[%s1 + $0x24] sm:$0xff]
      %v330 = vld [vmem:[%s1 + $0x2c] sm:$0xf]
      %v331 = vld [vmem:[%s1 + $0x30] sm:$0xff]
      %v332 = vld [vmem:[%s1 + $0x38] sm:$0xf]
      %v333 = vld [vmem:[%s1 + $0x3c] sm:$0xff]
      %v334 = vld [vmem:[%s1 + $0x44] sm:$0xf]
      %v335 = vld [vmem:[%s1 + $0x48] sm:$0xff]
      %v336 = vld [vmem:[%s1 + $0x50] sm:$0xf]
      %v337 = vld [vmem:[%s1 + $0x54] sm:$0xff]
      %v338 = vld [vmem:[%s1 + $0x5c] sm:$0xf]
      %v339 = vld [vmem:[%s1 + $0x60] sm:$0xff]
      %v340 = vld [vmem:[%s1 + $0x68] sm:$0xf]
      %v341 = vld [vmem:[%s1 + $0x6c] sm:$0xff]
      %v342 = vld [vmem:[%s1 + $0x74] sm:$0xf]
      %v343 = vld [vmem:[%s1 + $0x78] sm:$0xff]
      %v344 = vld [vmem:[%s1 + $0x80] sm:$0xf]
      %v345 = vld [vmem:[%s1 + $0x84] sm:$0xff]
      %v346 = vld [vmem:[%s1 + $0x8c] sm:$0xf]
      %v347 = vld [vmem:[%s1 + $0x90] sm:$0xff]
      %v348 = vld [vmem:[%s1 + $0x98] sm:$0xf]
      %v349 = vld [vmem:[%s1 + $0x9c] sm:$0xff]
      %v350 = vld [vmem:[%s1 + $0xa4] sm:$0xf]
      %v351 = vld [vmem:[%s1 + $0xa8] sm:$0xff]
      %v352 = vld [vmem:[%s1 + $0xb0] sm:$0xf]
      %v353 = vld [vmem:[%s1 + $0xb4] sm:$0xff]
      %v354 = vld [vmem:[%s1 + $0xbc] sm:$0xf]
      %v355 = vld [vmem:[%s1 + $0xc0] sm:$0xff]
      %v356 = vld [vmem:[%s1 + $0xc8] sm:$0xf]
      %v357 = vld [vmem:[%s1 + $0xcc] sm:$0xff]
      %v358 = vld [vmem:[%s1 + $0xd4] sm:$0xf]
      %v359 = vld [vmem:[%s1 + $0xd8] sm:$0xff]
      %v360 = vld [vmem:[%s1 + $0xe0] sm:$0xf]
      %v361 = vld [vmem:[%s1 + $0xe4] sm:$0xff]
      %v362 = vld [vmem:[%s1 + $0xec] sm:$0xf]
      %v363 = vld [vmem:[%s1 + $0xf0] sm:$0xff]
      %v364 = vld [vmem:[%s1 + $0xf8] sm:$0xf]
      %v365 = vld [vmem:[%s1 + $0xfc] sm:$0xff]
      %v366 = vld [vmem:[%s1 + $0x104] sm:$0xf]
      %v367 = vld [vmem:[%s1 + $0x108] sm:$0xff]
      %v368 = vld [vmem:[%s1 + $0x110] sm:$0xf]
      %v369 = vld [vmem:[%s1 + $0x114] sm:$0xff]
      %v370 = vld [vmem:[%s1 + $0x11c] sm:$0xf]
      %v371 = vld [vmem:[%s1 + $0x120] sm:$0xff]
      %v372 = vld [vmem:[%s1 + $0x128] sm:$0xf]
      %v373 = vld [vmem:[%s1 + $0x12c] sm:$0xff]
      %v374 = vld [vmem:[%s1 + $0x134] sm:$0xf]
      %v375 = vld [vmem:[%s1 + $0x138] sm:$0xff]
      %v376 = vld [vmem:[%s1 + $0x140] sm:$0xf]
      %v377 = vld [vmem:[%s1 + $0x144] sm:$0xff]
      %v378 = vld [vmem:[%s1 + $0x14c] sm:$0xf]
      %v379 = vld [vmem:[%s1 + $0x150] sm:$0xff]
      %v380 = vld [vmem:[%s1 + $0x158] sm:$0xf]
      %v381 = vld [vmem:[%s1 + $0x15c] sm:$0xff]
      %v382 = vld [vmem:[%s1 + $0x164] sm:$0xf]
      %v383 = vld [vmem:[%s1 + $0x168] sm:$0xff]
      %v384 = vld [vmem:[%s1 + $0x170] sm:$0xf]
      %v385 = vld [vmem:[%s1 + $0x174] sm:$0xff]
      %v386 = vld [vmem:[%s1 + $0x17c] sm:$0xf]
      %v387 = vld [vmem:[%s1 + $0x180] sm:$0xff]
      %v388 = vld [vmem:[%s1 + $0x188] sm:$0xf]
      %v389 = vld [vmem:[%s1 + $0x18c] sm:$0xff]
      %v390 = vld [vmem:[%s1 + $0x194] sm:$0xf]
      %v391 = vld [vmem:[%s1 + $0x198] sm:$0xff]
      %v392 = vld [vmem:[%s1 + $0x1a0] sm:$0xf]
      %v393 = vld [vmem:[%s1 + $0x1a4] sm:$0xff]
      %v394 = vld [vmem:[%s1 + $0x1ac] sm:$0xf]
      %v395 = vld [vmem:[%s1 + $0x1b0] sm:$0xff]
      %v396 = vld [vmem:[%s1 + $0x1b8] sm:$0xf]
      %v397 = vld [vmem:[%s1 + $0x1bc] sm:$0xff]
      %v398 = vld [vmem:[%s1 + $0x1c4] sm:$0xf]
      %v399 = vld [vmem:[%s1 + $0x1c8] sm:$0xff]
      %v400 = vld [vmem:[%s1 + $0x1d0] sm:$0xf]
      %v401 = vld [vmem:[%s1 + $0x1d4] sm:$0xff]
      %v402 = vld [vmem:[%s1 + $0x1dc] sm:$0xf]
      %v403 = vld [vmem:[%s1 + $0x1e0] sm:$0xff]
      %v404 = vld [vmem:[%s1 + $0x1e8] sm:$0xf]
      %v405 = vld [vmem:[%s1 + $0x1ec] sm:$0xff]
      %v406 = vld [vmem:[%s1 + $0x1f4] sm:$0xf]
      %v407 = vld [vmem:[%s1 + $0x1f8] sm:$0xff]
      %v408 = vld [vmem:[%s1 + $0x200] sm:$0xf]
      %v409 = vld [vmem:[%s1 + $0x204] sm:$0xff]
      %v410 = vld [vmem:[%s1 + $0x20c] sm:$0xf]
      %v411 = vld [vmem:[%s1 + $0x210] sm:$0xff]
      %v412 = vld [vmem:[%s1 + $0x218] sm:$0xf]
      %v413 = vld [vmem:[%s1 + $0x21c] sm:$0xff]
      %v414 = vld [vmem:[%s1 + $0x224] sm:$0xf]
      %v415 = vld [vmem:[%s1 + $0x228] sm:$0xff]
      %v416 = vld [vmem:[%s1 + $0x230] sm:$0xf]
      %v417 = vld [vmem:[%s1 + $0x234] sm:$0xff]
      %v418 = vld [vmem:[%s1 + $0x23c] sm:$0xf]
      %v419 = vld [vmem:[%s1 + $0x240] sm:$0xff]
      %v420 = vld [vmem:[%s1 + $0x248] sm:$0xf]
      %v421 = vld [vmem:[%s1 + $0x24c] sm:$0xff]
      %v422 = vld [vmem:[%s1 + $0x254] sm:$0xf]
      %v423 = vld [vmem:[%s1 + $0x258] sm:$0xff]
      %v424 = vld [vmem:[%s1 + $0x260] sm:$0xf]
      %v425 = vld [vmem:[%s1 + $0x264] sm:$0xff]
      %v426 = vld [vmem:[%s1 + $0x26c] sm:$0xf]
      %v427 = vld [vmem:[%s1 + $0x270] sm:$0xff]
      %v428 = vld [vmem:[%s1 + $0x278] sm:$0xf]
      %v429 = vld [vmem:[%s1 + $0x27c] sm:$0xff]
      %v430 = vld [vmem:[%s1 + $0x284] sm:$0xf]
      %v431 = vld [vmem:[%s1 + $0x288] sm:$0xff]
      %v432 = vld [vmem:[%s1 + $0x290] sm:$0xf]
      %v433 = vld [vmem:[%s1 + $0x294] sm:$0xff]
      %v434 = vld [vmem:[%s1 + $0x29c] sm:$0xf]
      %v435 = vld [vmem:[%s1 + $0x2a0] sm:$0xff]
      %v436 = vld [vmem:[%s1 + $0x2a8] sm:$0xf]
      %v437 = vld [vmem:[%s1 + $0x2ac] sm:$0xff]
      %v438 = vld [vmem:[%s1 + $0x2b4] sm:$0xf]
      %v439 = vld [vmem:[%s1 + $0x2b8] sm:$0xff]
      %v440 = vld [vmem:[%s1 + $0x2c0] sm:$0xf]
      %v441 = vld [vmem:[%s1 + $0x2c4] sm:$0xff]
      %v442 = vld [vmem:[%s1 + $0x2cc] sm:$0xf]
      %v443 = vld [vmem:[%s1 + $0x2d0] sm:$0xff]
      %v444 = vld [vmem:[%s1 + $0x2d8] sm:$0xf]
      %v445 = vld [vmem:[%s1 + $0x2dc] sm:$0xff]
      %v446 = vld [vmem:[%s1 + $0x2e4] sm:$0xf]
      %v447 = vld [vmem:[%s1 + $0x2e8] sm:$0xff]
      %v448 = vld [vmem:[%s1 + $0x2f0] sm:$0xf]
      %v449 = vld [vmem:[%s1 + $0x2f4] sm:$0xff]
      %v450 = vld [vmem:[%s1 + $0x2fc] sm:$0xf]
      %v451 = vld [vmem:[%s1 + $0x300] sm:$0xff]
      %v452 = vld [vmem:[%s1 + $0x308] sm:$0xf]
      %v453 = vld [vmem:[%s1 + $0x30c] sm:$0xff]
      %v454 = vld [vmem:[%s1 + $0x314] sm:$0xf]
      %v455 = vld [vmem:[%s1 + $0x318] sm:$0xff]
      %v456 = vld [vmem:[%s1 + $0x320] sm:$0xf]
      %v457 = vld [vmem:[%s1 + $0x324] sm:$0xff]
      %v458 = vld [vmem:[%s1 + $0x32c] sm:$0xf]
      %v459 = vld [vmem:[%s1 + $0x330] sm:$0xff]
      %v460 = vld [vmem:[%s1 + $0x338] sm:$0xf]
      %v461 = vld [vmem:[%s1 + $0x33c] sm:$0xff]
      %v462 = vld [vmem:[%s1 + $0x344] sm:$0xf]
      %v463 = vld [vmem:[%s1 + $0x348] sm:$0xff]
      %v464 = vld [vmem:[%s1 + $0x350] sm:$0xf]
      %v465 = vld [vmem:[%s1 + $0x354] sm:$0xff]
      %v466 = vld [vmem:[%s1 + $0x35c] sm:$0xf]
      %v467 = vld [vmem:[%s1 + $0x360] sm:$0xff]
      %v468 = vld [vmem:[%s1 + $0x368] sm:$0xf]
      %v469 = vld [vmem:[%s1 + $0x36c] sm:$0xff]
      %v470 = vld [vmem:[%s1 + $0x374] sm:$0xf]
      %v471 = vld [vmem:[%s1 + $0x378] sm:$0xff]
      %v472 = vld [vmem:[%s1 + $0x380] sm:$0xf]
      %v473 = vld [vmem:[%s1 + $0x384] sm:$0xff]
      %v474 = vld [vmem:[%s1 + $0x38c] sm:$0xf]
      %v475 = vld [vmem:[%s1 + $0x390] sm:$0xff]
      %v476 = vld [vmem:[%s1 + $0x398] sm:$0xf]
      %v477 = vld [vmem:[%s1 + $0x39c] sm:$0xff]
      %v478 = vld [vmem:[%s1 + $0x3a4] sm:$0xf]
      %v479 = vld [vmem:[%s1 + $0x3a8] sm:$0xff]
      %v480 = vld [vmem:[%s1 + $0x3b0] sm:$0xf]
      %v481 = vld [vmem:[%s1 + $0x3b4] sm:$0xff]
      %v482 = vld [vmem:[%s1 + $0x3bc] sm:$0xf]
      %v483 = vld [vmem:[%s1 + $0x3c0] sm:$0xff]
      %v484 = vld [vmem:[%s1 + $0x3c8] sm:$0xf]
      %v485 = vld [vmem:[%s1 + $0x3cc] sm:$0xff]
      %v486 = vld [vmem:[%s1 + $0x3d4] sm:$0xf]
      %v487 = vld [vmem:[%s1 + $0x3d8] sm:$0xff]
      %v488 = vld [vmem:[%s1 + $0x3e0] sm:$0xf]
      %v489 = vld [vmem:[%s1 + $0x3e4] sm:$0xff]
      %v490 = vld [vmem:[%s1 + $0x3ec] sm:$0xf]
      %v491 = vld [vmem:[%s1 + $0x3f0] sm:$0xff]
      %v492 = vld [vmem:[%s1 + $0x3f8] sm:$0xf]
      %v493 = vld [vmem:[%s1 + $0x3fc] sm:$0xff]
      %v494 = vld [vmem:[%s1 + $0x404] sm:$0xf]
      %v495 = vld [vmem:[%s1 + $0x408] sm:$0xff]
      %v496 = vld [vmem:[%s1 + $0x410] sm:$0xf]
      %v497 = vld [vmem:[%s1 + $0x414] sm:$0xff]
      %v498 = vld [vmem:[%s1 + $0x41c] sm:$0xf]
      %v499 = vld [vmem:[%s1 + $0x420] sm:$0xff]
      %v500 = vld [vmem:[%s1 + $0x428] sm:$0xf]
      %v501 = vld [vmem:[%s1 + $0x42c] sm:$0xff]
      %v502 = vld [vmem:[%s1 + $0x434] sm:$0xf]
      %v503 = vld [vmem:[%s1 + $0x438] sm:$0xff]
      %v504 = vld [vmem:[%s1 + $0x440] sm:$0xf]
      %v505 = vld [vmem:[%s1 + $0x444] sm:$0xff]
      %v506 = vld [vmem:[%s1 + $0x44c] sm:$0xf]
      %v507 = vld [vmem:[%s1 + $0x450] sm:$0xff]
      %v508 = vld [vmem:[%s1 + $0x458] sm:$0xf]
      %v509 = vld [vmem:[%s1 + $0x45c] sm:$0xff]
      %v510 = vld [vmem:[%s1 + $0x464] sm:$0xf]
      %v511 = vld [vmem:[%s1 + $0x468] sm:$0xff]
      %v512 = vld [vmem:[%s1 + $0x470] sm:$0xf]
      %v513 = vld [vmem:[%s1 + $0x474] sm:$0xff]
      %v514 = vld [vmem:[%s1 + $0x47c] sm:$0xf]
      %v515 = vld [vmem:[%s1 + $0x480] sm:$0xff]
      %v516 = vld [vmem:[%s1 + $0x488] sm:$0xf]
      %v517 = vld [vmem:[%s1 + $0x48c] sm:$0xff]
      %v518 = vld [vmem:[%s1 + $0x494] sm:$0xf]
      %v519 = vld [vmem:[%s1 + $0x498] sm:$0xff]
      %v520 = vld [vmem:[%s1 + $0x4a0] sm:$0xf]
      %v521 = vld [vmem:[%s1 + $0x4a4] sm:$0xff]
      %v522 = vld [vmem:[%s1 + $0x4ac] sm:$0xf]
      %v523 = vld [vmem:[%s1 + $0x4b0] sm:$0xff]
      %v524 = vld [vmem:[%s1 + $0x4b8] sm:$0xf]
      %v525 = vld [vmem:[%s1 + $0x4bc] sm:$0xff]
      %v526 = vld [vmem:[%s1 + $0x4c4] sm:$0xf]
      %v527 = vld [vmem:[%s1 + $0x4c8] sm:$0xff]
      %v528 = vld [vmem:[%s1 + $0x4d0] sm:$0xf]
      %v529 = vld [vmem:[%s1 + $0x4d4] sm:$0xff]
      %v530 = vld [vmem:[%s1 + $0x4dc] sm:$0xf]
      %v531 = vld [vmem:[%s1 + $0x4e0] sm:$0xff]
      %v532 = vld [vmem:[%s1 + $0x4e8] sm:$0xf]
      %v533 = vld [vmem:[%s1 + $0x4ec] sm:$0xff]
      %v534 = vld [vmem:[%s1 + $0x4f4] sm:$0xf]
      %v535 = vld [vmem:[%s1 + $0x4f8] sm:$0xff]
      %v536 = vld [vmem:[%s1 + $0x500] sm:$0xf]
      %v537 = vld [vmem:[%s1 + $0x504] sm:$0xff]
      %v538 = vld [vmem:[%s1 + $0x50c] sm:$0xf]
      %v539 = vld [vmem:[%s1 + $0x510] sm:$0xff]
      %v540 = vld [vmem:[%s1 + $0x518] sm:$0xf]
      %v541 = vld [vmem:[%s1 + $0x51c] sm:$0xff]
      %v542 = vld [vmem:[%s1 + $0x524] sm:$0xf]
      %v543 = vld [vmem:[%s1 + $0x528] sm:$0xff]
      %v544 = vld [vmem:[%s1 + $0x530] sm:$0xf]
      %v545 = vld [vmem:[%s1 + $0x534] sm:$0xff]
      %v546 = vld [vmem:[%s1 + $0x53c] sm:$0xf]
      %v547 = vld [vmem:[%s1 + $0x540] sm:$0xff]
      %v548 = vld [vmem:[%s1 + $0x548] sm:$0xf]
      %v549 = vld [vmem:[%s1 + $0x54c] sm:$0xff]
      %v550 = vld [vmem:[%s1 + $0x554] sm:$0xf]
      %v551 = vld [vmem:[%s1 + $0x558] sm:$0xff]
      %v552 = vld [vmem:[%s1 + $0x560] sm:$0xf]
      %v553 = vld [vmem:[%s1 + $0x564] sm:$0xff]
      %v554 = vld [vmem:[%s1 + $0x56c] sm:$0xf]
      %v555 = vld [vmem:[%s1 + $0x570] sm:$0xff]
      %v556 = vld [vmem:[%s1 + $0x578] sm:$0xf]
      %v557 = vld [vmem:[%s1 + $0x57c] sm:$0xff]
      %v558 = vld [vmem:[%s1 + $0x584] sm:$0xf]
      %v559 = vld [vmem:[%s1 + $0x588] sm:$0xff]
      %v560 = vld [vmem:[%s1 + $0x590] sm:$0xf]
      %v561 = vld [vmem:[%s1 + $0x594] sm:$0xff]
      %v562 = vld [vmem:[%s1 + $0x59c] sm:$0xf]
      %v563 = vld [vmem:[%s1 + $0x5a0] sm:$0xff]
      %v564 = vld [vmem:[%s1 + $0x5a8] sm:$0xf]
      %v565 = vld [vmem:[%s1 + $0x5ac] sm:$0xff]
      %v566 = vld [vmem:[%s1 + $0x5b4] sm:$0xf]
      %v567 = vld [vmem:[%s1 + $0x5b8] sm:$0xff]
      %v568 = vld [vmem:[%s1 + $0x5c0] sm:$0xf]
      %v569 = vld [vmem:[%s1 + $0x5c4] sm:$0xff]
      %v570 = vld [vmem:[%s1 + $0x5cc] sm:$0xf]
      %v571 = vld [vmem:[%s1 + $0x5d0] sm:$0xff]
      %v572 = vld [vmem:[%s1 + $0x5d8] sm:$0xf]
      %v573 = vld [vmem:[%s1 + $0x5dc] sm:$0xff]
      %v574 = vld [vmem:[%s1 + $0x5e4] sm:$0xf]
      %v575 = vld [vmem:[%s1 + $0x5e8] sm:$0xff]
      %v576 = vld [vmem:[%s1 + $0x5f0] sm:$0xf]
      %v577 = vld [vmem:[%s1 + $0x5f4] sm:$0xff]
      %v578 = vld [vmem:[%s1 + $0x5fc] sm:$0xf]
      %v579 = vld [vmem:[%s1 + $0x600] sm:$0xff]
      %v580 = vld [vmem:[%s1 + $0x608] sm:$0xf]
      %v581 = vld [vmem:[%s1 + $0x60c] sm:$0xff]
      %v582 = vld [vmem:[%s1 + $0x614] sm:$0xf]
      %v583 = vld [vmem:[%s1 + $0x618] sm:$0xff]
      %v584 = vld [vmem:[%s1 + $0x620] sm:$0xf]
      %v585 = vld [vmem:[%s1 + $0x624] sm:$0xff]
      %v586 = vld [vmem:[%s1 + $0x62c] sm:$0xf]
      %v587 = vld [vmem:[%s1 + $0x630] sm:$0xff]
      %v588 = vld [vmem:[%s1 + $0x638] sm:$0xf]
      %v589 = vld [vmem:[%s1 + $0x63c] sm:$0xff]
      %v590 = vld [vmem:[%s1 + $0x644] sm:$0xf]
      %v591 = vld [vmem:[%s1 + $0x648] sm:$0xff]
      %v592 = vld [vmem:[%s1 + $0x650] sm:$0xf]
      %v593 = vld [vmem:[%s1 + $0x654] sm:$0xff]
      %v594 = vld [vmem:[%s1 + $0x65c] sm:$0xf]
      %v595 = vld [vmem:[%s1 + $0x660] sm:$0xff]
      %v596 = vld [vmem:[%s1 + $0x668] sm:$0xf]
      %v597 = vld [vmem:[%s1 + $0x66c] sm:$0xff]
      %v598 = vld [vmem:[%s1 + $0x674] sm:$0xf]
      %v599 = vld [vmem:[%s1 + $0x678] sm:$0xff]
      %v600 = vld [vmem:[%s1 + $0x680] sm:$0xf]
      %v601 = vld [vmem:[%s1 + $0x684] sm:$0xff]
      %v602 = vld [vmem:[%s1 + $0x68c] sm:$0xf]
      %v603 = vld [vmem:[%s1 + $0x690] sm:$0xff]
      %v604 = vld [vmem:[%s1 + $0x698] sm:$0xf]
      %v605 = vld [vmem:[%s1 + $0x69c] sm:$0xff]
      %v606 = vld [vmem:[%s1 + $0x6a4] sm:$0xf]
      %v607 = vld [vmem:[%s1 + $0x6a8] sm:$0xff]
      %v608 = vld [vmem:[%s1 + $0x6b0] sm:$0xf]
      %v609 = vld [vmem:[%s1 + $0x6b4] sm:$0xff]
      %v610 = vld [vmem:[%s1 + $0x6bc] sm:$0xf]
      %v611 = vld [vmem:[%s1 + $0x6c0] sm:$0xff]
      %v612 = vld [vmem:[%s1 + $0x6c8] sm:$0xf]
      %v613 = vld [vmem:[%s1 + $0x6cc] sm:$0xff]
      %v614 = vld [vmem:[%s1 + $0x6d4] sm:$0xf]
      %v615 = vld [vmem:[%s1 + $0x6d8] sm:$0xff]
      %v616 = vld [vmem:[%s1 + $0x6e0] sm:$0xf]
      %v617 = vld [vmem:[%s1 + $0x6e4] sm:$0xff]
      %v618 = vld [vmem:[%s1 + $0x6ec] sm:$0xf]
      %v619 = vld [vmem:[%s1 + $0x6f0] sm:$0xff]
      %v620 = vld [vmem:[%s1 + $0x6f8] sm:$0xf]
      %v621 = vld [vmem:[%s1 + $0x6fc] sm:$0xff]
      %v622 = vld [vmem:[%s1 + $0x704] sm:$0xf]
      %v623 = vld [vmem:[%s1 + $0x708] sm:$0xff]
      %v624 = vld [vmem:[%s1 + $0x710] sm:$0xf]
      %v625 = vld [vmem:[%s1 + $0x714] sm:$0xff]
      %v626 = vld [vmem:[%s1 + $0x71c] sm:$0xf]
      %v627 = vld [vmem:[%s1 + $0x720] sm:$0xff]
      %v628 = vld [vmem:[%s1 + $0x728] sm:$0xf]
      %v629 = vld [vmem:[%s1 + $0x72c] sm:$0xff]
      %v630 = vld [vmem:[%s1 + $0x734] sm:$0xf]
      %v631 = vld [vmem:[%s2] sm:$0x7]
      %v940 = vunpack.c.l.b16 %v323
      %v941 = vunpack.c.h.b16 %v323
      %v942 = vunpack.c.l.b16 %v324
      %v943 = vunpack.c.l.b16 %v325
      %v944 = vunpack.c.h.b16 %v325
      %v945 = vunpack.c.l.b16 %v326
      %v946 = vunpack.c.l.b16 %v327
      %v947 = vunpack.c.h.b16 %v327
      %v948 = vunpack.c.l.b16 %v328
      %v949 = vunpack.c.l.b16 %v329
      %v950 = vunpack.c.h.b16 %v329
      %v951 = vunpack.c.l.b16 %v330
      %v952 = vunpack.c.l.b16 %v331
      %v953 = vunpack.c.h.b16 %v331
      %v954 = vunpack.c.l.b16 %v332
      %v955 = vunpack.c.l.b16 %v333
      %v956 = vunpack.c.h.b16 %v333
      %v957 = vunpack.c.l.b16 %v334
      %v958 = vunpack.c.l.b16 %v335
      %v959 = vunpack.c.h.b16 %v335
      %v960 = vunpack.c.l.b16 %v336
      %v961 = vunpack.c.l.b16 %v337
      %v962 = vunpack.c.h.b16 %v337
      %v963 = vunpack.c.l.b16 %v338
      %v964 = vunpack.c.l.b16 %v339
      %v965 = vunpack.c.h.b16 %v339
      %v966 = vunpack.c.l.b16 %v340
      %v967 = vunpack.c.l.b16 %v341
      %v968 = vunpack.c.h.b16 %v341
      %v969 = vunpack.c.l.b16 %v342
      %v970 = vunpack.c.l.b16 %v343
      %v971 = vunpack.c.h.b16 %v343
      %v972 = vunpack.c.l.b16 %v344
      %v973 = vunpack.c.l.b16 %v345
      %v974 = vunpack.c.h.b16 %v345
      %v975 = vunpack.c.l.b16 %v346
      %v976 = vunpack.c.l.b16 %v347
      %v977 = vunpack.c.h.b16 %v347
      %v978 = vunpack.c.l.b16 %v348
      %v979 = vunpack.c.l.b16 %v349
      %v980 = vunpack.c.h.b16 %v349
      %v981 = vunpack.c.l.b16 %v350
      %v982 = vunpack.c.l.b16 %v351
      %v983 = vunpack.c.h.b16 %v351
      %v984 = vunpack.c.l.b16 %v352
      %v985 = vunpack.c.l.b16 %v353
      %v986 = vunpack.c.h.b16 %v353
      %v987 = vunpack.c.l.b16 %v354
      %v988 = vunpack.c.l.b16 %v355
      %v989 = vunpack.c.h.b16 %v355
      %v990 = vunpack.c.l.b16 %v356
      %v991 = vunpack.c.l.b16 %v357
      %v992 = vunpack.c.h.b16 %v357
      %v993 = vunpack.c.l.b16 %v358
      %v994 = vunpack.c.l.b16 %v359
      %v995 = vunpack.c.h.b16 %v359
      %v996 = vunpack.c.l.b16 %v360
      %v997 = vunpack.c.l.b16 %v361
      %v998 = vunpack.c.h.b16 %v361
      %v999 = vunpack.c.l.b16 %v362
      %v1000 = vunpack.c.l.b16 %v363
      %v1001 = vunpack.c.h.b16 %v363
      %v1002 = vunpack.c.l.b16 %v364
      %v1003 = vunpack.c.l.b16 %v365
      %v1004 = vunpack.c.h.b16 %v365
      %v1005 = vunpack.c.l.b16 %v366
      %v1006 = vunpack.c.l.b16 %v367
      %v1007 = vunpack.c.h.b16 %v367
      %v1008 = vunpack.c.l.b16 %v368
      %v1009 = vunpack.c.l.b16 %v369
      %v1010 = vunpack.c.h.b16 %v369
      %v1011 = vunpack.c.l.b16 %v370
      %v1012 = vunpack.c.l.b16 %v371
      %v1013 = vunpack.c.h.b16 %v371
      %v1014 = vunpack.c.l.b16 %v372
      %v1015 = vunpack.c.l.b16 %v373
      %v1016 = vunpack.c.h.b16 %v373
      %v1017 = vunpack.c.l.b16 %v374
      %v1018 = vunpack.c.l.b16 %v375
      %v1019 = vunpack.c.h.b16 %v375
      %v1020 = vunpack.c.l.b16 %v376
      %v1021 = vunpack.c.l.b16 %v377
      %v1022 = vunpack.c.h.b16 %v377
      %v1023 = vunpack.c.l.b16 %v378
      %v1024 = vunpack.c.l.b16 %v379
      %v1025 = vunpack.c.h.b16 %v379
      %v1026 = vunpack.c.l.b16 %v380
      %v1027 = vunpack.c.l.b16 %v381
      %v1028 = vunpack.c.h.b16 %v381
      %v1029 = vunpack.c.l.b16 %v382
      %v1030 = vunpack.c.l.b16 %v383
      %v1031 = vunpack.c.h.b16 %v383
      %v1032 = vunpack.c.l.b16 %v384
      %v1033 = vunpack.c.l.b16 %v385
      %v1034 = vunpack.c.h.b16 %v385
      %v1035 = vunpack.c.l.b16 %v386
      %v1036 = vunpack.c.l.b16 %v387
      %v1037 = vunpack.c.h.b16 %v387
      %v1038 = vunpack.c.l.b16 %v388
      %v1039 = vunpack.c.l.b16 %v389
      %v1040 = vunpack.c.h.b16 %v389
      %v1041 = vunpack.c.l.b16 %v390
      %v1042 = vunpack.c.l.b16 %v391
      %v1043 = vunpack.c.h.b16 %v391
      %v1044 = vunpack.c.l.b16 %v392
      %v1045 = vunpack.c.l.b16 %v393
      %v1046 = vunpack.c.h.b16 %v393
      %v1047 = vunpack.c.l.b16 %v394
      %v1048 = vunpack.c.l.b16 %v395
      %v1049 = vunpack.c.h.b16 %v395
      %v1050 = vunpack.c.l.b16 %v396
      %v1051 = vunpack.c.l.b16 %v397
      %v1052 = vunpack.c.h.b16 %v397
      %v1053 = vunpack.c.l.b16 %v398
      %v1054 = vunpack.c.l.b16 %v399
      %v1055 = vunpack.c.h.b16 %v399
      %v1056 = vunpack.c.l.b16 %v400
      %v1057 = vunpack.c.l.b16 %v401
      %v1058 = vunpack.c.h.b16 %v401
      %v1059 = vunpack.c.l.b16 %v402
      %v1060 = vunpack.c.l.b16 %v403
      %v1061 = vunpack.c.h.b16 %v403
      %v1062 = vunpack.c.l.b16 %v404
      %v1063 = vunpack.c.l.b16 %v405
      %v1064 = vunpack.c.h.b16 %v405
      %v1065 = vunpack.c.l.b16 %v406
      %v1066 = vunpack.c.l.b16 %v407
      %v1067 = vunpack.c.h.b16 %v407
      %v1068 = vunpack.c.l.b16 %v408
      %v1069 = vunpack.c.l.b16 %v409
      %v1070 = vunpack.c.h.b16 %v409
      %v1071 = vunpack.c.l.b16 %v410
      %v1072 = vunpack.c.l.b16 %v411
      %v1073 = vunpack.c.h.b16 %v411
      %v1074 = vunpack.c.l.b16 %v412
      %v1075 = vunpack.c.l.b16 %v413
      %v1076 = vunpack.c.h.b16 %v413
      %v1077 = vunpack.c.l.b16 %v414
      %v1078 = vunpack.c.l.b16 %v415
      %v1079 = vunpack.c.h.b16 %v415
      %v1080 = vunpack.c.l.b16 %v416
      %v1081 = vunpack.c.l.b16 %v417
      %v1082 = vunpack.c.h.b16 %v417
      %v1083 = vunpack.c.l.b16 %v418
      %v1084 = vunpack.c.l.b16 %v419
      %v1085 = vunpack.c.h.b16 %v419
      %v1086 = vunpack.c.l.b16 %v420
      %v1087 = vunpack.c.l.b16 %v421
      %v1088 = vunpack.c.h.b16 %v421
      %v1089 = vunpack.c.l.b16 %v422
      %v1090 = vunpack.c.l.b16 %v423
      %v1091 = vunpack.c.h.b16 %v423
      %v1092 = vunpack.c.l.b16 %v424
      %v1093 = vunpack.c.l.b16 %v425
      %v1094 = vunpack.c.h.b16 %v425
      %v1095 = vunpack.c.l.b16 %v426
      %v1096 = vunpack.c.l.b16 %v427
      %v1097 = vunpack.c.h.b16 %v427
      %v1098 = vunpack.c.l.b16 %v428
      %v1099 = vunpack.c.l.b16 %v429
      %v1100 = vunpack.c.h.b16 %v429
      %v1101 = vunpack.c.l.b16 %v430
      %v1102 = vunpack.c.l.b16 %v431
      %v1103 = vunpack.c.h.b16 %v431
      %v1104 = vunpack.c.l.b16 %v432
      %v1105 = vunpack.c.l.b16 %v433
      %v1106 = vunpack.c.h.b16 %v433
      %v1107 = vunpack.c.l.b16 %v434
      %v1108 = vunpack.c.l.b16 %v435
      %v1109 = vunpack.c.h.b16 %v435
      %v1110 = vunpack.c.l.b16 %v436
      %v1111 = vunpack.c.l.b16 %v437
      %v1112 = vunpack.c.h.b16 %v437
      %v1113 = vunpack.c.l.b16 %v438
      %v1114 = vunpack.c.l.b16 %v439
      %v1115 = vunpack.c.h.b16 %v439
      %v1116 = vunpack.c.l.b16 %v440
      %v1117 = vunpack.c.l.b16 %v441
      %v1118 = vunpack.c.h.b16 %v441
      %v1119 = vunpack.c.l.b16 %v442
      %v1120 = vunpack.c.l.b16 %v443
      %v1121 = vunpack.c.h.b16 %v443
      %v1122 = vunpack.c.l.b16 %v444
      %v1123 = vunpack.c.l.b16 %v445
      %v1124 = vunpack.c.h.b16 %v445
      %v1125 = vunpack.c.l.b16 %v446
      %v1126 = vunpack.c.l.b16 %v447
      %v1127 = vunpack.c.h.b16 %v447
      %v1128 = vunpack.c.l.b16 %v448
      %v1129 = vunpack.c.l.b16 %v449
      %v1130 = vunpack.c.h.b16 %v449
      %v1131 = vunpack.c.l.b16 %v450
      %v1132 = vunpack.c.l.b16 %v451
      %v1133 = vunpack.c.h.b16 %v451
      %v1134 = vunpack.c.l.b16 %v452
      %v1135 = vunpack.c.l.b16 %v453
      %v1136 = vunpack.c.h.b16 %v453
      %v1137 = vunpack.c.l.b16 %v454
      %v1138 = vunpack.c.l.b16 %v455
      %v1139 = vunpack.c.h.b16 %v455
      %v1140 = vunpack.c.l.b16 %v456
      %v1141 = vunpack.c.l.b16 %v457
      %v1142 = vunpack.c.h.b16 %v457
      %v1143 = vunpack.c.l.b16 %v458
      %v1144 = vunpack.c.l.b16 %v459
      %v1145 = vunpack.c.h.b16 %v459
      %v1146 = vunpack.c.l.b16 %v460
      %v1147 = vunpack.c.l.b16 %v461
      %v1148 = vunpack.c.h.b16 %v461
      %v1149 = vunpack.c.l.b16 %v462
      %v1150 = vunpack.c.l.b16 %v463
      %v1151 = vunpack.c.h.b16 %v463
      %v1152 = vunpack.c.l.b16 %v464
      %v1153 = vunpack.c.l.b16 %v465
      %v1154 = vunpack.c.h.b16 %v465
      %v1155 = vunpack.c.l.b16 %v466
      %v1156 = vunpack.c.l.b16 %v467
      %v1157 = vunpack.c.h.b16 %v467
      %v1158 = vunpack.c.l.b16 %v468
      %v1159 = vunpack.c.l.b16 %v469
      %v1160 = vunpack.c.h.b16 %v469
      %v1161 = vunpack.c.l.b16 %v470
      %v1162 = vunpack.c.l.b16 %v471
      %v1163 = vunpack.c.h.b16 %v471
      %v1164 = vunpack.c.l.b16 %v472
      %v1165 = vunpack.c.l.b16 %v473
      %v1166 = vunpack.c.h.b16 %v473
      %v1167 = vunpack.c.l.b16 %v474
      %v1168 = vunpack.c.l.b16 %v475
      %v1169 = vunpack.c.h.b16 %v475
      %v1170 = vunpack.c.l.b16 %v476
      %v1171 = vunpack.c.l.b16 %v477
      %v1172 = vunpack.c.h.b16 %v477
      %v1173 = vunpack.c.l.b16 %v478
      %v1174 = vunpack.c.l.b16 %v479
      %v1175 = vunpack.c.h.b16 %v479
      %v1176 = vunpack.c.l.b16 %v480
      %v1177 = vunpack.c.l.b16 %v481
      %v1178 = vunpack.c.h.b16 %v481
      %v1179 = vunpack.c.l.b16 %v482
      %v1180 = vunpack.c.l.b16 %v483
      %v1181 = vunpack.c.h.b16 %v483
      %v1182 = vunpack.c.l.b16 %v484
      %v1183 = vunpack.c.l.b16 %v485
      %v1184 = vunpack.c.h.b16 %v485
      %v1185 = vunpack.c.l.b16 %v486
      %v1186 = vunpack.c.l.b16 %v487
      %v1187 = vunpack.c.h.b16 %v487
      %v1188 = vunpack.c.l.b16 %v488
      %v1189 = vunpack.c.l.b16 %v489
      %v1190 = vunpack.c.h.b16 %v489
      %v1191 = vunpack.c.l.b16 %v490
      %v1192 = vunpack.c.l.b16 %v491
      %v1193 = vunpack.c.h.b16 %v491
      %v1194 = vunpack.c.l.b16 %v492
      %v1195 = vunpack.c.l.b16 %v493
      %v1196 = vunpack.c.h.b16 %v493
      %v1197 = vunpack.c.l.b16 %v494
      %v1198 = vunpack.c.l.b16 %v495
      %v1199 = vunpack.c.h.b16 %v495
      %v1200 = vunpack.c.l.b16 %v496
      %v1201 = vunpack.c.l.b16 %v497
      %v1202 = vunpack.c.h.b16 %v497
      %v1203 = vunpack.c.l.b16 %v498
      %v1204 = vunpack.c.l.b16 %v499
      %v1205 = vunpack.c.h.b16 %v499
      %v1206 = vunpack.c.l.b16 %v500
      %v1207 = vunpack.c.l.b16 %v501
      %v1208 = vunpack.c.h.b16 %v501
      %v1209 = vunpack.c.l.b16 %v502
      %v1210 = vunpack.c.l.b16 %v503
      %v1211 = vunpack.c.h.b16 %v503
      %v1212 = vunpack.c.l.b16 %v504
      %v1213 = vunpack.c.l.b16 %v505
      %v1214 = vunpack.c.h.b16 %v505
      %v1215 = vunpack.c.l.b16 %v506
      %v1216 = vunpack.c.l.b16 %v507
      %v1217 = vunpack.c.h.b16 %v507
      %v1218 = vunpack.c.l.b16 %v508
      %v1219 = vunpack.c.l.b16 %v509
      %v1220 = vunpack.c.h.b16 %v509
      %v1221 = vunpack.c.l.b16 %v510
      %v1222 = vunpack.c.l.b16 %v511
      %v1223 = vunpack.c.h.b16 %v511
      %v1224 = vunpack.c.l.b16 %v512
      %v1225 = vunpack.c.l.b16 %v513
      %v1226 = vunpack.c.h.b16 %v513
      %v1227 = vunpack.c.l.b16 %v514
      %v1228 = vunpack.c.l.b16 %v515
      %v1229 = vunpack.c.h.b16 %v515
      %v1230 = vunpack.c.l.b16 %v516
      %v1231 = vunpack.c.l.b16 %v517
      %v1232 = vunpack.c.h.b16 %v517
      %v1233 = vunpack.c.l.b16 %v518
      %v1234 = vunpack.c.l.b16 %v519
      %v1235 = vunpack.c.h.b16 %v519
      %v1236 = vunpack.c.l.b16 %v520
      %v1237 = vunpack.c.l.b16 %v521
      %v1238 = vunpack.c.h.b16 %v521
      %v1239 = vunpack.c.l.b16 %v522
      %v1240 = vunpack.c.l.b16 %v523
      %v1241 = vunpack.c.h.b16 %v523
      %v1242 = vunpack.c.l.b16 %v524
      %v1243 = vunpack.c.l.b16 %v525
      %v1244 = vunpack.c.h.b16 %v525
      %v1245 = vunpack.c.l.b16 %v526
      %v1246 = vunpack.c.l.b16 %v527
      %v1247 = vunpack.c.h.b16 %v527
      %v1248 = vunpack.c.l.b16 %v528
      %v1249 = vunpack.c.l.b16 %v529
      %v1250 = vunpack.c.h.b16 %v529
      %v1251 = vunpack.c.l.b16 %v530
      %v1252 = vunpack.c.l.b16 %v531
      %v1253 = vunpack.c.h.b16 %v531
      %v1254 = vunpack.c.l.b16 %v532
      %v1255 = vunpack.c.l.b16 %v533
      %v1256 = vunpack.c.h.b16 %v533
      %v1257 = vunpack.c.l.b16 %v534
      %v1258 = vunpack.c.l.b16 %v535
      %v1259 = vunpack.c.h.b16 %v535
      %v1260 = vunpack.c.l.b16 %v536
      %v1261 = vunpack.c.l.b16 %v537
      %v1262 = vunpack.c.h.b16 %v537
      %v1263 = vunpack.c.l.b16 %v538
      %v1264 = vunpack.c.l.b16 %v539
      %v1265 = vunpack.c.h.b16 %v539
      %v1266 = vunpack.c.l.b16 %v540
      %v1267 = vunpack.c.l.b16 %v541
      %v1268 = vunpack.c.h.b16 %v541
      %v1269 = vunpack.c.l.b16 %v542
      %v1270 = vunpack.c.l.b16 %v543
      %v1271 = vunpack.c.h.b16 %v543
      %v1272 = vunpack.c.l.b16 %v544
      %v1273 = vunpack.c.l.b16 %v545
      %v1274 = vunpack.c.h.b16 %v545
      %v1275 = vunpack.c.l.b16 %v546
      %v1276 = vunpack.c.l.b16 %v547
      %v1277 = vunpack.c.h.b16 %v547
      %v1278 = vunpack.c.l.b16 %v548
      %v1279 = vunpack.c.l.b16 %v549
      %v1280 = vunpack.c.h.b16 %v549
      %v1281 = vunpack.c.l.b16 %v550
      %v1282 = vunpack.c.l.b16 %v551
      %v1283 = vunpack.c.h.b16 %v551
      %v1284 = vunpack.c.l.b16 %v552
      %v1285 = vunpack.c.l.b16 %v553
      %v1286 = vunpack.c.h.b16 %v553
      %v1287 = vunpack.c.l.b16 %v554
      %v1288 = vunpack.c.l.b16 %v555
      %v1289 = vunpack.c.h.b16 %v555
      %v1290 = vunpack.c.l.b16 %v556
      %v1291 = vunpack.c.l.b16 %v557
      %v1292 = vunpack.c.h.b16 %v557
      %v1293 = vunpack.c.l.b16 %v558
      %v1294 = vunpack.c.l.b16 %v559
      %v1295 = vunpack.c.h.b16 %v559
      %v1296 = vunpack.c.l.b16 %v560
      %v1297 = vunpack.c.l.b16 %v561
      %v1298 = vunpack.c.h.b16 %v561
      %v1299 = vunpack.c.l.b16 %v562
      %v1300 = vunpack.c.l.b16 %v563
      %v1301 = vunpack.c.h.b16 %v563
      %v1302 = vunpack.c.l.b16 %v564
      %v1303 = vunpack.c.l.b16 %v565
      %v1304 = vunpack.c.h.b16 %v565
      %v1305 = vunpack.c.l.b16 %v566
      %v1306 = vunpack.c.l.b16 %v567
      %v1307 = vunpack.c.h.b16 %v567
      %v1308 = vunpack.c.l.b16 %v568
      %v1309 = vunpack.c.l.b16 %v569
      %v1310 = vunpack.c.h.b16 %v569
      %v1311 = vunpack.c.l.b16 %v570
      %v1312 = vunpack.c.l.b16 %v571
      %v1313 = vunpack.c.h.b16 %v571
      %v1314 = vunpack.c.l.b16 %v572
      %v1315 = vunpack.c.l.b16 %v573
      %v1316 = vunpack.c.h.b16 %v573
      %v1317 = vunpack.c.l.b16 %v574
      %v1318 = vunpack.c.l.b16 %v575
      %v1319 = vunpack.c.h.b16 %v575
      %v1320 = vunpack.c.l.b16 %v576
      %v1321 = vunpack.c.l.b16 %v577
      %v1322 = vunpack.c.h.b16 %v577
      %v1323 = vunpack.c.l.b16 %v578
      %v1324 = vunpack.c.l.b16 %v579
      %v1325 = vunpack.c.h.b16 %v579
      %v1326 = vunpack.c.l.b16 %v580
      %v1327 = vunpack.c.l.b16 %v581
      %v1328 = vunpack.c.h.b16 %v581
      %v1329 = vunpack.c.l.b16 %v582
      %v1330 = vunpack.c.l.b16 %v583
      %v1331 = vunpack.c.h.b16 %v583
      %v1332 = vunpack.c.l.b16 %v584
      %v1333 = vunpack.c.l.b16 %v585
      %v1334 = vunpack.c.h.b16 %v585
      %v1335 = vunpack.c.l.b16 %v586
      %v1336 = vunpack.c.l.b16 %v587
      %v1337 = vunpack.c.h.b16 %v587
      %v1338 = vunpack.c.l.b16 %v588
      %v1339 = vunpack.c.l.b16 %v589
      %v1340 = vunpack.c.h.b16 %v589
      %v1341 = vunpack.c.l.b16 %v590
      %v1342 = vunpack.c.l.b16 %v591
      %v1343 = vunpack.c.h.b16 %v591
      %v1344 = vunpack.c.l.b16 %v592
      %v1345 = vunpack.c.l.b16 %v593
      %v1346 = vunpack.c.h.b16 %v593
      %v1347 = vunpack.c.l.b16 %v594
      %v1348 = vunpack.c.l.b16 %v595
      %v1349 = vunpack.c.h.b16 %v595
      %v1350 = vunpack.c.l.b16 %v596
      %v1351 = vunpack.c.l.b16 %v597
      %v1352 = vunpack.c.h.b16 %v597
      %v1353 = vunpack.c.l.b16 %v598
      %v1354 = vunpack.c.l.b16 %v599
      %v1355 = vunpack.c.h.b16 %v599
      %v1356 = vunpack.c.l.b16 %v600
      %v1357 = vunpack.c.l.b16 %v601
      %v1358 = vunpack.c.h.b16 %v601
      %v1359 = vunpack.c.l.b16 %v602
      %v1360 = vunpack.c.l.b16 %v603
      %v1361 = vunpack.c.h.b16 %v603
      %v1362 = vunpack.c.l.b16 %v604
      %v1363 = vunpack.c.l.b16 %v605
      %v1364 = vunpack.c.h.b16 %v605
      %v1365 = vunpack.c.l.b16 %v606
      %v1366 = vunpack.c.l.b16 %v607
      %v1367 = vunpack.c.h.b16 %v607
      %v1368 = vunpack.c.l.b16 %v608
      %v1369 = vunpack.c.l.b16 %v609
      %v1370 = vunpack.c.h.b16 %v609
      %v1371 = vunpack.c.l.b16 %v610
      %v1372 = vunpack.c.l.b16 %v611
      %v1373 = vunpack.c.h.b16 %v611
      %v1374 = vunpack.c.l.b16 %v612
      %v1375 = vunpack.c.l.b16 %v613
      %v1376 = vunpack.c.h.b16 %v613
      %v1377 = vunpack.c.l.b16 %v614
      %v1378 = vunpack.c.l.b16 %v615
      %v1379 = vunpack.c.h.b16 %v615
      %v1380 = vunpack.c.l.b16 %v616
      %v1381 = vunpack.c.l.b16 %v617
      %v1382 = vunpack.c.h.b16 %v617
      %v1383 = vunpack.c.l.b16 %v618
      %v1384 = vunpack.c.l.b16 %v619
      %v1385 = vunpack.c.h.b16 %v619
      %v1386 = vunpack.c.l.b16 %v620
      %v1387 = vunpack.c.l.b16 %v621
      %v1388 = vunpack.c.h.b16 %v621
      %v1389 = vunpack.c.l.b16 %v622
      %v1390 = vunpack.c.l.b16 %v623
      %v1391 = vunpack.c.h.b16 %v623
      %v1392 = vunpack.c.l.b16 %v624
      %v1393 = vunpack.c.l.b16 %v625
      %v1394 = vunpack.c.h.b16 %v625
      %v1395 = vunpack.c.l.b16 %v626
      %v1396 = vunpack.c.l.b16 %v627
      %v1397 = vunpack.c.h.b16 %v627
      %v1398 = vunpack.c.l.b16 %v628
      %v1399 = vunpack.c.l.b16 %v629
      %v1400 = vunpack.c.h.b16 %v629
      %v1401 = vunpack.c.l.b16 %v630
      %v1402 = vpack.c.b16 %v943, %v940
      %v1403 = vpack.c.b16 %v944, %v941
      %v1404 = vpack.c.b16 %v945, %v942
      %v1405 = vpack.c.b16 %v949, %v946
      %v1406 = vpack.c.b16 %v950, %v947
      %v1407 = vpack.c.b16 %v951, %v948
      %v1408 = vpack.c.b16 %v955, %v952
      %v1409 = vpack.c.b16 %v956, %v953
      %v1410 = vpack.c.b16 %v957, %v954
      %v1411 = vpack.c.b16 %v961, %v958
      %v1412 = vpack.c.b16 %v962, %v959
      %v1413 = vpack.c.b16 %v963, %v960
      %v1414 = vpack.c.b16 %v967, %v964
      %v1415 = vpack.c.b16 %v968, %v965
      %v1416 = vpack.c.b16 %v969, %v966
      %v1417 = vpack.c.b16 %v973, %v970
      %v1418 = vpack.c.b16 %v974, %v971
      %v1419 = vpack.c.b16 %v975, %v972
      %v1420 = vpack.c.b16 %v979, %v976
      %v1421 = vpack.c.b16 %v980, %v977
      %v1422 = vpack.c.b16 %v981, %v978
      %v1423 = vpack.c.b16 %v985, %v982
      %v1424 = vpack.c.b16 %v986, %v983
      %v1425 = vpack.c.b16 %v987, %v984
      %v1426 = vpack.c.b16 %v991, %v988
      %v1427 = vpack.c.b16 %v992, %v989
      %v1428 = vpack.c.b16 %v993, %v990
      %v1429 = vpack.c.b16 %v997, %v994
      %v1430 = vpack.c.b16 %v998, %v995
      %v1431 = vpack.c.b16 %v999, %v996
      %v1432 = vpack.c.b16 %v1003, %v1000
      %v1433 = vpack.c.b16 %v1004, %v1001
      %v1434 = vpack.c.b16 %v1005, %v1002
      %v1435 = vpack.c.b16 %v1009, %v1006
      %v1436 = vpack.c.b16 %v1010, %v1007
      %v1437 = vpack.c.b16 %v1011, %v1008
      %v1438 = vpack.c.b16 %v1015, %v1012
      %v1439 = vpack.c.b16 %v1016, %v1013
      %v1440 = vpack.c.b16 %v1017, %v1014
      %v1441 = vpack.c.b16 %v1021, %v1018
      %v1442 = vpack.c.b16 %v1022, %v1019
      %v1443 = vpack.c.b16 %v1023, %v1020
      %v1444 = vpack.c.b16 %v1027, %v1024
      %v1445 = vpack.c.b16 %v1028, %v1025
      %v1446 = vpack.c.b16 %v1029, %v1026
      %v1447 = vpack.c.b16 %v1033, %v1030
      %v1448 = vpack.c.b16 %v1034, %v1031
      %v1449 = vpack.c.b16 %v1035, %v1032
      %v1450 = vpack.c.b16 %v1039, %v1036
      %v1451 = vpack.c.b16 %v1040, %v1037
      %v1452 = vpack.c.b16 %v1041, %v1038
      %v1453 = vpack.c.b16 %v1045, %v1042
      %v1454 = vpack.c.b16 %v1046, %v1043
      %v1455 = vpack.c.b16 %v1047, %v1044
      %v1456 = vpack.c.b16 %v1051, %v1048
      %v1457 = vpack.c.b16 %v1052, %v1049
      %v1458 = vpack.c.b16 %v1053, %v1050
      %v1459 = vpack.c.b16 %v1057, %v1054
      %v1460 = vpack.c.b16 %v1058, %v1055
      %v1461 = vpack.c.b16 %v1059, %v1056
      %v1462 = vpack.c.b16 %v1063, %v1060
      %v1463 = vpack.c.b16 %v1064, %v1061
      %v1464 = vpack.c.b16 %v1065, %v1062
      %v1465 = vpack.c.b16 %v1069, %v1066
      %v1466 = vpack.c.b16 %v1070, %v1067
      %v1467 = vpack.c.b16 %v1071, %v1068
      %v1468 = vpack.c.b16 %v1075, %v1072
      %v1469 = vpack.c.b16 %v1076, %v1073
      %v1470 = vpack.c.b16 %v1077, %v1074
      %v1471 = vpack.c.b16 %v1081, %v1078
      %v1472 = vpack.c.b16 %v1082, %v1079
      %v1473 = vpack.c.b16 %v1083, %v1080
      %v1474 = vpack.c.b16 %v1087, %v1084
      %v1475 = vpack.c.b16 %v1088, %v1085
      %v1476 = vpack.c.b16 %v1089, %v1086
      %v1477 = vpack.c.b16 %v1093, %v1090
      %v1478 = vpack.c.b16 %v1094, %v1091
      %v1479 = vpack.c.b16 %v1095, %v1092
      %v1480 = vpack.c.b16 %v1099, %v1096
      %v1481 = vpack.c.b16 %v1100, %v1097
      %v1482 = vpack.c.b16 %v1101, %v1098
      %v1483 = vpack.c.b16 %v1105, %v1102
      %v1484 = vpack.c.b16 %v1106, %v1103
      %v1485 = vpack.c.b16 %v1107, %v1104
      %v1486 = vpack.c.b16 %v1111, %v1108
      %v1487 = vpack.c.b16 %v1112, %v1109
      %v1488 = vpack.c.b16 %v1113, %v1110
      %v1489 = vpack.c.b16 %v1117, %v1114
      %v1490 = vpack.c.b16 %v1118, %v1115
      %v1491 = vpack.c.b16 %v1119, %v1116
      %v1492 = vpack.c.b16 %v1123, %v1120
      %v1493 = vpack.c.b16 %v1124, %v1121
      %v1494 = vpack.c.b16 %v1125, %v1122
      %v1495 = vpack.c.b16 %v1129, %v1126
      %v1496 = vpack.c.b16 %v1130, %v1127
      %v1497 = vpack.c.b16 %v1131, %v1128
      %v1498 = vpack.c.b16 %v1135, %v1132
      %v1499 = vpack.c.b16 %v1136, %v1133
      %v1500 = vpack.c.b16 %v1137, %v1134
      %v1501 = vpack.c.b16 %v1141, %v1138
      %v1502 = vpack.c.b16 %v1142, %v1139
      %v1503 = vpack.c.b16 %v1143, %v1140
      %v1504 = vpack.c.b16 %v1147, %v1144
      %v1505 = vpack.c.b16 %v1148, %v1145
      %v1506 = vpack.c.b16 %v1149, %v1146
      %v1507 = vpack.c.b16 %v1153, %v1150
      %v1508 = vpack.c.b16 %v1154, %v1151
      %v1509 = vpack.c.b16 %v1155, %v1152
      %v1510 = vpack.c.b16 %v1159, %v1156
      %v1511 = vpack.c.b16 %v1160, %v1157
      %v1512 = vpack.c.b16 %v1161, %v1158
      %v1513 = vpack.c.b16 %v1165, %v1162
      %v1514 = vpack.c.b16 %v1166, %v1163
      %v1515 = vpack.c.b16 %v1167, %v1164
      %v1516 = vpack.c.b16 %v1171, %v1168
      %v1517 = vpack.c.b16 %v1172, %v1169
      %v1518 = vpack.c.b16 %v1173, %v1170
      %v1519 = vpack.c.b16 %v1177, %v1174
      %v1520 = vpack.c.b16 %v1178, %v1175
      %v1521 = vpack.c.b16 %v1179, %v1176
      %v1522 = vpack.c.b16 %v1183, %v1180
      %v1523 = vpack.c.b16 %v1184, %v1181
      %v1524 = vpack.c.b16 %v1185, %v1182
      %v1525 = vpack.c.b16 %v1189, %v1186
      %v1526 = vpack.c.b16 %v1190, %v1187
      %v1527 = vpack.c.b16 %v1191, %v1188
      %v1528 = vpack.c.b16 %v1195, %v1192
      %v1529 = vpack.c.b16 %v1196, %v1193
      %v1530 = vpack.c.b16 %v1197, %v1194
      %v1531 = vpack.c.b16 %v1201, %v1198
      %v1532 = vpack.c.b16 %v1202, %v1199
      %v1533 = vpack.c.b16 %v1203, %v1200
      %v1534 = vpack.c.b16 %v1207, %v1204
      %v1535 = vpack.c.b16 %v1208, %v1205
      %v1536 = vpack.c.b16 %v1209, %v1206
      %v1537 = vpack.c.b16 %v1213, %v1210
      %v1538 = vpack.c.b16 %v1214, %v1211
      %v1539 = vpack.c.b16 %v1215, %v1212
      %v1540 = vpack.c.b16 %v1219, %v1216
      %v1541 = vpack.c.b16 %v1220, %v1217
      %v1542 = vpack.c.b16 %v1221, %v1218
      %v1543 = vpack.c.b16 %v1225, %v1222
      %v1544 = vpack.c.b16 %v1226, %v1223
      %v1545 = vpack.c.b16 %v1227, %v1224
      %v1546 = vpack.c.b16 %v1231, %v1228
      %v1547 = vpack.c.b16 %v1232, %v1229
      %v1548 = vpack.c.b16 %v1233, %v1230
      %v1549 = vpack.c.b16 %v1237, %v1234
      %v1550 = vpack.c.b16 %v1238, %v1235
      %v1551 = vpack.c.b16 %v1239, %v1236
      %v1552 = vpack.c.b16 %v1243, %v1240
      %v1553 = vpack.c.b16 %v1244, %v1241
      %v1554 = vpack.c.b16 %v1245, %v1242
      %v1555 = vpack.c.b16 %v1249, %v1246
      %v1556 = vpack.c.b16 %v1250, %v1247
      %v1557 = vpack.c.b16 %v1251, %v1248
      %v1558 = vpack.c.b16 %v1255, %v1252
      %v1559 = vpack.c.b16 %v1256, %v1253
      %v1560 = vpack.c.b16 %v1257, %v1254
      %v1561 = vpack.c.b16 %v1261, %v1258
      %v1562 = vpack.c.b16 %v1262, %v1259
      %v1563 = vpack.c.b16 %v1263, %v1260
      %v1564 = vpack.c.b16 %v1267, %v1264
      %v1565 = vpack.c.b16 %v1268, %v1265
      %v1566 = vpack.c.b16 %v1269, %v1266
      %v1567 = vpack.c.b16 %v1273, %v1270
      %v1568 = vpack.c.b16 %v1274, %v1271
      %v1569 = vpack.c.b16 %v1275, %v1272
      %v1570 = vpack.c.b16 %v1279, %v1276
      %v1571 = vpack.c.b16 %v1280, %v1277
      %v1572 = vpack.c.b16 %v1281, %v1278
      %v1573 = vpack.c.b16 %v1285, %v1282
      %v1574 = vpack.c.b16 %v1286, %v1283
      %v1575 = vpack.c.b16 %v1287, %v1284
      %v1576 = vpack.c.b16 %v1291, %v1288
      %v1577 = vpack.c.b16 %v1292, %v1289
      %v1578 = vpack.c.b16 %v1293, %v1290
      %v1579 = vpack.c.b16 %v1297, %v1294
      %v1580 = vpack.c.b16 %v1298, %v1295
      %v1581 = vpack.c.b16 %v1299, %v1296
      %v1582 = vpack.c.b16 %v1303, %v1300
      %v1583 = vpack.c.b16 %v1304, %v1301
      %v1584 = vpack.c.b16 %v1305, %v1302
      %v1585 = vpack.c.b16 %v1309, %v1306
      %v1586 = vpack.c.b16 %v1310, %v1307
      %v1587 = vpack.c.b16 %v1311, %v1308
      %v1588 = vpack.c.b16 %v1315, %v1312
      %v1589 = vpack.c.b16 %v1316, %v1313
      %v1590 = vpack.c.b16 %v1317, %v1314
      %v1591 = vpack.c.b16 %v1321, %v1318
      %v1592 = vpack.c.b16 %v1322, %v1319
      %v1593 = vpack.c.b16 %v1323, %v1320
      %v1594 = vpack.c.b16 %v1327, %v1324
      %v1595 = vpack.c.b16 %v1328, %v1325
      %v1596 = vpack.c.b16 %v1329, %v1326
      %v1597 = vpack.c.b16 %v1333, %v1330
      %v1598 = vpack.c.b16 %v1334, %v1331
      %v1599 = vpack.c.b16 %v1335, %v1332
      %v1600 = vpack.c.b16 %v1339, %v1336
      %v1601 = vpack.c.b16 %v1340, %v1337
      %v1602 = vpack.c.b16 %v1341, %v1338
      %v1603 = vpack.c.b16 %v1345, %v1342
      %v1604 = vpack.c.b16 %v1346, %v1343
      %v1605 = vpack.c.b16 %v1347, %v1344
      %v1606 = vpack.c.b16 %v1351, %v1348
      %v1607 = vpack.c.b16 %v1352, %v1349
      %v1608 = vpack.c.b16 %v1353, %v1350
      %v1609 = vpack.c.b16 %v1357, %v1354
      %v1610 = vpack.c.b16 %v1358, %v1355
      %v1611 = vpack.c.b16 %v1359, %v1356
      %v1612 = vpack.c.b16 %v1363, %v1360
      %v1613 = vpack.c.b16 %v1364, %v1361
      %v1614 = vpack.c.b16 %v1365, %v1362
      %v1615 = vpack.c.b16 %v1369, %v1366
      %v1616 = vpack.c.b16 %v1370, %v1367
      %v1617 = vpack.c.b16 %v1371, %v1368
      %v1618 = vpack.c.b16 %v1375, %v1372
      %v1619 = vpack.c.b16 %v1376, %v1373
      %v1620 = vpack.c.b16 %v1377, %v1374
      %v1621 = vpack.c.b16 %v1381, %v1378
      %v1622 = vpack.c.b16 %v1382, %v1379
      %v1623 = vpack.c.b16 %v1383, %v1380
      %v1624 = vpack.c.b16 %v1387, %v1384
      %v1625 = vpack.c.b16 %v1388, %v1385
      %v1626 = vpack.c.b16 %v1389, %v1386
      %v1627 = vpack.c.b16 %v1393, %v1390
      %v1628 = vpack.c.b16 %v1394, %v1391
      %v1629 = vpack.c.b16 %v1395, %v1392
      %v1630 = vpack.c.b16 %v1399, %v1396
      %v1631 = vpack.c.b16 %v1400, %v1397
      %v1632 = vpack.c.b16 %v1401, %v1398
      %v1865 = vlaneseq
      %v1866 = vshrl.u32 %v1865, 7
      %v1867 = vsub.s32 0, %v1866
      %v1868 = vrot.slane %v631, %v1867
      %v1869 = vlaneseq
      %v1870 = vshrl.u32 %v1869, 7
      %v1871 = vsub.s32 1, %v1870
      %v1872 = vrot.slane %v631, %v1871
      %v1873 = vlaneseq
      %v1874 = vshrl.u32 %v1873, 7
      %v1875 = vsub.s32 2, %v1874
      %v1876 = vrot.slane %v631, %v1875
      %vm1880 = vcmask 654336
      %v1882 = vsel %vm1880, %v322, 0
      %1884 = vmatprep.subr.bf16.mxu0 %v1403
      %1885 = vmatpush1.bf16.msra.mxu0 %v1402
      %1886 = vmatprep.subr.bf16.mxu0 %v1406
      %1887 = vmatpush1.bf16.msra.mxu0 %v1405
      %1888 = vmatprep.subr.bf16.mxu0 %v1409
      %1889 = vmatpush1.bf16.msra.mxu0 %v1408
      %1890 = vmatprep.subr.bf16.mxu0 %v1412
      %1891 = vmatpush1.bf16.msra.mxu0 %v1411
      %1892 = vmatprep.subr.bf16.mxu0 %v1415
      %1893 = vmatpush1.bf16.msra.mxu0 %v1414
      %1894 = vmatprep.subr.bf16.mxu0 %v1418
      %1895 = vmatpush1.bf16.msra.mxu0 %v1417
      %1896 = vmatprep.subr.bf16.mxu0 %v1421
      %1897 = vmatpush1.bf16.msra.mxu0 %v1420
      %1898 = vmatprep.subr.bf16.mxu0 %v1424
      %1899 = vmatpush1.bf16.msra.mxu0 %v1423
      %1900 = vmatprep.subr.bf16.mxu0 %v1427
      %1901 = vmatpush1.bf16.msra.mxu0 %v1426
      %1902 = vmatprep.subr.bf16.mxu0 %v1430
      %1903 = vmatpush1.bf16.msra.mxu0 %v1429
      %1904 = vmatprep.subr.bf16.mxu0 %v1433
      %1905 = vmatpush1.bf16.msra.mxu0 %v1432
      %1906 = vmatprep.subr.bf16.mxu0 %v1436
      %1907 = vmatpush1.bf16.msra.mxu0 %v1435
      %1908 = vmatprep.subr.bf16.mxu0 %v1439
      %1909 = vmatpush1.bf16.msra.mxu0 %v1438
      %1910 = vmatprep.subr.bf16.mxu0 %v1442
      %1911 = vmatpush1.bf16.msra.mxu0 %v1441
      %1912 = vmatprep.subr.bf16.mxu0 %v1445
      %1913 = vmatpush1.bf16.msra.mxu0 %v1444
      %1914 = vmatprep.subr.bf16.mxu0 %v1448
      %1915 = vmatpush1.bf16.msra.mxu0 %v1447
      %1916 = vmatprep.mubr.bf16.mxu0 %v314
      %1917 = vmatmul.mubr.bf16.gmra.mrb[0].mxu0 %v313
      %v1918 = vpop.f32.mrb[0].mxu0
      %v1919 = vadd.f32 %v1868, %v1918
      %v1920 = vpop.f32.mrb[0].mxu0
      %v1921 = vadd.f32 %v1872, %v1920
      %v1922 = vpop.f32.mrb[0].mxu0
      %v1923 = vpop.f32.mrb[0].mxu0
      %1924 = vdwg.mxu0
      %1925 = vmatprep.subr.bf16.mxu0 %v1451
      %1926 = vmatpush1.bf16.msra.mxu0 %v1450
      %1927 = vmatprep.subr.bf16.mxu0 %v1454
      %1928 = vmatpush1.bf16.msra.mxu0 %v1453
      %1929 = vmatprep.subr.bf16.mxu0 %v1457
      %1930 = vmatpush1.bf16.msra.mxu0 %v1456
      %1931 = vmatprep.subr.bf16.mxu0 %v1460
      %1932 = vmatpush1.bf16.msra.mxu0 %v1459
      %1933 = vmatprep.subr.bf16.mxu0 %v1463
      %1934 = vmatpush1.bf16.msra.mxu0 %v1462
      %1935 = vmatprep.subr.bf16.mxu0 %v1466
      %1936 = vmatpush1.bf16.msra.mxu0 %v1465
      %1937 = vmatprep.subr.bf16.mxu0 %v1469
      %1938 = vmatpush1.bf16.msra.mxu0 %v1468
      %1939 = vmatprep.subr.bf16.mxu0 %v1472
      %1940 = vmatpush1.bf16.msra.mxu0 %v1471
      %1941 = vmatprep.subr.bf16.mxu0 %v1475
      %1942 = vmatpush1.bf16.msra.mxu0 %v1474
      %1943 = vmatprep.subr.bf16.mxu0 %v1478
      %1944 = vmatpush1.bf16.msra.mxu0 %v1477
      %1945 = vmatprep.subr.bf16.mxu0 %v1481
      %1946 = vmatpush1.bf16.msra.mxu0 %v1480
      %1947 = vmatprep.subr.bf16.mxu0 %v1484
      %1948 = vmatpush1.bf16.msra.mxu0 %v1483
      %1949 = vmatprep.subr.bf16.mxu0 %v1487
      %1950 = vmatpush1.bf16.msra.mxu0 %v1486
      %1951 = vmatprep.subr.bf16.mxu0 %v1490
      %1952 = vmatpush1.bf16.msra.mxu0 %v1489
      %1953 = vmatprep.subr.bf16.mxu0 %v1493
      %1954 = vmatpush1.bf16.msra.mxu0 %v1492
      %1955 = vmatprep.subr.bf16.mxu0 %v1496
      %1956 = vmatpush1.bf16.msra.mxu0 %v1495
      %1957 = vmatprep.mubr.bf16.mxu0 %v316
      %1958 = vmatmul.mubr.bf16.gmra.mrb[0].mxu0 %v315
      %v1959 = vpop.f32.mrb[0].mxu0
      %v1960 = vadd.f32 %v1919, %v1959
      %v1961 = vpop.f32.mrb[0].mxu0
      %v1962 = vadd.f32 %v1921, %v1961
      %v1963 = vpop.f32.mrb[0].mxu0
      %v1964 = vpop.f32.mrb[0].mxu0
      %1965 = vdwg.mxu0
      %1966 = vmatprep.subr.bf16.mxu0 %v1499
      %1967 = vmatpush1.bf16.msra.mxu0 %v1498
      %1968 = vmatprep.subr.bf16.mxu0 %v1502
      %1969 = vmatpush1.bf16.msra.mxu0 %v1501
      %1970 = vmatprep.subr.bf16.mxu0 %v1505
      %1971 = vmatpush1.bf16.msra.mxu0 %v1504
      %1972 = vmatprep.subr.bf16.mxu0 %v1508
      %1973 = vmatpush1.bf16.msra.mxu0 %v1507
      %1974 = vmatprep.subr.bf16.mxu0 %v1511
      %1975 = vmatpush1.bf16.msra.mxu0 %v1510
      %1976 = vmatprep.subr.bf16.mxu0 %v1514
      %1977 = vmatpush1.bf16.msra.mxu0 %v1513
      %1978 = vmatprep.subr.bf16.mxu0 %v1517
      %1979 = vmatpush1.bf16.msra.mxu0 %v1516
      %1980 = vmatprep.subr.bf16.mxu0 %v1520
      %1981 = vmatpush1.bf16.msra.mxu0 %v1519
      %1982 = vmatprep.subr.bf16.mxu0 %v1523
      %1983 = vmatpush1.bf16.msra.mxu0 %v1522
      %1984 = vmatprep.subr.bf16.mxu0 %v1526
      %1985 = vmatpush1.bf16.msra.mxu0 %v1525
      %1986 = vmatprep.subr.bf16.mxu0 %v1529
      %1987 = vmatpush1.bf16.msra.mxu0 %v1528
      %1988 = vmatprep.subr.bf16.mxu0 %v1532
      %1989 = vmatpush1.bf16.msra.mxu0 %v1531
      %1990 = vmatprep.subr.bf16.mxu0 %v1535
      %1991 = vmatpush1.bf16.msra.mxu0 %v1534
      %1992 = vmatprep.subr.bf16.mxu0 %v1538
      %1993 = vmatpush1.bf16.msra.mxu0 %v1537
      %1994 = vmatprep.subr.bf16.mxu0 %v1541
      %1995 = vmatpush1.bf16.msra.mxu0 %v1540
      %1996 = vmatprep.subr.bf16.mxu0 %v1544
      %1997 = vmatpush1.bf16.msra.mxu0 %v1543
      %1998 = vmatprep.mubr.bf16.mxu0 %v318
      %1999 = vmatmul.mubr.bf16.gmra.mrb[0].mxu0 %v317
      %v2000 = vpop.f32.mrb[0].mxu0
      %v2001 = vadd.f32 %v1960, %v2000
      %v2002 = vpop.f32.mrb[0].mxu0
      %v2003 = vadd.f32 %v1962, %v2002
      %v2004 = vpop.f32.mrb[0].mxu0
      %v2005 = vpop.f32.mrb[0].mxu0
      %2006 = vdwg.mxu0
      %2007 = vmatprep.subr.bf16.mxu0 %v1547
      %2008 = vmatpush1.bf16.msra.mxu0 %v1546
      %2009 = vmatprep.subr.bf16.mxu0 %v1550
      %2010 = vmatpush1.bf16.msra.mxu0 %v1549
      %2011 = vmatprep.subr.bf16.mxu0 %v1553
      %2012 = vmatpush1.bf16.msra.mxu0 %v1552
      %2013 = vmatprep.subr.bf16.mxu0 %v1556
      %2014 = vmatpush1.bf16.msra.mxu0 %v1555
      %2015 = vmatprep.subr.bf16.mxu0 %v1559
      %2016 = vmatpush1.bf16.msra.mxu0 %v1558
      %2017 = vmatprep.subr.bf16.mxu0 %v1562
      %2018 = vmatpush1.bf16.msra.mxu0 %v1561
      %2019 = vmatprep.subr.bf16.mxu0 %v1565
      %2020 = vmatpush1.bf16.msra.mxu0 %v1564
      %2021 = vmatprep.subr.bf16.mxu0 %v1568
      %2022 = vmatpush1.bf16.msra.mxu0 %v1567
      %2023 = vmatprep.subr.bf16.mxu0 %v1571
      %2024 = vmatpush1.bf16.msra.mxu0 %v1570
      %2025 = vmatprep.subr.bf16.mxu0 %v1574
      %2026 = vmatpush1.bf16.msra.mxu0 %v1573
      %2027 = vmatprep.subr.bf16.mxu0 %v1577
      %2028 = vmatpush1.bf16.msra.mxu0 %v1576
      %2029 = vmatprep.subr.bf16.mxu0 %v1580
      %2030 = vmatpush1.bf16.msra.mxu0 %v1579
      %2031 = vmatprep.subr.bf16.mxu0 %v1583
      %2032 = vmatpush1.bf16.msra.mxu0 %v1582
      %2033 = vmatprep.subr.bf16.mxu0 %v1586
      %2034 = vmatpush1.bf16.msra.mxu0 %v1585
      %2035 = vmatprep.subr.bf16.mxu0 %v1589
      %2036 = vmatpush1.bf16.msra.mxu0 %v1588
      %2037 = vmatprep.subr.bf16.mxu0 %v1592
      %2038 = vmatpush1.bf16.msra.mxu0 %v1591
      %2039 = vmatprep.mubr.bf16.mxu0 %v320
      %2040 = vmatmul.mubr.bf16.gmra.mrb[0].mxu0 %v319
      %v2041 = vpop.f32.mrb[0].mxu0
      %v2042 = vadd.f32 %v2001, %v2041
      %v2043 = vpop.f32.mrb[0].mxu0
      %v2044 = vadd.f32 %v2003, %v2043
      %v2045 = vpop.f32.mrb[0].mxu0
      %v2046 = vpop.f32.mrb[0].mxu0
      %2047 = vdwg.mxu0
      %2048 = vmatprep.subr.bf16.mxu0 %v1595
      %2049 = vmatpush1.bf16.msra.mxu0 %v1594
      %2050 = vmatprep.subr.bf16.mxu0 %v1598
      %2051 = vmatpush1.bf16.msra.mxu0 %v1597
      %2052 = vmatprep.subr.bf16.mxu0 %v1601
      %2053 = vmatpush1.bf16.msra.mxu0 %v1600
      %2054 = vmatprep.subr.bf16.mxu0 %v1604
      %2055 = vmatpush1.bf16.msra.mxu0 %v1603
      %2056 = vmatprep.subr.bf16.mxu0 %v1607
      %2057 = vmatpush1.bf16.msra.mxu0 %v1606
      %2058 = vmatprep.subr.bf16.mxu0 %v1610
      %2059 = vmatpush1.bf16.msra.mxu0 %v1609
      %2060 = vmatprep.subr.bf16.mxu0 %v1613
      %2061 = vmatpush1.bf16.msra.mxu0 %v1612
      %2062 = vmatprep.subr.bf16.mxu0 %v1616
      %2063 = vmatpush1.bf16.msra.mxu0 %v1615
      %2064 = vmatprep.subr.bf16.mxu0 %v1619
      %2065 = vmatpush1.bf16.msra.mxu0 %v1618
      %2066 = vmatprep.subr.bf16.mxu0 %v1622
      %2067 = vmatpush1.bf16.msra.mxu0 %v1621
      %2068 = vmatprep.subr.bf16.mxu0 %v1625
      %2069 = vmatpush1.bf16.msra.mxu0 %v1624
      %2070 = vmatprep.subr.bf16.mxu0 %v1628
      %2071 = vmatpush1.bf16.msra.mxu0 %v1627
      %2072 = vmatprep.subr.bf16.mxu0 %v1631
      %2073 = vmatpush1.bf16.msra.mxu0 %v1630
      %2074 = vmatprep.subr.bf16.mxu0 0
      %2075 = vmatpush1.bf16.msra.mxu0 0
      %2076 = vmatprep.subr.bf16.mxu0 0
      %2077 = vmatpush1.bf16.msra.mxu0 0
      %2078 = vmatprep.subr.bf16.mxu0 0
      %2079 = vmatpush1.bf16.msra.mxu0 0
      %2080 = vmatprep.mubr.bf16.mxu0 %v1882
      %2081 = vmatmul.mubr.bf16.gmra.mrb[0].mxu0 %v321
      %v2082 = vpop.f32.mrb[0].mxu0
      %v2083 = vadd.f32 %v2042, %v2082
      %v2084 = vpop.f32.mrb[0].mxu0
      %v2085 = vadd.f32 %v2044, %v2084
      %v2086 = vpop.f32.mrb[0].mxu0
      %v2087 = vpop.f32.mrb[0].mxu0
      %2088 = vdwg.mxu0
      %2089 = vmatprep.subr.bf16.mxu0 0
      %2090 = vmatpush1.bf16.msra.mxu0 %v1404
      %2091 = vmatprep.subr.bf16.mxu0 0
      %2092 = vmatpush1.bf16.msra.mxu0 %v1407
      %2093 = vmatprep.subr.bf16.mxu0 0
      %2094 = vmatpush1.bf16.msra.mxu0 %v1410
      %2095 = vmatprep.subr.bf16.mxu0 0
      %2096 = vmatpush1.bf16.msra.mxu0 %v1413
      %2097 = vmatprep.subr.bf16.mxu0 0
      %2098 = vmatpush1.bf16.msra.mxu0 %v1416
      %2099 = vmatprep.subr.bf16.mxu0 0
      %2100 = vmatpush1.bf16.msra.mxu0 %v1419
      %2101 = vmatprep.subr.bf16.mxu0 0
      %2102 = vmatpush1.bf16.msra.mxu0 %v1422
      %2103 = vmatprep.subr.bf16.mxu0 0
      %2104 = vmatpush1.bf16.msra.mxu0 %v1425
      %2105 = vmatprep.subr.bf16.mxu0 0
      %2106 = vmatpush1.bf16.msra.mxu0 %v1428
      %2107 = vmatprep.subr.bf16.mxu0 0
      %2108 = vmatpush1.bf16.msra.mxu0 %v1431
      %2109 = vmatprep.subr.bf16.mxu0 0
      %2110 = vmatpush1.bf16.msra.mxu0 %v1434
      %2111 = vmatprep.subr.bf16.mxu0 0
      %2112 = vmatpush1.bf16.msra.mxu0 %v1437
      %2113 = vmatprep.subr.bf16.mxu0 0
      %2114 = vmatpush1.bf16.msra.mxu0 %v1440
      %2115 = vmatprep.subr.bf16.mxu0 0
      %2116 = vmatpush1.bf16.msra.mxu0 %v1443
      %2117 = vmatprep.subr.bf16.mxu0 0
      %2118 = vmatpush1.bf16.msra.mxu0 %v1446
      %2119 = vmatprep.subr.bf16.mxu0 0
      %2120 = vmatpush1.bf16.msra.mxu0 %v1449
      %2121 = vmatprep.mubr.bf16.mxu0 %v314
      %2122 = vmatmul.mubr.bf16.gmra.mrb[0].mxu0 %v313
      %v2123 = vpop.f32.mrb[0].mxu0
      %v2124 = vadd.f32 %v1876, %v2123
      %v2125 = vpop.f32.mrb[0].mxu0
      %v2126 = vpop.f32.mrb[0].mxu0
      %v2127 = vpop.f32.mrb[0].mxu0
      %2128 = vdwg.mxu0
      %2129 = vmatprep.subr.bf16.mxu0 0
      %2130 = vmatpush1.bf16.msra.mxu0 %v1452
      %2131 = vmatprep.subr.bf16.mxu0 0
      %2132 = vmatpush1.bf16.msra.mxu0 %v1455
      %2133 = vmatprep.subr.bf16.mxu0 0
      %2134 = vmatpush1.bf16.msra.mxu0 %v1458
      %2135 = vmatprep.subr.bf16.mxu0 0
      %2136 = vmatpush1.bf16.msra.mxu0 %v1461
      %2137 = vmatprep.subr.bf16.mxu0 0
      %2138 = vmatpush1.bf16.msra.mxu0 %v1464
      %2139 = vmatprep.subr.bf16.mxu0 0
      %2140 = vmatpush1.bf16.msra.mxu0 %v1467
      %2141 = vmatprep.subr.bf16.mxu0 0
      %2142 = vmatpush1.bf16.msra.mxu0 %v1470
      %2143 = vmatprep.subr.bf16.mxu0 0
      %2144 = vmatpush1.bf16.msra.mxu0 %v1473
      %2145 = vmatprep.subr.bf16.mxu0 0
      %2146 = vmatpush1.bf16.msra.mxu0 %v1476
      %2147 = vmatprep.subr.bf16.mxu0 0
      %2148 = vmatpush1.bf16.msra.mxu0 %v1479
      %2149 = vmatprep.subr.bf16.mxu0 0
      %2150 = vmatpush1.bf16.msra.mxu0 %v1482
      %2151 = vmatprep.subr.bf16.mxu0 0
      %2152 = vmatpush1.bf16.msra.mxu0 %v1485
      %2153 = vmatprep.subr.bf16.mxu0 0
      %2154 = vmatpush1.bf16.msra.mxu0 %v1488
      %2155 = vmatprep.subr.bf16.mxu0 0
      %2156 = vmatpush1.bf16.msra.mxu0 %v1491
      %2157 = vmatprep.subr.bf16.mxu0 0
      %2158 = vmatpush1.bf16.msra.mxu0 %v1494
      %2159 = vmatprep.subr.bf16.mxu0 0
      %2160 = vmatpush1.bf16.msra.mxu0 %v1497
      %2161 = vmatprep.mubr.bf16.mxu0 %v316
      %2162 = vmatmul.mubr.bf16.gmra.mrb[0].mxu0 %v315
      %v2163 = vpop.f32.mrb[0].mxu0
      %v2164 = vadd.f32 %v2124, %v2163
      %v2165 = vpop.f32.mrb[0].mxu0
      %v2166 = vpop.f32.mrb[0].mxu0
      %v2167 = vpop.f32.mrb[0].mxu0
      %2168 = vdwg.mxu0
      %2169 = vmatprep.subr.bf16.mxu0 0
      %2170 = vmatpush1.bf16.msra.mxu0 %v1500
      %2171 = vmatprep.subr.bf16.mxu0 0
      %2172 = vmatpush1.bf16.msra.mxu0 %v1503
      %2173 = vmatprep.subr.bf16.mxu0 0
      %2174 = vmatpush1.bf16.msra.mxu0 %v1506
      %2175 = vmatprep.subr.bf16.mxu0 0
      %2176 = vmatpush1.bf16.msra.mxu0 %v1509
      %2177 = vmatprep.subr.bf16.mxu0 0
      %2178 = vmatpush1.bf16.msra.mxu0 %v1512
      %2179 = vmatprep.subr.bf16.mxu0 0
      %2180 = vmatpush1.bf16.msra.mxu0 %v1515
      %2181 = vmatprep.subr.bf16.mxu0 0
      %2182 = vmatpush1.bf16.msra.mxu0 %v1518
      %2183 = vmatprep.subr.bf16.mxu0 0
      %2184 = vmatpush1.bf16.msra.mxu0 %v1521
      %2185 = vmatprep.subr.bf16.mxu0 0
      %2186 = vmatpush1.bf16.msra.mxu0 %v1524
      %2187 = vmatprep.subr.bf16.mxu0 0
      %2188 = vmatpush1.bf16.msra.mxu0 %v1527
      %2189 = vmatprep.subr.bf16.mxu0 0
      %2190 = vmatpush1.bf16.msra.mxu0 %v1530
      %2191 = vmatprep.subr.bf16.mxu0 0
      %2192 = vmatpush1.bf16.msra.mxu0 %v1533
      %2193 = vmatprep.subr.bf16.mxu0 0
      %2194 = vmatpush1.bf16.msra.mxu0 %v1536
      %2195 = vmatprep.subr.bf16.mxu0 0
      %2196 = vmatpush1.bf16.msra.mxu0 %v1539
      %2197 = vmatprep.subr.bf16.mxu0 0
      %2198 = vmatpush1.bf16.msra.mxu0 %v1542
      %2199 = vmatprep.subr.bf16.mxu0 0
      %2200 = vmatpush1.bf16.msra.mxu0 %v1545
      %2201 = vmatprep.mubr.bf16.mxu0 %v318
      %2202 = vmatmul.mubr.bf16.gmra.mrb[0].mxu0 %v317
      %v2203 = vpop.f32.mrb[0].mxu0
      %v2204 = vadd.f32 %v2164, %v2203
      %v2205 = vpop.f32.mrb[0].mxu0
      %v2206 = vpop.f32.mrb[0].mxu0
      %v2207 = vpop.f32.mrb[0].mxu0
      %2208 = vdwg.mxu0
      %2209 = vmatprep.subr.bf16.mxu0 0
      %2210 = vmatpush1.bf16.msra.mxu0 %v1548
      %2211 = vmatprep.subr.bf16.mxu0 0
      %2212 = vmatpush1.bf16.msra.mxu0 %v1551
      %2213 = vmatprep.subr.bf16.mxu0 0
      %2214 = vmatpush1.bf16.msra.mxu0 %v1554
      %2215 = vmatprep.subr.bf16.mxu0 0
      %2216 = vmatpush1.bf16.msra.mxu0 %v1557
      %2217 = vmatprep.subr.bf16.mxu0 0
      %2218 = vmatpush1.bf16.msra.mxu0 %v1560
      %2219 = vmatprep.subr.bf16.mxu0 0
      %2220 = vmatpush1.bf16.msra.mxu0 %v1563
      %2221 = vmatprep.subr.bf16.mxu0 0
      %2222 = vmatpush1.bf16.msra.mxu0 %v1566
      %2223 = vmatprep.subr.bf16.mxu0 0
      %2224 = vmatpush1.bf16.msra.mxu0 %v1569
      %2225 = vmatprep.subr.bf16.mxu0 0
      %2226 = vmatpush1.bf16.msra.mxu0 %v1572
      %2227 = vmatprep.subr.bf16.mxu0 0
      %2228 = vmatpush1.bf16.msra.mxu0 %v1575
      %2229 = vmatprep.subr.bf16.mxu0 0
      %2230 = vmatpush1.bf16.msra.mxu0 %v1578
      %2231 = vmatprep.subr.bf16.mxu0 0
      %2232 = vmatpush1.bf16.msra.mxu0 %v1581
      %2233 = vmatprep.subr.bf16.mxu0 0
      %2234 = vmatpush1.bf16.msra.mxu0 %v1584
      %2235 = vmatprep.subr.bf16.mxu0 0
      %2236 = vmatpush1.bf16.msra.mxu0 %v1587
      %2237 = vmatprep.subr.bf16.mxu0 0
      %2238 = vmatpush1.bf16.msra.mxu0 %v1590
      %2239 = vmatprep.subr.bf16.mxu0 0
      %2240 = vmatpush1.bf16.msra.mxu0 %v1593
      %2241 = vmatprep.mubr.bf16.mxu0 %v320
      %2242 = vmatmul.mubr.bf16.gmra.mrb[0].mxu0 %v319
      %v2243 = vpop.f32.mrb[0].mxu0
      %v2244 = vadd.f32 %v2204, %v2243
      %v2245 = vpop.f32.mrb[0].mxu0
      %v2246 = vpop.f32.mrb[0].mxu0
      %v2247 = vpop.f32.mrb[0].mxu0
      %2248 = vdwg.mxu0
      %2249 = vmatprep.subr.bf16.mxu0 0
      %2250 = vmatpush1.bf16.msra.mxu0 %v1596
      %2251 = vmatprep.subr.bf16.mxu0 0
      %2252 = vmatpush1.bf16.msra.mxu0 %v1599
      %2253 = vmatprep.subr.bf16.mxu0 0
      %2254 = vmatpush1.bf16.msra.mxu0 %v1602
      %2255 = vmatprep.subr.bf16.mxu0 0
      %2256 = vmatpush1.bf16.msra.mxu0 %v1605
      %2257 = vmatprep.subr.bf16.mxu0 0
      %2258 = vmatpush1.bf16.msra.mxu0 %v1608
      %2259 = vmatprep.subr.bf16.mxu0 0
      %2260 = vmatpush1.bf16.msra.mxu0 %v1611
      %2261 = vmatprep.subr.bf16.mxu0 0
      %2262 = vmatpush1.bf16.msra.mxu0 %v1614
      %2263 = vmatprep.subr.bf16.mxu0 0
      %2264 = vmatpush1.bf16.msra.mxu0 %v1617
      %2265 = vmatprep.subr.bf16.mxu0 0
      %2266 = vmatpush1.bf16.msra.mxu0 %v1620
      %2267 = vmatprep.subr.bf16.mxu0 0
      %2268 = vmatpush1.bf16.msra.mxu0 %v1623
      %2269 = vmatprep.subr.bf16.mxu0 0
      %2270 = vmatpush1.bf16.msra.mxu0 %v1626
      %2271 = vmatprep.subr.bf16.mxu0 0
      %2272 = vmatpush1.bf16.msra.mxu0 %v1629
      %2273 = vmatprep.subr.bf16.mxu0 0
      %2274 = vmatpush1.bf16.msra.mxu0 %v1632
      %2275 = vmatprep.subr.bf16.mxu0 0
      %2276 = vmatpush1.bf16.msra.mxu0 0
      %2277 = vmatprep.subr.bf16.mxu0 0
      %2278 = vmatpush1.bf16.msra.mxu0 0
      %2279 = vmatprep.subr.bf16.mxu0 0
      %2280 = vmatpush1.bf16.msra.mxu0 0
      %2281 = vmatprep.mubr.bf16.mxu0 %v1882
      %2282 = vmatmul.mubr.bf16.gmra.mrb[0].mxu0 %v321
      %v2283 = vpop.f32.mrb[0].mxu0
      %v2284 = vadd.f32 %v2244, %v2283
      %v2285 = vpop.f32.mrb[0].mxu0
      %v2286 = vpop.f32.mrb[0].mxu0
      %v2287 = vpop.f32.mrb[0].mxu0
      %2288 = vdwg.mxu0
      %v2289 = vmax.f32 %v2083, 0.0
      %v2290 = vmax.f32 %v2085, 0.0
      %v2291 = vmax.f32 %v2284, 0.0
      %v2292 = vld [vmem:[%s242] sm:$0xff]
      %v2293 = vld [vmem:[%s242 + $0x8] sm:$0xf]
      %v2294 = vld [vmem:[%s242 + $0xc] sm:$0xff]
      %v2295 = vld [vmem:[%s242 + $0x14] sm:$0xf]
      %v2296 = vld [vmem:[%s242 + $0x18] sm:$0xff]
      %v2297 = vld [vmem:[%s242 + $0x20] sm:$0xf]
      %v2298 = vld [vmem:[%s242 + $0x24] sm:$0xff]
      %v2299 = vld [vmem:[%s242 + $0x2c] sm:$0xf]
      %v2300 = vld [vmem:[%s242 + $0x30] sm:$0xff]
      %v2301 = vld [vmem:[%s242 + $0x38] sm:$0xf]
      %v2302 = vld [vmem:[%s242 + $0x3c] sm:$0xff]
      %v2303 = vld [vmem:[%s242 + $0x44] sm:$0xf]
      %v2304 = vld [vmem:[%s242 + $0x48] sm:$0xff]
      %v2305 = vld [vmem:[%s242 + $0x50] sm:$0xf]
      %v2306 = vld [vmem:[%s242 + $0x54] sm:$0xff]
      %v2307 = vld [vmem:[%s242 + $0x5c] sm:$0xf]
      %v2308 = vld [vmem:[%s242 + $0x60] sm:$0xff]
      %v2309 = vld [vmem:[%s242 + $0x68] sm:$0xf]
      %v2310 = vld [vmem:[%s242 + $0x6c] sm:$0xff]
      %v2311 = vld [vmem:[%s242 + $0x74] sm:$0xf]
      %v2312 = vld [vmem:[%s242 + $0x78] sm:$0xff]
      %v2313 = vld [vmem:[%s242 + $0x80] sm:$0xf]
      %v2314 = vld [vmem:[%s242 + $0x84] sm:$0xff]
      %v2315 = vld [vmem:[%s242 + $0x8c] sm:$0xf]
      %v2316 = vld [vmem:[%s242 + $0x90] sm:$0xff]
      %v2317 = vld [vmem:[%s242 + $0x98] sm:$0xf]
      %v2318 = vld [vmem:[%s242 + $0x9c] sm:$0xff]
      %v2319 = vld [vmem:[%s242 + $0xa4] sm:$0xf]
      %v2320 = vld [vmem:[%s242 + $0xa8] sm:$0xff]
      %v2321 = vld [vmem:[%s242 + $0xb0] sm:$0xf]
      %v2322 = vld [vmem:[%s242 + $0xb4] sm:$0xff]
      %v2323 = vld [vmem:[%s242 + $0xbc] sm:$0xf]
      %v2324 = vld [vmem:[%s242 + $0xc0] sm:$0xff]
      %v2325 = vld [vmem:[%s242 + $0xc8] sm:$0xf]
      %v2326 = vld [vmem:[%s242 + $0xcc] sm:$0xff]
      %v2327 = vld [vmem:[%s242 + $0xd4] sm:$0xf]
      %v2328 = vld [vmem:[%s242 + $0xd8] sm:$0xff]
      %v2329 = vld [vmem:[%s242 + $0xe0] sm:$0xf]
      %v2330 = vld [vmem:[%s242 + $0xe4] sm:$0xff]
      %v2331 = vld [vmem:[%s242 + $0xec] sm:$0xf]
      %v2332 = vld [vmem:[%s242 + $0xf0] sm:$0xff]
      %v2333 = vld [vmem:[%s242 + $0xf8] sm:$0xf]
      %v2334 = vld [vmem:[%s242 + $0xfc] sm:$0xff]
      %v2335 = vld [vmem:[%s242 + $0x104] sm:$0xf]
      %v2336 = vld [vmem:[%s242 + $0x108] sm:$0xff]
      %v2337 = vld [vmem:[%s242 + $0x110] sm:$0xf]
      %v2338 = vld [vmem:[%s242 + $0x114] sm:$0xff]
      %v2339 = vld [vmem:[%s242 + $0x11c] sm:$0xf]
      %v2340 = vld [vmem:[%s242 + $0x120] sm:$0xff]
      %v2341 = vld [vmem:[%s242 + $0x128] sm:$0xf]
      %v2342 = vld [vmem:[%s242 + $0x12c] sm:$0xff]
      %v2343 = vld [vmem:[%s242 + $0x134] sm:$0xf]
      %v2344 = vld [vmem:[%s242 + $0x138] sm:$0xff]
      %v2345 = vld [vmem:[%s242 + $0x140] sm:$0xf]
      %v2346 = vld [vmem:[%s242 + $0x144] sm:$0xff]
      %v2347 = vld [vmem:[%s242 + $0x14c] sm:$0xf]
      %v2348 = vld [vmem:[%s242 + $0x150] sm:$0xff]
      %v2349 = vld [vmem:[%s242 + $0x158] sm:$0xf]
      %v2350 = vld [vmem:[%s242 + $0x15c] sm:$0xff]
      %v2351 = vld [vmem:[%s242 + $0x164] sm:$0xf]
      %v2352 = vld [vmem:[%s242 + $0x168] sm:$0xff]
      %v2353 = vld [vmem:[%s242 + $0x170] sm:$0xf]
      %v2354 = vld [vmem:[%s242 + $0x174] sm:$0xff]
      %v2355 = vld [vmem:[%s242 + $0x17c] sm:$0xf]
      %v2356 = vld [vmem:[%s242 + $0x180] sm:$0xff]
      %v2357 = vld [vmem:[%s242 + $0x188] sm:$0xf]
      %v2358 = vld [vmem:[%s242 + $0x18c] sm:$0xff]
      %v2359 = vld [vmem:[%s242 + $0x194] sm:$0xf]
      %v2360 = vld [vmem:[%s242 + $0x198] sm:$0xff]
      %v2361 = vld [vmem:[%s242 + $0x1a0] sm:$0xf]
      %v2362 = vld [vmem:[%s242 + $0x1a4] sm:$0xff]
      %v2363 = vld [vmem:[%s242 + $0x1ac] sm:$0xf]
      %v2364 = vld [vmem:[%s242 + $0x1b0] sm:$0xff]
      %v2365 = vld [vmem:[%s242 + $0x1b8] sm:$0xf]
      %v2366 = vld [vmem:[%s242 + $0x1bc] sm:$0xff]
      %v2367 = vld [vmem:[%s242 + $0x1c4] sm:$0xf]
      %v2368 = vld [vmem:[%s242 + $0x1c8] sm:$0xff]
      %v2369 = vld [vmem:[%s242 + $0x1d0] sm:$0xf]
      %v2370 = vld [vmem:[%s242 + $0x1d4] sm:$0xff]
      %v2371 = vld [vmem:[%s242 + $0x1dc] sm:$0xf]
      %v2372 = vld [vmem:[%s242 + $0x1e0] sm:$0xff]
      %v2373 = vld [vmem:[%s242 + $0x1e8] sm:$0xf]
      %v2374 = vld [vmem:[%s242 + $0x1ec] sm:$0xff]
      %v2375 = vld [vmem:[%s242 + $0x1f4] sm:$0xf]
      %v2376 = vld [vmem:[%s242 + $0x1f8] sm:$0xff]
      %v2377 = vld [vmem:[%s242 + $0x200] sm:$0xf]
      %v2378 = vld [vmem:[%s242 + $0x204] sm:$0xff]
      %v2379 = vld [vmem:[%s242 + $0x20c] sm:$0xf]
      %v2380 = vld [vmem:[%s242 + $0x210] sm:$0xff]
      %v2381 = vld [vmem:[%s242 + $0x218] sm:$0xf]
      %v2382 = vld [vmem:[%s242 + $0x21c] sm:$0xff]
      %v2383 = vld [vmem:[%s242 + $0x224] sm:$0xf]
      %v2384 = vld [vmem:[%s242 + $0x228] sm:$0xff]
      %v2385 = vld [vmem:[%s242 + $0x230] sm:$0xf]
      %v2386 = vld [vmem:[%s242 + $0x234] sm:$0xff]
      %v2387 = vld [vmem:[%s242 + $0x23c] sm:$0xf]
      %v2388 = vld [vmem:[%s242 + $0x240] sm:$0xff]
      %v2389 = vld [vmem:[%s242 + $0x248] sm:$0xf]
      %v2390 = vld [vmem:[%s242 + $0x24c] sm:$0xff]
      %v2391 = vld [vmem:[%s242 + $0x254] sm:$0xf]
      %v2392 = vld [vmem:[%s242 + $0x258] sm:$0xff]
      %v2393 = vld [vmem:[%s242 + $0x260] sm:$0xf]
      %v2394 = vld [vmem:[%s242 + $0x264] sm:$0xff]
      %v2395 = vld [vmem:[%s242 + $0x26c] sm:$0xf]
      %v2396 = vld [vmem:[%s242 + $0x270] sm:$0xff]
      %v2397 = vld [vmem:[%s242 + $0x278] sm:$0xf]
      %v2398 = vld [vmem:[%s242 + $0x27c] sm:$0xff]
      %v2399 = vld [vmem:[%s242 + $0x284] sm:$0xf]
      %v2400 = vld [vmem:[%s242 + $0x288] sm:$0xff]
      %v2401 = vld [vmem:[%s242 + $0x290] sm:$0xf]
      %v2402 = vld [vmem:[%s242 + $0x294] sm:$0xff]
      %v2403 = vld [vmem:[%s242 + $0x29c] sm:$0xf]
      %v2404 = vld [vmem:[%s242 + $0x2a0] sm:$0xff]
      %v2405 = vld [vmem:[%s242 + $0x2a8] sm:$0xf]
      %v2406 = vld [vmem:[%s242 + $0x2ac] sm:$0xff]
      %v2407 = vld [vmem:[%s242 + $0x2b4] sm:$0xf]
      %v2408 = vld [vmem:[%s242 + $0x2b8] sm:$0xff]
      %v2409 = vld [vmem:[%s242 + $0x2c0] sm:$0xf]
      %v2410 = vld [vmem:[%s242 + $0x2c4] sm:$0xff]
      %v2411 = vld [vmem:[%s242 + $0x2cc] sm:$0xf]
      %v2412 = vld [vmem:[%s242 + $0x2d0] sm:$0xff]
      %v2413 = vld [vmem:[%s242 + $0x2d8] sm:$0xf]
      %v2414 = vld [vmem:[%s242 + $0x2dc] sm:$0xff]
      %v2415 = vld [vmem:[%s242 + $0x2e4] sm:$0xf]
      %v2416 = vld [vmem:[%s242 + $0x2e8] sm:$0xff]
      %v2417 = vld [vmem:[%s242 + $0x2f0] sm:$0xf]
      %v2418 = vld [vmem:[%s242 + $0x2f4] sm:$0xff]
      %v2419 = vld [vmem:[%s242 + $0x2fc] sm:$0xf]
      %v2420 = vld [vmem:[%s242 + $0x300] sm:$0xff]
      %v2421 = vld [vmem:[%s242 + $0x308] sm:$0xf]
      %v2422 = vld [vmem:[%s242 + $0x30c] sm:$0xff]
      %v2423 = vld [vmem:[%s242 + $0x314] sm:$0xf]
      %v2424 = vld [vmem:[%s242 + $0x318] sm:$0xff]
      %v2425 = vld [vmem:[%s242 + $0x320] sm:$0xf]
      %v2426 = vld [vmem:[%s242 + $0x324] sm:$0xff]
      %v2427 = vld [vmem:[%s242 + $0x32c] sm:$0xf]
      %v2428 = vld [vmem:[%s242 + $0x330] sm:$0xff]
      %v2429 = vld [vmem:[%s242 + $0x338] sm:$0xf]
      %v2430 = vld [vmem:[%s242 + $0x33c] sm:$0xff]
      %v2431 = vld [vmem:[%s242 + $0x344] sm:$0xf]
      %v2432 = vld [vmem:[%s242 + $0x348] sm:$0xff]
      %v2433 = vld [vmem:[%s242 + $0x350] sm:$0xf]
      %v2434 = vld [vmem:[%s242 + $0x354] sm:$0xff]
      %v2435 = vld [vmem:[%s242 + $0x35c] sm:$0xf]
      %v2436 = vld [vmem:[%s242 + $0x360] sm:$0xff]
      %v2437 = vld [vmem:[%s242 + $0x368] sm:$0xf]
      %v2438 = vld [vmem:[%s242 + $0x36c] sm:$0xff]
      %v2439 = vld [vmem:[%s242 + $0x374] sm:$0xf]
      %v2440 = vld [vmem:[%s242 + $0x378] sm:$0xff]
      %v2441 = vld [vmem:[%s242 + $0x380] sm:$0xf]
      %v2442 = vld [vmem:[%s242 + $0x384] sm:$0xff]
      %v2443 = vld [vmem:[%s242 + $0x38c] sm:$0xf]
      %v2444 = vld [vmem:[%s242 + $0x390] sm:$0xff]
      %v2445 = vld [vmem:[%s242 + $0x398] sm:$0xf]
      %v2446 = vunpack.c.l.bf16 %v2292
      %v2447 = vunpack.c.h.bf16 %v2292
      %v2448 = vunpack.c.l.bf16 %v2293
      %v2449 = vunpack.c.l.bf16 %v2294
      %v2450 = vunpack.c.h.bf16 %v2294
      %v2451 = vunpack.c.l.bf16 %v2295
      %v2452 = vunpack.c.l.bf16 %v2296
      %v2453 = vunpack.c.h.bf16 %v2296
      %v2454 = vunpack.c.l.bf16 %v2297
      %v2455 = vunpack.c.l.bf16 %v2298
      %v2456 = vunpack.c.h.bf16 %v2298
      %v2457 = vunpack.c.l.bf16 %v2299
      %v2458 = vunpack.c.l.bf16 %v2300
      %v2459 = vunpack.c.h.bf16 %v2300
      %v2460 = vunpack.c.l.bf16 %v2301
      %v2461 = vunpack.c.l.bf16 %v2302
      %v2462 = vunpack.c.h.bf16 %v2302
      %v2463 = vunpack.c.l.bf16 %v2303
      %v2464 = vunpack.c.l.bf16 %v2304
      %v2465 = vunpack.c.h.bf16 %v2304
      %v2466 = vunpack.c.l.bf16 %v2305
      %v2467 = vunpack.c.l.bf16 %v2306
      %v2468 = vunpack.c.h.bf16 %v2306
      %v2469 = vunpack.c.l.bf16 %v2307
      %v2470 = vunpack.c.l.bf16 %v2308
      %v2471 = vunpack.c.h.bf16 %v2308
      %v2472 = vunpack.c.l.bf16 %v2309
      %v2473 = vunpack.c.l.bf16 %v2310
      %v2474 = vunpack.c.h.bf16 %v2310
      %v2475 = vunpack.c.l.bf16 %v2311
      %v2476 = vunpack.c.l.bf16 %v2312
      %v2477 = vunpack.c.h.bf16 %v2312
      %v2478 = vunpack.c.l.bf16 %v2313
      %v2479 = vunpack.c.l.bf16 %v2314
      %v2480 = vunpack.c.h.bf16 %v2314
      %v2481 = vunpack.c.l.bf16 %v2315
      %v2482 = vunpack.c.l.bf16 %v2316
      %v2483 = vunpack.c.h.bf16 %v2316
      %v2484 = vunpack.c.l.bf16 %v2317
      %v2485 = vunpack.c.l.bf16 %v2318
      %v2486 = vunpack.c.h.bf16 %v2318
      %v2487 = vunpack.c.l.bf16 %v2319
      %v2488 = vunpack.c.l.bf16 %v2320
      %v2489 = vunpack.c.h.bf16 %v2320
      %v2490 = vunpack.c.l.bf16 %v2321
      %v2491 = vunpack.c.l.bf16 %v2322
      %v2492 = vunpack.c.h.bf16 %v2322
      %v2493 = vunpack.c.l.bf16 %v2323
      %v2494 = vunpack.c.l.bf16 %v2324
      %v2495 = vunpack.c.h.bf16 %v2324
      %v2496 = vunpack.c.l.bf16 %v2325
      %v2497 = vunpack.c.l.bf16 %v2326
      %v2498 = vunpack.c.h.bf16 %v2326
      %v2499 = vunpack.c.l.bf16 %v2327
      %v2500 = vunpack.c.l.bf16 %v2328
      %v2501 = vunpack.c.h.bf16 %v2328
      %v2502 = vunpack.c.l.bf16 %v2329
      %v2503 = vunpack.c.l.bf16 %v2330
      %v2504 = vunpack.c.h.bf16 %v2330
      %v2505 = vunpack.c.l.bf16 %v2331
      %v2506 = vunpack.c.l.bf16 %v2332
      %v2507 = vunpack.c.h.bf16 %v2332
      %v2508 = vunpack.c.l.bf16 %v2333
      %v2509 = vunpack.c.l.bf16 %v2334
      %v2510 = vunpack.c.h.bf16 %v2334
      %v2511 = vunpack.c.l.bf16 %v2335
      %v2512 = vunpack.c.l.bf16 %v2336
      %v2513 = vunpack.c.h.bf16 %v2336
      %v2514 = vunpack.c.l.bf16 %v2337
      %v2515 = vunpack.c.l.bf16 %v2338
      %v2516 = vunpack.c.h.bf16 %v2338
      %v2517 = vunpack.c.l.bf16 %v2339
      %v2518 = vunpack.c.l.bf16 %v2340
      %v2519 = vunpack.c.h.bf16 %v2340
      %v2520 = vunpack.c.l.bf16 %v2341
      %v2521 = vunpack.c.l.bf16 %v2342
      %v2522 = vunpack.c.h.bf16 %v2342
      %v2523 = vunpack.c.l.bf16 %v2343
      %v2524 = vunpack.c.l.bf16 %v2344
      %v2525 = vunpack.c.h.bf16 %v2344
      %v2526 = vunpack.c.l.bf16 %v2345
      %v2527 = vunpack.c.l.bf16 %v2346
      %v2528 = vunpack.c.h.bf16 %v2346
      %v2529 = vunpack.c.l.bf16 %v2347
      %v2530 = vunpack.c.l.bf16 %v2348
      %v2531 = vunpack.c.h.bf16 %v2348
      %v2532 = vunpack.c.l.bf16 %v2349
      %v2533 = vunpack.c.l.bf16 %v2350
      %v2534 = vunpack.c.h.bf16 %v2350
      %v2535 = vunpack.c.l.bf16 %v2351
      %v2536 = vunpack.c.l.bf16 %v2352
      %v2537 = vunpack.c.h.bf16 %v2352
      %v2538 = vunpack.c.l.bf16 %v2353
      %v2539 = vunpack.c.l.bf16 %v2354
      %v2540 = vunpack.c.h.bf16 %v2354
      %v2541 = vunpack.c.l.bf16 %v2355
      %v2542 = vunpack.c.l.bf16 %v2356
      %v2543 = vunpack.c.h.bf16 %v2356
      %v2544 = vunpack.c.l.bf16 %v2357
      %v2545 = vunpack.c.l.bf16 %v2358
      %v2546 = vunpack.c.h.bf16 %v2358
      %v2547 = vunpack.c.l.bf16 %v2359
      %v2548 = vunpack.c.l.bf16 %v2360
      %v2549 = vunpack.c.h.bf16 %v2360
      %v2550 = vunpack.c.l.bf16 %v2361
      %v2551 = vunpack.c.l.bf16 %v2362
      %v2552 = vunpack.c.h.bf16 %v2362
      %v2553 = vunpack.c.l.bf16 %v2363
      %v2554 = vunpack.c.l.bf16 %v2364
      %v2555 = vunpack.c.h.bf16 %v2364
      %v2556 = vunpack.c.l.bf16 %v2365
      %v2557 = vunpack.c.l.bf16 %v2366
      %v2558 = vunpack.c.h.bf16 %v2366
      %v2559 = vunpack.c.l.bf16 %v2367
      %v2560 = vunpack.c.l.bf16 %v2368
      %v2561 = vunpack.c.h.bf16 %v2368
      %v2562 = vunpack.c.l.bf16 %v2369
      %v2563 = vunpack.c.l.bf16 %v2370
      %v2564 = vunpack.c.h.bf16 %v2370
      %v2565 = vunpack.c.l.bf16 %v2371
      %v2566 = vunpack.c.l.bf16 %v2372
      %v2567 = vunpack.c.h.bf16 %v2372
      %v2568 = vunpack.c.l.bf16 %v2373
      %v2569 = vunpack.c.l.bf16 %v2374
      %v2570 = vunpack.c.h.bf16 %v2374
      %v2571 = vunpack.c.l.bf16 %v2375
      %v2572 = vunpack.c.l.bf16 %v2376
      %v2573 = vunpack.c.h.bf16 %v2376
      %v2574 = vunpack.c.l.bf16 %v2377
      %v2575 = vunpack.c.l.bf16 %v2378
      %v2576 = vunpack.c.h.bf16 %v2378
      %v2577 = vunpack.c.l.bf16 %v2379
      %v2578 = vunpack.c.l.bf16 %v2380
      %v2579 = vunpack.c.h.bf16 %v2380
      %v2580 = vunpack.c.l.bf16 %v2381
      %v2581 = vunpack.c.l.bf16 %v2382
      %v2582 = vunpack.c.h.bf16 %v2382
      %v2583 = vunpack.c.l.bf16 %v2383
      %v2584 = vunpack.c.l.bf16 %v2384
      %v2585 = vunpack.c.h.bf16 %v2384
      %v2586 = vunpack.c.l.bf16 %v2385
      %v2587 = vunpack.c.l.bf16 %v2386
      %v2588 = vunpack.c.h.bf16 %v2386
      %v2589 = vunpack.c.l.bf16 %v2387
      %v2590 = vunpack.c.l.bf16 %v2388
      %v2591 = vunpack.c.h.bf16 %v2388
      %v2592 = vunpack.c.l.bf16 %v2389
      %v2593 = vunpack.c.l.bf16 %v2390
      %v2594 = vunpack.c.h.bf16 %v2390
      %v2595 = vunpack.c.l.bf16 %v2391
      %v2596 = vunpack.c.l.bf16 %v2392
      %v2597 = vunpack.c.h.bf16 %v2392
      %v2598 = vunpack.c.l.bf16 %v2393
      %v2599 = vunpack.c.l.bf16 %v2394
      %v2600 = vunpack.c.h.bf16 %v2394
      %v2601 = vunpack.c.l.bf16 %v2395
      %v2602 = vunpack.c.l.bf16 %v2396
      %v2603 = vunpack.c.h.bf16 %v2396
      %v2604 = vunpack.c.l.bf16 %v2397
      %v2605 = vunpack.c.l.bf16 %v2398
      %v2606 = vunpack.c.h.bf16 %v2398
      %v2607 = vunpack.c.l.bf16 %v2399
      %v2608 = vunpack.c.l.bf16 %v2400
      %v2609 = vunpack.c.h.bf16 %v2400
      %v2610 = vunpack.c.l.bf16 %v2401
      %v2611 = vunpack.c.l.bf16 %v2402
      %v2612 = vunpack.c.h.bf16 %v2402
      %v2613 = vunpack.c.l.bf16 %v2403
      %v2614 = vunpack.c.l.bf16 %v2404
      %v2615 = vunpack.c.h.bf16 %v2404
      %v2616 = vunpack.c.l.bf16 %v2405
      %v2617 = vunpack.c.l.bf16 %v2406
      %v2618 = vunpack.c.h.bf16 %v2406
      %v2619 = vunpack.c.l.bf16 %v2407
      %v2620 = vunpack.c.l.bf16 %v2408
      %v2621 = vunpack.c.h.bf16 %v2408
      %v2622 = vunpack.c.l.bf16 %v2409
      %v2623 = vunpack.c.l.bf16 %v2410
      %v2624 = vunpack.c.h.bf16 %v2410
      %v2625 = vunpack.c.l.bf16 %v2411
      %v2626 = vunpack.c.l.bf16 %v2412
      %v2627 = vunpack.c.h.bf16 %v2412
      %v2628 = vunpack.c.l.bf16 %v2413
      %v2629 = vunpack.c.l.bf16 %v2414
      %v2630 = vunpack.c.h.bf16 %v2414
      %v2631 = vunpack.c.l.bf16 %v2415
      %v2632 = vunpack.c.l.bf16 %v2416
      %v2633 = vunpack.c.h.bf16 %v2416
      %v2634 = vunpack.c.l.bf16 %v2417
      %v2635 = vunpack.c.l.bf16 %v2418
      %v2636 = vunpack.c.h.bf16 %v2418
      %v2637 = vunpack.c.l.bf16 %v2419
      %v2638 = vunpack.c.l.bf16 %v2420
      %v2639 = vunpack.c.h.bf16 %v2420
      %v2640 = vunpack.c.l.bf16 %v2421
      %v2641 = vunpack.c.l.bf16 %v2422
      %v2642 = vunpack.c.h.bf16 %v2422
      %v2643 = vunpack.c.l.bf16 %v2423
      %v2644 = vunpack.c.l.bf16 %v2424
      %v2645 = vunpack.c.h.bf16 %v2424
      %v2646 = vunpack.c.l.bf16 %v2425
      %v2647 = vunpack.c.l.bf16 %v2426
      %v2648 = vunpack.c.h.bf16 %v2426
      %v2649 = vunpack.c.l.bf16 %v2427
      %v2650 = vunpack.c.l.bf16 %v2428
      %v2651 = vunpack.c.h.bf16 %v2428
      %v2652 = vunpack.c.l.bf16 %v2429
      %v2653 = vunpack.c.l.bf16 %v2430
      %v2654 = vunpack.c.h.bf16 %v2430
      %v2655 = vunpack.c.l.bf16 %v2431
      %v2656 = vunpack.c.l.bf16 %v2432
      %v2657 = vunpack.c.h.bf16 %v2432
      %v2658 = vunpack.c.l.bf16 %v2433
      %v2659 = vunpack.c.l.bf16 %v2434
      %v2660 = vunpack.c.h.bf16 %v2434
      %v2661 = vunpack.c.l.bf16 %v2435
      %v2662 = vunpack.c.l.bf16 %v2436
      %v2663 = vunpack.c.h.bf16 %v2436
      %v2664 = vunpack.c.l.bf16 %v2437
      %v2665 = vunpack.c.l.bf16 %v2438
      %v2666 = vunpack.c.h.bf16 %v2438
      %v2667 = vunpack.c.l.bf16 %v2439
      %v2668 = vunpack.c.l.bf16 %v2440
      %v2669 = vunpack.c.h.bf16 %v2440
      %v2670 = vunpack.c.l.bf16 %v2441
      %v2671 = vunpack.c.l.bf16 %v2442
      %v2672 = vunpack.c.h.bf16 %v2442
      %v2673 = vunpack.c.l.bf16 %v2443
      %v2674 = vunpack.c.l.bf16 %v2444
      %v2675 = vunpack.c.h.bf16 %v2444
      %v2676 = vunpack.c.l.bf16 %v2445
      %v2677 = vlaneseq
      %v2678 = vshrl.u32 %v2677, 7
      %v2679 = vsub.s32 0, %v2678
      %v2680 = vrot.slane %v2289, %v2679
      %v2681 = vlaneseq
      %v2682 = vshrl.u32 %v2681, 7
      %v2683 = vsub.s32 0, %v2682
      %v2684 = vrot.slane %v2290, %v2683
      %v2685 = vlaneseq
      %v2686 = vshrl.u32 %v2685, 7
      %v2687 = vsub.s32 0, %v2686
      %v2688 = vrot.slane %v2291, %v2687
      %v2689 = vmul.f32 %v2446, %v2680
      %v2690 = vmul.f32 %v2447, %v2684
      %v2691 = vmul.f32 %v2448, %v2688
      %v2692 = vmul.f32 %v2449, %v2680
      %v2693 = vmul.f32 %v2450, %v2684
      %v2694 = vmul.f32 %v2451, %v2688
      %v2695 = vmul.f32 %v2452, %v2680
      %v2696 = vmul.f32 %v2453, %v2684
      %v2697 = vmul.f32 %v2454, %v2688
      %v2698 = vmul.f32 %v2455, %v2680
      %v2699 = vmul.f32 %v2456, %v2684
      %v2700 = vmul.f32 %v2457, %v2688
      %v2701 = vmul.f32 %v2458, %v2680
      %v2702 = vmul.f32 %v2459, %v2684
      %v2703 = vmul.f32 %v2460, %v2688
      %v2704 = vmul.f32 %v2461, %v2680
      %v2705 = vmul.f32 %v2462, %v2684
      %v2706 = vmul.f32 %v2463, %v2688
      %v2707 = vmul.f32 %v2464, %v2680
      %v2708 = vmul.f32 %v2465, %v2684
      %v2709 = vmul.f32 %v2466, %v2688
      %v2710 = vmul.f32 %v2467, %v2680
      %v2711 = vmul.f32 %v2468, %v2684
      %v2712 = vmul.f32 %v2469, %v2688
      %v2713 = vmul.f32 %v2470, %v2680
      %v2714 = vmul.f32 %v2471, %v2684
      %v2715 = vmul.f32 %v2472, %v2688
      %v2716 = vmul.f32 %v2473, %v2680
      %v2717 = vmul.f32 %v2474, %v2684
      %v2718 = vmul.f32 %v2475, %v2688
      %v2719 = vmul.f32 %v2476, %v2680
      %v2720 = vmul.f32 %v2477, %v2684
      %v2721 = vmul.f32 %v2478, %v2688
      %v2722 = vmul.f32 %v2479, %v2680
      %v2723 = vmul.f32 %v2480, %v2684
      %v2724 = vmul.f32 %v2481, %v2688
      %v2725 = vmul.f32 %v2482, %v2680
      %v2726 = vmul.f32 %v2483, %v2684
      %v2727 = vmul.f32 %v2484, %v2688
      %v2728 = vmul.f32 %v2485, %v2680
      %v2729 = vmul.f32 %v2486, %v2684
      %v2730 = vmul.f32 %v2487, %v2688
      %v2731 = vmul.f32 %v2488, %v2680
      %v2732 = vmul.f32 %v2489, %v2684
      %v2733 = vmul.f32 %v2490, %v2688
      %v2734 = vmul.f32 %v2491, %v2680
      %v2735 = vmul.f32 %v2492, %v2684
      %v2736 = vmul.f32 %v2493, %v2688
      %v2737 = vmul.f32 %v2494, %v2680
      %v2738 = vmul.f32 %v2495, %v2684
      %v2739 = vmul.f32 %v2496, %v2688
      %v2740 = vmul.f32 %v2497, %v2680
      %v2741 = vmul.f32 %v2498, %v2684
      %v2742 = vmul.f32 %v2499, %v2688
      %v2743 = vmul.f32 %v2500, %v2680
      %v2744 = vmul.f32 %v2501, %v2684
      %v2745 = vmul.f32 %v2502, %v2688
      %v2746 = vmul.f32 %v2503, %v2680
      %v2747 = vmul.f32 %v2504, %v2684
      %v2748 = vmul.f32 %v2505, %v2688
      %v2749 = vmul.f32 %v2506, %v2680
      %v2750 = vmul.f32 %v2507, %v2684
      %v2751 = vmul.f32 %v2508, %v2688
      %v2752 = vmul.f32 %v2509, %v2680
      %v2753 = vmul.f32 %v2510, %v2684
      %v2754 = vmul.f32 %v2511, %v2688
      %v2755 = vmul.f32 %v2512, %v2680
      %v2756 = vmul.f32 %v2513, %v2684
      %v2757 = vmul.f32 %v2514, %v2688
      %v2758 = vmul.f32 %v2515, %v2680
      %v2759 = vmul.f32 %v2516, %v2684
      %v2760 = vmul.f32 %v2517, %v2688
      %v2761 = vmul.f32 %v2518, %v2680
      %v2762 = vmul.f32 %v2519, %v2684
      %v2763 = vmul.f32 %v2520, %v2688
      %v2764 = vmul.f32 %v2521, %v2680
      %v2765 = vmul.f32 %v2522, %v2684
      %v2766 = vmul.f32 %v2523, %v2688
      %v2767 = vmul.f32 %v2524, %v2680
      %v2768 = vmul.f32 %v2525, %v2684
      %v2769 = vmul.f32 %v2526, %v2688
      %v2770 = vmul.f32 %v2527, %v2680
      %v2771 = vmul.f32 %v2528, %v2684
      %v2772 = vmul.f32 %v2529, %v2688
      %v2773 = vmul.f32 %v2530, %v2680
      %v2774 = vmul.f32 %v2531, %v2684
      %v2775 = vmul.f32 %v2532, %v2688
      %v2776 = vmul.f32 %v2533, %v2680
      %v2777 = vmul.f32 %v2534, %v2684
      %v2778 = vmul.f32 %v2535, %v2688
      %v2779 = vmul.f32 %v2536, %v2680
      %v2780 = vmul.f32 %v2537, %v2684
      %v2781 = vmul.f32 %v2538, %v2688
      %v2782 = vmul.f32 %v2539, %v2680
      %v2783 = vmul.f32 %v2540, %v2684
      %v2784 = vmul.f32 %v2541, %v2688
      %v2785 = vmul.f32 %v2542, %v2680
      %v2786 = vmul.f32 %v2543, %v2684
      %v2787 = vmul.f32 %v2544, %v2688
      %v2788 = vmul.f32 %v2545, %v2680
      %v2789 = vmul.f32 %v2546, %v2684
      %v2790 = vmul.f32 %v2547, %v2688
      %v2791 = vmul.f32 %v2548, %v2680
      %v2792 = vmul.f32 %v2549, %v2684
      %v2793 = vmul.f32 %v2550, %v2688
      %v2794 = vmul.f32 %v2551, %v2680
      %v2795 = vmul.f32 %v2552, %v2684
      %v2796 = vmul.f32 %v2553, %v2688
      %v2797 = vmul.f32 %v2554, %v2680
      %v2798 = vmul.f32 %v2555, %v2684
      %v2799 = vmul.f32 %v2556, %v2688
      %v2800 = vmul.f32 %v2557, %v2680
      %v2801 = vmul.f32 %v2558, %v2684
      %v2802 = vmul.f32 %v2559, %v2688
      %v2803 = vmul.f32 %v2560, %v2680
      %v2804 = vmul.f32 %v2561, %v2684
      %v2805 = vmul.f32 %v2562, %v2688
      %v2806 = vmul.f32 %v2563, %v2680
      %v2807 = vmul.f32 %v2564, %v2684
      %v2808 = vmul.f32 %v2565, %v2688
      %v2809 = vmul.f32 %v2566, %v2680
      %v2810 = vmul.f32 %v2567, %v2684
      %v2811 = vmul.f32 %v2568, %v2688
      %v2812 = vmul.f32 %v2569, %v2680
      %v2813 = vmul.f32 %v2570, %v2684
      %v2814 = vmul.f32 %v2571, %v2688
      %v2815 = vmul.f32 %v2572, %v2680
      %v2816 = vmul.f32 %v2573, %v2684
      %v2817 = vmul.f32 %v2574, %v2688
      %v2818 = vmul.f32 %v2575, %v2680
      %v2819 = vmul.f32 %v2576, %v2684
      %v2820 = vmul.f32 %v2577, %v2688
      %v2821 = vmul.f32 %v2578, %v2680
      %v2822 = vmul.f32 %v2579, %v2684
      %v2823 = vmul.f32 %v2580, %v2688
      %v2824 = vmul.f32 %v2581, %v2680
      %v2825 = vmul.f32 %v2582, %v2684
      %v2826 = vmul.f32 %v2583, %v2688
      %v2827 = vmul.f32 %v2584, %v2680
      %v2828 = vmul.f32 %v2585, %v2684
      %v2829 = vmul.f32 %v2586, %v2688
      %v2830 = vmul.f32 %v2587, %v2680
      %v2831 = vmul.f32 %v2588, %v2684
      %v2832 = vmul.f32 %v2589, %v2688
      %v2833 = vmul.f32 %v2590, %v2680
      %v2834 = vmul.f32 %v2591, %v2684
      %v2835 = vmul.f32 %v2592, %v2688
      %v2836 = vmul.f32 %v2593, %v2680
      %v2837 = vmul.f32 %v2594, %v2684
      %v2838 = vmul.f32 %v2595, %v2688
      %v2839 = vmul.f32 %v2596, %v2680
      %v2840 = vmul.f32 %v2597, %v2684
      %v2841 = vmul.f32 %v2598, %v2688
      %v2842 = vmul.f32 %v2599, %v2680
      %v2843 = vmul.f32 %v2600, %v2684
      %v2844 = vmul.f32 %v2601, %v2688
      %v2845 = vmul.f32 %v2602, %v2680
      %v2846 = vmul.f32 %v2603, %v2684
      %v2847 = vmul.f32 %v2604, %v2688
      %v2848 = vmul.f32 %v2605, %v2680
      %v2849 = vmul.f32 %v2606, %v2684
      %v2850 = vmul.f32 %v2607, %v2688
      %v2851 = vmul.f32 %v2608, %v2680
      %v2852 = vmul.f32 %v2609, %v2684
      %v2853 = vmul.f32 %v2610, %v2688
      %v2854 = vmul.f32 %v2611, %v2680
      %v2855 = vmul.f32 %v2612, %v2684
      %v2856 = vmul.f32 %v2613, %v2688
      %v2857 = vmul.f32 %v2614, %v2680
      %v2858 = vmul.f32 %v2615, %v2684
      %v2859 = vmul.f32 %v2616, %v2688
      %v2860 = vmul.f32 %v2617, %v2680
      %v2861 = vmul.f32 %v2618, %v2684
      %v2862 = vmul.f32 %v2619, %v2688
      %v2863 = vmul.f32 %v2620, %v2680
      %v2864 = vmul.f32 %v2621, %v2684
      %v2865 = vmul.f32 %v2622, %v2688
      %v2866 = vmul.f32 %v2623, %v2680
      %v2867 = vmul.f32 %v2624, %v2684
      %v2868 = vmul.f32 %v2625, %v2688
      %v2869 = vmul.f32 %v2626, %v2680
      %v2870 = vmul.f32 %v2627, %v2684
      %v2871 = vmul.f32 %v2628, %v2688
      %v2872 = vmul.f32 %v2629, %v2680
      %v2873 = vmul.f32 %v2630, %v2684
      %v2874 = vmul.f32 %v2631, %v2688
      %v2875 = vmul.f32 %v2632, %v2680
      %v2876 = vmul.f32 %v2633, %v2684
      %v2877 = vmul.f32 %v2634, %v2688
      %v2878 = vmul.f32 %v2635, %v2680
      %v2879 = vmul.f32 %v2636, %v2684
      %v2880 = vmul.f32 %v2637, %v2688
      %v2881 = vmul.f32 %v2638, %v2680
      %v2882 = vmul.f32 %v2639, %v2684
      %v2883 = vmul.f32 %v2640, %v2688
      %v2884 = vmul.f32 %v2641, %v2680
      %v2885 = vmul.f32 %v2642, %v2684
      %v2886 = vmul.f32 %v2643, %v2688
      %v2887 = vmul.f32 %v2644, %v2680
      %v2888 = vmul.f32 %v2645, %v2684
      %v2889 = vmul.f32 %v2646, %v2688
      %v2890 = vmul.f32 %v2647, %v2680
      %v2891 = vmul.f32 %v2648, %v2684
      %v2892 = vmul.f32 %v2649, %v2688
      %v2893 = vmul.f32 %v2650, %v2680
      %v2894 = vmul.f32 %v2651, %v2684
      %v2895 = vmul.f32 %v2652, %v2688
      %v2896 = vmul.f32 %v2653, %v2680
      %v2897 = vmul.f32 %v2654, %v2684
      %v2898 = vmul.f32 %v2655, %v2688
      %v2899 = vmul.f32 %v2656, %v2680
      %v2900 = vmul.f32 %v2657, %v2684
      %v2901 = vmul.f32 %v2658, %v2688
      %v2902 = vmul.f32 %v2659, %v2680
      %v2903 = vmul.f32 %v2660, %v2684
      %v2904 = vmul.f32 %v2661, %v2688
      %v2905 = vmul.f32 %v2662, %v2680
      %v2906 = vmul.f32 %v2663, %v2684
      %v2907 = vmul.f32 %v2664, %v2688
      %v2908 = vmul.f32 %v2665, %v2680
      %v2909 = vmul.f32 %v2666, %v2684
      %v2910 = vmul.f32 %v2667, %v2688
      %v2911 = vmul.f32 %v2668, %v2680
      %v2912 = vmul.f32 %v2669, %v2684
      %v2913 = vmul.f32 %v2670, %v2688
      %v2914 = vmul.f32 %v2671, %v2680
      %v2915 = vmul.f32 %v2672, %v2684
      %v2916 = vmul.f32 %v2673, %v2688
      %v2917 = vmul.f32 %v2674, %v2680
      %v2918 = vmul.f32 %v2675, %v2684
      %v2919 = vmul.f32 %v2676, %v2688
      %v2920 = vadd.f32 %v2689, %v2690
      %vm2921 = vcmask 433152
      %v2922 = vsel %vm2921, %v2691, 0.0
      %v2923 = vadd.f32 %v2920, %v2922
      %2924 = vadd.xlane.f32.xlu0 %v2923
      %v2925 = vpop.xlane.xlu0 %2924
      %v2926 = vadd.f32 %v2692, %v2693
      %v2927 = vsel %vm2921, %v2694, 0.0
      %v2928 = vadd.f32 %v2926, %v2927
      %2929 = vadd.xlane.f32.xlu0 %v2928
      %v2930 = vpop.xlane.xlu0 %2929
      %v2931 = vadd.f32 %v2695, %v2696
      %v2932 = vsel %vm2921, %v2697, 0.0
      %v2933 = vadd.f32 %v2931, %v2932
      %2934 = vadd.xlane.f32.xlu0 %v2933
      %v2935 = vpop.xlane.xlu0 %2934
      %v2936 = vadd.f32 %v2698, %v2699
      %v2937 = vsel %vm2921, %v2700, 0.0
      %v2938 = vadd.f32 %v2936, %v2937
      %2939 = vadd.xlane.f32.xlu0 %v2938
      %v2940 = vpop.xlane.xlu0 %2939
      %v2941 = vadd.f32 %v2701, %v2702
      %v2942 = vsel %vm2921, %v2703, 0.0
      %v2943 = vadd.f32 %v2941, %v2942
      %2944 = vadd.xlane.f32.xlu0 %v2943
      %v2945 = vpop.xlane.xlu0 %2944
      %v2946 = vadd.f32 %v2704, %v2705
      %v2947 = vsel %vm2921, %v2706, 0.0
      %v2948 = vadd.f32 %v2946, %v2947
      %2949 = vadd.xlane.f32.xlu0 %v2948
      %v2950 = vpop.xlane.xlu0 %2949
      %v2951 = vadd.f32 %v2707, %v2708
      %v2952 = vsel %vm2921, %v2709, 0.0
      %v2953 = vadd.f32 %v2951, %v2952
      %2954 = vadd.xlane.f32.xlu0 %v2953
      %v2955 = vpop.xlane.xlu0 %2954
      %v2956 = vadd.f32 %v2710, %v2711
      %v2957 = vsel %vm2921, %v2712, 0.0
      %v2958 = vadd.f32 %v2956, %v2957
      %2959 = vadd.xlane.f32.xlu0 %v2958
      %v2960 = vpop.xlane.xlu0 %2959
      %v2961 = vadd.f32 %v2713, %v2714
      %v2962 = vsel %vm2921, %v2715, 0.0
      %v2963 = vadd.f32 %v2961, %v2962
      %2964 = vadd.xlane.f32.xlu0 %v2963
      %v2965 = vpop.xlane.xlu0 %2964
      %v2966 = vadd.f32 %v2716, %v2717
      %v2967 = vsel %vm2921, %v2718, 0.0
      %v2968 = vadd.f32 %v2966, %v2967
      %2969 = vadd.xlane.f32.xlu0 %v2968
      %v2970 = vpop.xlane.xlu0 %2969
      %v2971 = vadd.f32 %v2719, %v2720
      %v2972 = vsel %vm2921, %v2721, 0.0
      %v2973 = vadd.f32 %v2971, %v2972
      %2974 = vadd.xlane.f32.xlu0 %v2973
      %v2975 = vpop.xlane.xlu0 %2974
      %v2976 = vadd.f32 %v2722, %v2723
      %v2977 = vsel %vm2921, %v2724, 0.0
      %v2978 = vadd.f32 %v2976, %v2977
      %2979 = vadd.xlane.f32.xlu0 %v2978
      %v2980 = vpop.xlane.xlu0 %2979
      %v2981 = vadd.f32 %v2725, %v2726
      %v2982 = vsel %vm2921, %v2727, 0.0
      %v2983 = vadd.f32 %v2981, %v2982
      %2984 = vadd.xlane.f32.xlu0 %v2983
      %v2985 = vpop.xlane.xlu0 %2984
      %v2986 = vadd.f32 %v2728, %v2729
      %v2987 = vsel %vm2921, %v2730, 0.0
      %v2988 = vadd.f32 %v2986, %v2987
      %2989 = vadd.xlane.f32.xlu0 %v2988
      %v2990 = vpop.xlane.xlu0 %2989
      %v2991 = vadd.f32 %v2731, %v2732
      %v2992 = vsel %vm2921, %v2733, 0.0
      %v2993 = vadd.f32 %v2991, %v2992
      %2994 = vadd.xlane.f32.xlu0 %v2993
      %v2995 = vpop.xlane.xlu0 %2994
      %v2996 = vadd.f32 %v2734, %v2735
      %v2997 = vsel %vm2921, %v2736, 0.0
      %v2998 = vadd.f32 %v2996, %v2997
      %2999 = vadd.xlane.f32.xlu0 %v2998
      %v3000 = vpop.xlane.xlu0 %2999
      %v3001 = vadd.f32 %v2737, %v2738
      %v3002 = vsel %vm2921, %v2739, 0.0
      %v3003 = vadd.f32 %v3001, %v3002
      %3004 = vadd.xlane.f32.xlu0 %v3003
      %v3005 = vpop.xlane.xlu0 %3004
      %v3006 = vadd.f32 %v2740, %v2741
      %v3007 = vsel %vm2921, %v2742, 0.0
      %v3008 = vadd.f32 %v3006, %v3007
      %3009 = vadd.xlane.f32.xlu0 %v3008
      %v3010 = vpop.xlane.xlu0 %3009
      %v3011 = vadd.f32 %v2743, %v2744
      %v3012 = vsel %vm2921, %v2745, 0.0
      %v3013 = vadd.f32 %v3011, %v3012
      %3014 = vadd.xlane.f32.xlu0 %v3013
      %v3015 = vpop.xlane.xlu0 %3014
      %v3016 = vadd.f32 %v2746, %v2747
      %v3017 = vsel %vm2921, %v2748, 0.0
      %v3018 = vadd.f32 %v3016, %v3017
      %3019 = vadd.xlane.f32.xlu0 %v3018
      %v3020 = vpop.xlane.xlu0 %3019
      %v3021 = vadd.f32 %v2749, %v2750
      %v3022 = vsel %vm2921, %v2751, 0.0
      %v3023 = vadd.f32 %v3021, %v3022
      %3024 = vadd.xlane.f32.xlu0 %v3023
      %v3025 = vpop.xlane.xlu0 %3024
      %v3026 = vadd.f32 %v2752, %v2753
      %v3027 = vsel %vm2921, %v2754, 0.0
      %v3028 = vadd.f32 %v3026, %v3027
      %3029 = vadd.xlane.f32.xlu0 %v3028
      %v3030 = vpop.xlane.xlu0 %3029
      %v3031 = vadd.f32 %v2755, %v2756
      %v3032 = vsel %vm2921, %v2757, 0.0
      %v3033 = vadd.f32 %v3031, %v3032
      %3034 = vadd.xlane.f32.xlu0 %v3033
      %v3035 = vpop.xlane.xlu0 %3034
      %v3036 = vadd.f32 %v2758, %v2759
      %v3037 = vsel %vm2921, %v2760, 0.0
      %v3038 = vadd.f32 %v3036, %v3037
      %3039 = vadd.xlane.f32.xlu0 %v3038
      %v3040 = vpop.xlane.xlu0 %3039
      %v3041 = vadd.f32 %v2761, %v2762
      %v3042 = vsel %vm2921, %v2763, 0.0
      %v3043 = vadd.f32 %v3041, %v3042
      %3044 = vadd.xlane.f32.xlu0 %v3043
      %v3045 = vpop.xlane.xlu0 %3044
      %v3046 = vadd.f32 %v2764, %v2765
      %v3047 = vsel %vm2921, %v2766, 0.0
      %v3048 = vadd.f32 %v3046, %v3047
      %3049 = vadd.xlane.f32.xlu0 %v3048
      %v3050 = vpop.xlane.xlu0 %3049
      %v3051 = vadd.f32 %v2767, %v2768
      %v3052 = vsel %vm2921, %v2769, 0.0
      %v3053 = vadd.f32 %v3051, %v3052
      %3054 = vadd.xlane.f32.xlu0 %v3053
      %v3055 = vpop.xlane.xlu0 %3054
      %v3056 = vadd.f32 %v2770, %v2771
      %v3057 = vsel %vm2921, %v2772, 0.0
      %v3058 = vadd.f32 %v3056, %v3057
      %3059 = vadd.xlane.f32.xlu0 %v3058
      %v3060 = vpop.xlane.xlu0 %3059
      %v3061 = vadd.f32 %v2773, %v2774
      %v3062 = vsel %vm2921, %v2775, 0.0
      %v3063 = vadd.f32 %v3061, %v3062
      %3064 = vadd.xlane.f32.xlu0 %v3063
      %v3065 = vpop.xlane.xlu0 %3064
      %v3066 = vadd.f32 %v2776, %v2777
      %v3067 = vsel %vm2921, %v2778, 0.0
      %v3068 = vadd.f32 %v3066, %v3067
      %3069 = vadd.xlane.f32.xlu0 %v3068
      %v3070 = vpop.xlane.xlu0 %3069
      %v3071 = vadd.f32 %v2779, %v2780
      %v3072 = vsel %vm2921, %v2781, 0.0
      %v3073 = vadd.f32 %v3071, %v3072
      %3074 = vadd.xlane.f32.xlu0 %v3073
      %v3075 = vpop.xlane.xlu0 %3074
      %v3076 = vadd.f32 %v2782, %v2783
      %v3077 = vsel %vm2921, %v2784, 0.0
      %v3078 = vadd.f32 %v3076, %v3077
      %3079 = vadd.xlane.f32.xlu0 %v3078
      %v3080 = vpop.xlane.xlu0 %3079
      %v3081 = vadd.f32 %v2785, %v2786
      %v3082 = vsel %vm2921, %v2787, 0.0
      %v3083 = vadd.f32 %v3081, %v3082
      %3084 = vadd.xlane.f32.xlu0 %v3083
      %v3085 = vpop.xlane.xlu0 %3084
      %v3086 = vadd.f32 %v2788, %v2789
      %v3087 = vsel %vm2921, %v2790, 0.0
      %v3088 = vadd.f32 %v3086, %v3087
      %3089 = vadd.xlane.f32.xlu0 %v3088
      %v3090 = vpop.xlane.xlu0 %3089
      %v3091 = vadd.f32 %v2791, %v2792
      %v3092 = vsel %vm2921, %v2793, 0.0
      %v3093 = vadd.f32 %v3091, %v3092
      %3094 = vadd.xlane.f32.xlu0 %v3093
      %v3095 = vpop.xlane.xlu0 %3094
      %v3096 = vadd.f32 %v2794, %v2795
      %v3097 = vsel %vm2921, %v2796, 0.0
      %v3098 = vadd.f32 %v3096, %v3097
      %3099 = vadd.xlane.f32.xlu0 %v3098
      %v3100 = vpop.xlane.xlu0 %3099
      %v3101 = vadd.f32 %v2797, %v2798
      %v3102 = vsel %vm2921, %v2799, 0.0
      %v3103 = vadd.f32 %v3101, %v3102
      %3104 = vadd.xlane.f32.xlu0 %v3103
      %v3105 = vpop.xlane.xlu0 %3104
      %v3106 = vadd.f32 %v2800, %v2801
      %v3107 = vsel %vm2921, %v2802, 0.0
      %v3108 = vadd.f32 %v3106, %v3107
      %3109 = vadd.xlane.f32.xlu0 %v3108
      %v3110 = vpop.xlane.xlu0 %3109
      %v3111 = vadd.f32 %v2803, %v2804
      %v3112 = vsel %vm2921, %v2805, 0.0
      %v3113 = vadd.f32 %v3111, %v3112
      %3114 = vadd.xlane.f32.xlu0 %v3113
      %v3115 = vpop.xlane.xlu0 %3114
      %v3116 = vadd.f32 %v2806, %v2807
      %v3117 = vsel %vm2921, %v2808, 0.0
      %v3118 = vadd.f32 %v3116, %v3117
      %3119 = vadd.xlane.f32.xlu0 %v3118
      %v3120 = vpop.xlane.xlu0 %3119
      %v3121 = vadd.f32 %v2809, %v2810
      %v3122 = vsel %vm2921, %v2811, 0.0
      %v3123 = vadd.f32 %v3121, %v3122
      %3124 = vadd.xlane.f32.xlu0 %v3123
      %v3125 = vpop.xlane.xlu0 %3124
      %v3126 = vadd.f32 %v2812, %v2813
      %v3127 = vsel %vm2921, %v2814, 0.0
      %v3128 = vadd.f32 %v3126, %v3127
      %3129 = vadd.xlane.f32.xlu0 %v3128
      %v3130 = vpop.xlane.xlu0 %3129
      %v3131 = vadd.f32 %v2815, %v2816
      %v3132 = vsel %vm2921, %v2817, 0.0
      %v3133 = vadd.f32 %v3131, %v3132
      %3134 = vadd.xlane.f32.xlu0 %v3133
      %v3135 = vpop.xlane.xlu0 %3134
      %v3136 = vadd.f32 %v2818, %v2819
      %v3137 = vsel %vm2921, %v2820, 0.0
      %v3138 = vadd.f32 %v3136, %v3137
      %3139 = vadd.xlane.f32.xlu0 %v3138
      %v3140 = vpop.xlane.xlu0 %3139
      %v3141 = vadd.f32 %v2821, %v2822
      %v3142 = vsel %vm2921, %v2823, 0.0
      %v3143 = vadd.f32 %v3141, %v3142
      %3144 = vadd.xlane.f32.xlu0 %v3143
      %v3145 = vpop.xlane.xlu0 %3144
      %v3146 = vadd.f32 %v2824, %v2825
      %v3147 = vsel %vm2921, %v2826, 0.0
      %v3148 = vadd.f32 %v3146, %v3147
      %3149 = vadd.xlane.f32.xlu0 %v3148
      %v3150 = vpop.xlane.xlu0 %3149
      %v3151 = vadd.f32 %v2827, %v2828
      %v3152 = vsel %vm2921, %v2829, 0.0
      %v3153 = vadd.f32 %v3151, %v3152
      %3154 = vadd.xlane.f32.xlu0 %v3153
      %v3155 = vpop.xlane.xlu0 %3154
      %v3156 = vadd.f32 %v2830, %v2831
      %v3157 = vsel %vm2921, %v2832, 0.0
      %v3158 = vadd.f32 %v3156, %v3157
      %3159 = vadd.xlane.f32.xlu0 %v3158
      %v3160 = vpop.xlane.xlu0 %3159
      %v3161 = vadd.f32 %v2833, %v2834
      %v3162 = vsel %vm2921, %v2835, 0.0
      %v3163 = vadd.f32 %v3161, %v3162
      %3164 = vadd.xlane.f32.xlu0 %v3163
      %v3165 = vpop.xlane.xlu0 %3164
      %v3166 = vadd.f32 %v2836, %v2837
      %v3167 = vsel %vm2921, %v2838, 0.0
      %v3168 = vadd.f32 %v3166, %v3167
      %3169 = vadd.xlane.f32.xlu0 %v3168
      %v3170 = vpop.xlane.xlu0 %3169
      %v3171 = vadd.f32 %v2839, %v2840
      %v3172 = vsel %vm2921, %v2841, 0.0
      %v3173 = vadd.f32 %v3171, %v3172
      %3174 = vadd.xlane.f32.xlu0 %v3173
      %v3175 = vpop.xlane.xlu0 %3174
      %v3176 = vadd.f32 %v2842, %v2843
      %v3177 = vsel %vm2921, %v2844, 0.0
      %v3178 = vadd.f32 %v3176, %v3177
      %3179 = vadd.xlane.f32.xlu0 %v3178
      %v3180 = vpop.xlane.xlu0 %3179
      %v3181 = vadd.f32 %v2845, %v2846
      %v3182 = vsel %vm2921, %v2847, 0.0
      %v3183 = vadd.f32 %v3181, %v3182
      %3184 = vadd.xlane.f32.xlu0 %v3183
      %v3185 = vpop.xlane.xlu0 %3184
      %v3186 = vadd.f32 %v2848, %v2849
      %v3187 = vsel %vm2921, %v2850, 0.0
      %v3188 = vadd.f32 %v3186, %v3187
      %3189 = vadd.xlane.f32.xlu0 %v3188
      %v3190 = vpop.xlane.xlu0 %3189
      %v3191 = vadd.f32 %v2851, %v2852
      %v3192 = vsel %vm2921, %v2853, 0.0
      %v3193 = vadd.f32 %v3191, %v3192
      %3194 = vadd.xlane.f32.xlu0 %v3193
      %v3195 = vpop.xlane.xlu0 %3194
      %v3196 = vadd.f32 %v2854, %v2855
      %v3197 = vsel %vm2921, %v2856, 0.0
      %v3198 = vadd.f32 %v3196, %v3197
      %3199 = vadd.xlane.f32.xlu0 %v3198
      %v3200 = vpop.xlane.xlu0 %3199
      %v3201 = vadd.f32 %v2857, %v2858
      %v3202 = vsel %vm2921, %v2859, 0.0
      %v3203 = vadd.f32 %v3201, %v3202
      %3204 = vadd.xlane.f32.xlu0 %v3203
      %v3205 = vpop.xlane.xlu0 %3204
      %v3206 = vadd.f32 %v2860, %v2861
      %v3207 = vsel %vm2921, %v2862, 0.0
      %v3208 = vadd.f32 %v3206, %v3207
      %3209 = vadd.xlane.f32.xlu0 %v3208
      %v3210 = vpop.xlane.xlu0 %3209
      %v3211 = vadd.f32 %v2863, %v2864
      %v3212 = vsel %vm2921, %v2865, 0.0
      %v3213 = vadd.f32 %v3211, %v3212
      %3214 = vadd.xlane.f32.xlu0 %v3213
      %v3215 = vpop.xlane.xlu0 %3214
      %v3216 = vadd.f32 %v2866, %v2867
      %v3217 = vsel %vm2921, %v2868, 0.0
      %v3218 = vadd.f32 %v3216, %v3217
      %3219 = vadd.xlane.f32.xlu0 %v3218
      %v3220 = vpop.xlane.xlu0 %3219
      %v3221 = vadd.f32 %v2869, %v2870
      %v3222 = vsel %vm2921, %v2871, 0.0
      %v3223 = vadd.f32 %v3221, %v3222
      %3224 = vadd.xlane.f32.xlu0 %v3223
      %v3225 = vpop.xlane.xlu0 %3224
      %v3226 = vadd.f32 %v2872, %v2873
      %v3227 = vsel %vm2921, %v2874, 0.0
      %v3228 = vadd.f32 %v3226, %v3227
      %3229 = vadd.xlane.f32.xlu0 %v3228
      %v3230 = vpop.xlane.xlu0 %3229
      %v3231 = vadd.f32 %v2875, %v2876
      %v3232 = vsel %vm2921, %v2877, 0.0
      %v3233 = vadd.f32 %v3231, %v3232
      %3234 = vadd.xlane.f32.xlu0 %v3233
      %v3235 = vpop.xlane.xlu0 %3234
      %v3236 = vadd.f32 %v2878, %v2879
      %v3237 = vsel %vm2921, %v2880, 0.0
      %v3238 = vadd.f32 %v3236, %v3237
      %3239 = vadd.xlane.f32.xlu0 %v3238
      %v3240 = vpop.xlane.xlu0 %3239
      %v3241 = vadd.f32 %v2881, %v2882
      %v3242 = vsel %vm2921, %v2883, 0.0
      %v3243 = vadd.f32 %v3241, %v3242
      %3244 = vadd.xlane.f32.xlu0 %v3243
      %v3245 = vpop.xlane.xlu0 %3244
      %v3246 = vadd.f32 %v2884, %v2885
      %v3247 = vsel %vm2921, %v2886, 0.0
      %v3248 = vadd.f32 %v3246, %v3247
      %3249 = vadd.xlane.f32.xlu0 %v3248
      %v3250 = vpop.xlane.xlu0 %3249
      %v3251 = vadd.f32 %v2887, %v2888
      %v3252 = vsel %vm2921, %v2889, 0.0
      %v3253 = vadd.f32 %v3251, %v3252
      %3254 = vadd.xlane.f32.xlu0 %v3253
      %v3255 = vpop.xlane.xlu0 %3254
      %v3256 = vadd.f32 %v2890, %v2891
      %v3257 = vsel %vm2921, %v2892, 0.0
      %v3258 = vadd.f32 %v3256, %v3257
      %3259 = vadd.xlane.f32.xlu0 %v3258
      %v3260 = vpop.xlane.xlu0 %3259
      %v3261 = vadd.f32 %v2893, %v2894
      %v3262 = vsel %vm2921, %v2895, 0.0
      %v3263 = vadd.f32 %v3261, %v3262
      %3264 = vadd.xlane.f32.xlu0 %v3263
      %v3265 = vpop.xlane.xlu0 %3264
      %v3266 = vadd.f32 %v2896, %v2897
      %v3267 = vsel %vm2921, %v2898, 0.0
      %v3268 = vadd.f32 %v3266, %v3267
      %3269 = vadd.xlane.f32.xlu0 %v3268
      %v3270 = vpop.xlane.xlu0 %3269
      %v3271 = vadd.f32 %v2899, %v2900
      %v3272 = vsel %vm2921, %v2901, 0.0
      %v3273 = vadd.f32 %v3271, %v3272
      %3274 = vadd.xlane.f32.xlu0 %v3273
      %v3275 = vpop.xlane.xlu0 %3274
      %v3276 = vadd.f32 %v2902, %v2903
      %v3277 = vsel %vm2921, %v2904, 0.0
      %v3278 = vadd.f32 %v3276, %v3277
      %3279 = vadd.xlane.f32.xlu0 %v3278
      %v3280 = vpop.xlane.xlu0 %3279
      %v3281 = vadd.f32 %v2905, %v2906
      %v3282 = vsel %vm2921, %v2907, 0.0
      %v3283 = vadd.f32 %v3281, %v3282
      %3284 = vadd.xlane.f32.xlu0 %v3283
      %v3285 = vpop.xlane.xlu0 %3284
      %v3286 = vadd.f32 %v2908, %v2909
      %v3287 = vsel %vm2921, %v2910, 0.0
      %v3288 = vadd.f32 %v3286, %v3287
      %3289 = vadd.xlane.f32.xlu0 %v3288
      %v3290 = vpop.xlane.xlu0 %3289
      %v3291 = vadd.f32 %v2911, %v2912
      %v3292 = vsel %vm2921, %v2913, 0.0
      %v3293 = vadd.f32 %v3291, %v3292
      %3294 = vadd.xlane.f32.xlu0 %v3293
      %v3295 = vpop.xlane.xlu0 %3294
      %v3296 = vadd.f32 %v2914, %v2915
      %v3297 = vsel %vm2921, %v2916, 0.0
      %v3298 = vadd.f32 %v3296, %v3297
      %3299 = vadd.xlane.f32.xlu0 %v3298
      %v3300 = vpop.xlane.xlu0 %3299
      %v3301 = vadd.f32 %v2917, %v2918
      %v3302 = vsel %vm2921, %v2919, 0.0
      %v3303 = vadd.f32 %v3301, %v3302
      %3304 = vadd.xlane.f32.xlu0 %v3303
      %v3305 = vpop.xlane.xlu0 %3304
      %v3306 = vxor.u32 %v2925, 2147483648
      %v3307 = vxor.u32 %v2930, 2147483648
      %v3308 = vxor.u32 %v2935, 2147483648
      %v3309 = vxor.u32 %v2940, 2147483648
      %v3310 = vxor.u32 %v2945, 2147483648
      %v3311 = vxor.u32 %v2950, 2147483648
      %v3312 = vxor.u32 %v2955, 2147483648
      %v3313 = vxor.u32 %v2960, 2147483648
      %v3314 = vxor.u32 %v2965, 2147483648
      %v3315 = vxor.u32 %v2970, 2147483648
      %v3316 = vxor.u32 %v2975, 2147483648
      %v3317 = vxor.u32 %v2980, 2147483648
      %v3318 = vxor.u32 %v2985, 2147483648
      %v3319 = vxor.u32 %v2990, 2147483648
      %v3320 = vxor.u32 %v2995, 2147483648
      %v3321 = vxor.u32 %v3000, 2147483648
      %v3322 = vxor.u32 %v3005, 2147483648
      %v3323 = vxor.u32 %v3010, 2147483648
      %v3324 = vxor.u32 %v3015, 2147483648
      %v3325 = vxor.u32 %v3020, 2147483648
      %v3326 = vxor.u32 %v3025, 2147483648
      %v3327 = vxor.u32 %v3030, 2147483648
      %v3328 = vxor.u32 %v3035, 2147483648
      %v3329 = vxor.u32 %v3040, 2147483648
      %v3330 = vxor.u32 %v3045, 2147483648
      %v3331 = vxor.u32 %v3050, 2147483648
      %v3332 = vxor.u32 %v3055, 2147483648
      %v3333 = vxor.u32 %v3060, 2147483648
      %v3334 = vxor.u32 %v3065, 2147483648
      %v3335 = vxor.u32 %v3070, 2147483648
      %v3336 = vxor.u32 %v3075, 2147483648
      %v3337 = vxor.u32 %v3080, 2147483648
      %v3338 = vxor.u32 %v3085, 2147483648
      %v3339 = vxor.u32 %v3090, 2147483648
      %v3340 = vxor.u32 %v3095, 2147483648
      %v3341 = vxor.u32 %v3100, 2147483648
      %v3342 = vxor.u32 %v3105, 2147483648
      %v3343 = vxor.u32 %v3110, 2147483648
      %v3344 = vxor.u32 %v3115, 2147483648
      %v3345 = vxor.u32 %v3120, 2147483648
      %v3346 = vxor.u32 %v3125, 2147483648
      %v3347 = vxor.u32 %v3130, 2147483648
      %v3348 = vxor.u32 %v3135, 2147483648
      %v3349 = vxor.u32 %v3140, 2147483648
      %v3350 = vxor.u32 %v3145, 2147483648
      %v3351 = vxor.u32 %v3150, 2147483648
      %v3352 = vxor.u32 %v3155, 2147483648
      %v3353 = vxor.u32 %v3160, 2147483648
      %v3354 = vxor.u32 %v3165, 2147483648
      %v3355 = vxor.u32 %v3170, 2147483648
      %v3356 = vxor.u32 %v3175, 2147483648
      %v3357 = vxor.u32 %v3180, 2147483648
      %v3358 = vxor.u32 %v3185, 2147483648
      %v3359 = vxor.u32 %v3190, 2147483648
      %v3360 = vxor.u32 %v3195, 2147483648
      %v3361 = vxor.u32 %v3200, 2147483648
      %v3362 = vxor.u32 %v3205, 2147483648
      %v3363 = vxor.u32 %v3210, 2147483648
      %v3364 = vxor.u32 %v3215, 2147483648
      %v3365 = vxor.u32 %v3220, 2147483648
      %v3366 = vxor.u32 %v3225, 2147483648
      %v3367 = vxor.u32 %v3230, 2147483648
      %v3368 = vxor.u32 %v3235, 2147483648
      %v3369 = vxor.u32 %v3240, 2147483648
      %v3370 = vxor.u32 %v3245, 2147483648
      %v3371 = vxor.u32 %v3250, 2147483648
      %v3372 = vxor.u32 %v3255, 2147483648
      %v3373 = vxor.u32 %v3260, 2147483648
      %v3374 = vxor.u32 %v3265, 2147483648
      %v3375 = vxor.u32 %v3270, 2147483648
      %v3376 = vxor.u32 %v3275, 2147483648
      %v3377 = vxor.u32 %v3280, 2147483648
      %v3378 = vxor.u32 %v3285, 2147483648
      %v3379 = vxor.u32 %v3290, 2147483648
      %v3380 = vxor.u32 %v3295, 2147483648
      %v3381 = vxor.u32 %v3300, 2147483648
      %v3382 = vxor.u32 %v3305, 2147483648
      %v3383 = vmul.f32 %v3306, 1.442695
      %v3384 = vpow.pop %v3383
      %v3385 = vmul.f32 %v3307, 1.442695
      %v3386 = vpow.pop %v3385
      %v3387 = vmul.f32 %v3308, 1.442695
      %v3388 = vpow.pop %v3387
      %v3389 = vmul.f32 %v3309, 1.442695
      %v3390 = vpow.pop %v3389
      %v3391 = vmul.f32 %v3310, 1.442695
      %v3392 = vpow.pop %v3391
      %v3393 = vmul.f32 %v3311, 1.442695
      %v3394 = vpow.pop %v3393
      %v3395 = vmul.f32 %v3312, 1.442695
      %v3396 = vpow.pop %v3395
      %v3397 = vmul.f32 %v3313, 1.442695
      %v3398 = vpow.pop %v3397
      %v3399 = vmul.f32 %v3314, 1.442695
      %v3400 = vpow.pop %v3399
      %v3401 = vmul.f32 %v3315, 1.442695
      %v3402 = vpow.pop %v3401
      %v3403 = vmul.f32 %v3316, 1.442695
      %v3404 = vpow.pop %v3403
      %v3405 = vmul.f32 %v3317, 1.442695
      %v3406 = vpow.pop %v3405
      %v3407 = vmul.f32 %v3318, 1.442695
      %v3408 = vpow.pop %v3407
      %v3409 = vmul.f32 %v3319, 1.442695
      %v3410 = vpow.pop %v3409
      %v3411 = vmul.f32 %v3320, 1.442695
      %v3412 = vpow.pop %v3411
      %v3413 = vmul.f32 %v3321, 1.442695
      %v3414 = vpow.pop %v3413
      %v3415 = vmul.f32 %v3322, 1.442695
      %v3416 = vpow.pop %v3415
      %v3417 = vmul.f32 %v3323, 1.442695
      %v3418 = vpow.pop %v3417
      %v3419 = vmul.f32 %v3324, 1.442695
      %v3420 = vpow.pop %v3419
      %v3421 = vmul.f32 %v3325, 1.442695
      %v3422 = vpow.pop %v3421
      %v3423 = vmul.f32 %v3326, 1.442695
      %v3424 = vpow.pop %v3423
      %v3425 = vmul.f32 %v3327, 1.442695
      %v3426 = vpow.pop %v3425
      %v3427 = vmul.f32 %v3328, 1.442695
      %v3428 = vpow.pop %v3427
      %v3429 = vmul.f32 %v3329, 1.442695
      %v3430 = vpow.pop %v3429
      %v3431 = vmul.f32 %v3330, 1.442695
      %v3432 = vpow.pop %v3431
      %v3433 = vmul.f32 %v3331, 1.442695
      %v3434 = vpow.pop %v3433
      %v3435 = vmul.f32 %v3332, 1.442695
      %v3436 = vpow.pop %v3435
      %v3437 = vmul.f32 %v3333, 1.442695
      %v3438 = vpow.pop %v3437
      %v3439 = vmul.f32 %v3334, 1.442695
      %v3440 = vpow.pop %v3439
      %v3441 = vmul.f32 %v3335, 1.442695
      %v3442 = vpow.pop %v3441
      %v3443 = vmul.f32 %v3336, 1.442695
      %v3444 = vpow.pop %v3443
      %v3445 = vmul.f32 %v3337, 1.442695
      %v3446 = vpow.pop %v3445
      %v3447 = vmul.f32 %v3338, 1.442695
      %v3448 = vpow.pop %v3447
      %v3449 = vmul.f32 %v3339, 1.442695
      %v3450 = vpow.pop %v3449
      %v3451 = vmul.f32 %v3340, 1.442695
      %v3452 = vpow.pop %v3451
      %v3453 = vmul.f32 %v3341, 1.442695
      %v3454 = vpow.pop %v3453
      %v3455 = vmul.f32 %v3342, 1.442695
      %v3456 = vpow.pop %v3455
      %v3457 = vmul.f32 %v3343, 1.442695
      %v3458 = vpow.pop %v3457
      %v3459 = vmul.f32 %v3344, 1.442695
      %v3460 = vpow.pop %v3459
      %v3461 = vmul.f32 %v3345, 1.442695
      %v3462 = vpow.pop %v3461
      %v3463 = vmul.f32 %v3346, 1.442695
      %v3464 = vpow.pop %v3463
      %v3465 = vmul.f32 %v3347, 1.442695
      %v3466 = vpow.pop %v3465
      %v3467 = vmul.f32 %v3348, 1.442695
      %v3468 = vpow.pop %v3467
      %v3469 = vmul.f32 %v3349, 1.442695
      %v3470 = vpow.pop %v3469
      %v3471 = vmul.f32 %v3350, 1.442695
      %v3472 = vpow.pop %v3471
      %v3473 = vmul.f32 %v3351, 1.442695
      %v3474 = vpow.pop %v3473
      %v3475 = vmul.f32 %v3352, 1.442695
      %v3476 = vpow.pop %v3475
      %v3477 = vmul.f32 %v3353, 1.442695
      %v3478 = vpow.pop %v3477
      %v3479 = vmul.f32 %v3354, 1.442695
      %v3480 = vpow.pop %v3479
      %v3481 = vmul.f32 %v3355, 1.442695
      %v3482 = vpow.pop %v3481
      %v3483 = vmul.f32 %v3356, 1.442695
      %v3484 = vpow.pop %v3483
      %v3485 = vmul.f32 %v3357, 1.442695
      %v3486 = vpow.pop %v3485
      %v3487 = vmul.f32 %v3358, 1.442695
      %v3488 = vpow.pop %v3487
      %v3489 = vmul.f32 %v3359, 1.442695
      %v3490 = vpow.pop %v3489
      %v3491 = vmul.f32 %v3360, 1.442695
      %v3492 = vpow.pop %v3491
      %v3493 = vmul.f32 %v3361, 1.442695
      %v3494 = vpow.pop %v3493
      %v3495 = vmul.f32 %v3362, 1.442695
      %v3496 = vpow.pop %v3495
      %v3497 = vmul.f32 %v3363, 1.442695
      %v3498 = vpow.pop %v3497
      %v3499 = vmul.f32 %v3364, 1.442695
      %v3500 = vpow.pop %v3499
      %v3501 = vmul.f32 %v3365, 1.442695
      %v3502 = vpow.pop %v3501
      %v3503 = vmul.f32 %v3366, 1.442695
      %v3504 = vpow.pop %v3503
      %v3505 = vmul.f32 %v3367, 1.442695
      %v3506 = vpow.pop %v3505
      %v3507 = vmul.f32 %v3368, 1.442695
      %v3508 = vpow.pop %v3507
      %v3509 = vmul.f32 %v3369, 1.442695
      %v3510 = vpow.pop %v3509
      %v3511 = vmul.f32 %v3370, 1.442695
      %v3512 = vpow.pop %v3511
      %v3513 = vmul.f32 %v3371, 1.442695
      %v3514 = vpow.pop %v3513
      %v3515 = vmul.f32 %v3372, 1.442695
      %v3516 = vpow.pop %v3515
      %v3517 = vmul.f32 %v3373, 1.442695
      %v3518 = vpow.pop %v3517
      %v3519 = vmul.f32 %v3374, 1.442695
      %v3520 = vpow.pop %v3519
      %v3521 = vmul.f32 %v3375, 1.442695
      %v3522 = vpow.pop %v3521
      %v3523 = vmul.f32 %v3376, 1.442695
      %v3524 = vpow.pop %v3523
      %v3525 = vmul.f32 %v3377, 1.442695
      %v3526 = vpow.pop %v3525
      %v3527 = vmul.f32 %v3378, 1.442695
      %v3528 = vpow.pop %v3527
      %v3529 = vmul.f32 %v3379, 1.442695
      %v3530 = vpow.pop %v3529
      %v3531 = vmul.f32 %v3380, 1.442695
      %v3532 = vpow.pop %v3531
      %v3533 = vmul.f32 %v3381, 1.442695
      %v3534 = vpow.pop %v3533
      %v3535 = vmul.f32 %v3382, 1.442695
      %v3536 = vpow.pop %v3535
      %v3537 = vadd.f32 %v3384, 1.0
      %v3538 = vadd.f32 %v3386, 1.0
      %v3539 = vadd.f32 %v3388, 1.0
      %v3540 = vadd.f32 %v3390, 1.0
      %v3541 = vadd.f32 %v3392, 1.0
      %v3542 = vadd.f32 %v3394, 1.0
      %v3543 = vadd.f32 %v3396, 1.0
      %v3544 = vadd.f32 %v3398, 1.0
      %v3545 = vadd.f32 %v3400, 1.0
      %v3546 = vadd.f32 %v3402, 1.0
      %v3547 = vadd.f32 %v3404, 1.0
      %v3548 = vadd.f32 %v3406, 1.0
      %v3549 = vadd.f32 %v3408, 1.0
      %v3550 = vadd.f32 %v3410, 1.0
      %v3551 = vadd.f32 %v3412, 1.0
      %v3552 = vadd.f32 %v3414, 1.0
      %v3553 = vadd.f32 %v3416, 1.0
      %v3554 = vadd.f32 %v3418, 1.0
      %v3555 = vadd.f32 %v3420, 1.0
      %v3556 = vadd.f32 %v3422, 1.0
      %v3557 = vadd.f32 %v3424, 1.0
      %v3558 = vadd.f32 %v3426, 1.0
      %v3559 = vadd.f32 %v3428, 1.0
      %v3560 = vadd.f32 %v3430, 1.0
      %v3561 = vadd.f32 %v3432, 1.0
      %v3562 = vadd.f32 %v3434, 1.0
      %v3563 = vadd.f32 %v3436, 1.0
      %v3564 = vadd.f32 %v3438, 1.0
      %v3565 = vadd.f32 %v3440, 1.0
      %v3566 = vadd.f32 %v3442, 1.0
      %v3567 = vadd.f32 %v3444, 1.0
      %v3568 = vadd.f32 %v3446, 1.0
      %v3569 = vadd.f32 %v3448, 1.0
      %v3570 = vadd.f32 %v3450, 1.0
      %v3571 = vadd.f32 %v3452, 1.0
      %v3572 = vadd.f32 %v3454, 1.0
      %v3573 = vadd.f32 %v3456, 1.0
      %v3574 = vadd.f32 %v3458, 1.0
      %v3575 = vadd.f32 %v3460, 1.0
      %v3576 = vadd.f32 %v3462, 1.0
      %v3577 = vadd.f32 %v3464, 1.0
      %v3578 = vadd.f32 %v3466, 1.0
      %v3579 = vadd.f32 %v3468, 1.0
      %v3580 = vadd.f32 %v3470, 1.0
      %v3581 = vadd.f32 %v3472, 1.0
      %v3582 = vadd.f32 %v3474, 1.0
      %v3583 = vadd.f32 %v3476, 1.0
      %v3584 = vadd.f32 %v3478, 1.0
      %v3585 = vadd.f32 %v3480, 1.0
      %v3586 = vadd.f32 %v3482, 1.0
      %v3587 = vadd.f32 %v3484, 1.0
      %v3588 = vadd.f32 %v3486, 1.0
      %v3589 = vadd.f32 %v3488, 1.0
      %v3590 = vadd.f32 %v3490, 1.0
      %v3591 = vadd.f32 %v3492, 1.0
      %v3592 = vadd.f32 %v3494, 1.0
      %v3593 = vadd.f32 %v3496, 1.0
      %v3594 = vadd.f32 %v3498, 1.0
      %v3595 = vadd.f32 %v3500, 1.0
      %v3596 = vadd.f32 %v3502, 1.0
      %v3597 = vadd.f32 %v3504, 1.0
      %v3598 = vadd.f32 %v3506, 1.0
      %v3599 = vadd.f32 %v3508, 1.0
      %v3600 = vadd.f32 %v3510, 1.0
      %v3601 = vadd.f32 %v3512, 1.0
      %v3602 = vadd.f32 %v3514, 1.0
      %v3603 = vadd.f32 %v3516, 1.0
      %v3604 = vadd.f32 %v3518, 1.0
      %v3605 = vadd.f32 %v3520, 1.0
      %v3606 = vadd.f32 %v3522, 1.0
      %v3607 = vadd.f32 %v3524, 1.0
      %v3608 = vadd.f32 %v3526, 1.0
      %v3609 = vadd.f32 %v3528, 1.0
      %v3610 = vadd.f32 %v3530, 1.0
      %v3611 = vadd.f32 %v3532, 1.0
      %v3612 = vadd.f32 %v3534, 1.0
      %v3613 = vadd.f32 %v3536, 1.0
      %v3614 = vrcp.pop %v3537
      %v3615 = vmul.f32 1.0, %v3614
      %v3616 = vrcp.pop %v3538
      %v3617 = vmul.f32 1.0, %v3616
      %v3618 = vrcp.pop %v3539
      %v3619 = vmul.f32 1.0, %v3618
      %v3620 = vrcp.pop %v3540
      %v3621 = vmul.f32 1.0, %v3620
      %v3622 = vrcp.pop %v3541
      %v3623 = vmul.f32 1.0, %v3622
      %v3624 = vrcp.pop %v3542
      %v3625 = vmul.f32 1.0, %v3624
      %v3626 = vrcp.pop %v3543
      %v3627 = vmul.f32 1.0, %v3626
      %v3628 = vrcp.pop %v3544
      %v3629 = vmul.f32 1.0, %v3628
      %v3630 = vrcp.pop %v3545
      %v3631 = vmul.f32 1.0, %v3630
      %v3632 = vrcp.pop %v3546
      %v3633 = vmul.f32 1.0, %v3632
      %v3634 = vrcp.pop %v3547
      %v3635 = vmul.f32 1.0, %v3634
      %v3636 = vrcp.pop %v3548
      %v3637 = vmul.f32 1.0, %v3636
      %v3638 = vrcp.pop %v3549
      %v3639 = vmul.f32 1.0, %v3638
      %v3640 = vrcp.pop %v3550
      %v3641 = vmul.f32 1.0, %v3640
      %v3642 = vrcp.pop %v3551
      %v3643 = vmul.f32 1.0, %v3642
      %v3644 = vrcp.pop %v3552
      %v3645 = vmul.f32 1.0, %v3644
      %v3646 = vrcp.pop %v3553
      %v3647 = vmul.f32 1.0, %v3646
      %v3648 = vrcp.pop %v3554
      %v3649 = vmul.f32 1.0, %v3648
      %v3650 = vrcp.pop %v3555
      %v3651 = vmul.f32 1.0, %v3650
      %v3652 = vrcp.pop %v3556
      %v3653 = vmul.f32 1.0, %v3652
      %v3654 = vrcp.pop %v3557
      %v3655 = vmul.f32 1.0, %v3654
      %v3656 = vrcp.pop %v3558
      %v3657 = vmul.f32 1.0, %v3656
      %v3658 = vrcp.pop %v3559
      %v3659 = vmul.f32 1.0, %v3658
      %v3660 = vrcp.pop %v3560
      %v3661 = vmul.f32 1.0, %v3660
      %v3662 = vrcp.pop %v3561
      %v3663 = vmul.f32 1.0, %v3662
      %v3664 = vrcp.pop %v3562
      %v3665 = vmul.f32 1.0, %v3664
      %v3666 = vrcp.pop %v3563
      %v3667 = vmul.f32 1.0, %v3666
      %v3668 = vrcp.pop %v3564
      %v3669 = vmul.f32 1.0, %v3668
      %v3670 = vrcp.pop %v3565
      %v3671 = vmul.f32 1.0, %v3670
      %v3672 = vrcp.pop %v3566
      %v3673 = vmul.f32 1.0, %v3672
      %v3674 = vrcp.pop %v3567
      %v3675 = vmul.f32 1.0, %v3674
      %v3676 = vrcp.pop %v3568
      %v3677 = vmul.f32 1.0, %v3676
      %v3678 = vrcp.pop %v3569
      %v3679 = vmul.f32 1.0, %v3678
      %v3680 = vrcp.pop %v3570
      %v3681 = vmul.f32 1.0, %v3680
      %v3682 = vrcp.pop %v3571
      %v3683 = vmul.f32 1.0, %v3682
      %v3684 = vrcp.pop %v3572
      %v3685 = vmul.f32 1.0, %v3684
      %v3686 = vrcp.pop %v3573
      %v3687 = vmul.f32 1.0, %v3686
      %v3688 = vrcp.pop %v3574
      %v3689 = vmul.f32 1.0, %v3688
      %v3690 = vrcp.pop %v3575
      %v3691 = vmul.f32 1.0, %v3690
      %v3692 = vrcp.pop %v3576
      %v3693 = vmul.f32 1.0, %v3692
      %v3694 = vrcp.pop %v3577
      %v3695 = vmul.f32 1.0, %v3694
      %v3696 = vrcp.pop %v3578
      %v3697 = vmul.f32 1.0, %v3696
      %v3698 = vrcp.pop %v3579
      %v3699 = vmul.f32 1.0, %v3698
      %v3700 = vrcp.pop %v3580
      %v3701 = vmul.f32 1.0, %v3700
      %v3702 = vrcp.pop %v3581
      %v3703 = vmul.f32 1.0, %v3702
      %v3704 = vrcp.pop %v3582
      %v3705 = vmul.f32 1.0, %v3704
      %v3706 = vrcp.pop %v3583
      %v3707 = vmul.f32 1.0, %v3706
      %v3708 = vrcp.pop %v3584
      %v3709 = vmul.f32 1.0, %v3708
      %v3710 = vrcp.pop %v3585
      %v3711 = vmul.f32 1.0, %v3710
      %v3712 = vrcp.pop %v3586
      %v3713 = vmul.f32 1.0, %v3712
      %v3714 = vrcp.pop %v3587
      %v3715 = vmul.f32 1.0, %v3714
      %v3716 = vrcp.pop %v3588
      %v3717 = vmul.f32 1.0, %v3716
      %v3718 = vrcp.pop %v3589
      %v3719 = vmul.f32 1.0, %v3718
      %v3720 = vrcp.pop %v3590
      %v3721 = vmul.f32 1.0, %v3720
      %v3722 = vrcp.pop %v3591
      %v3723 = vmul.f32 1.0, %v3722
      %v3724 = vrcp.pop %v3592
      %v3725 = vmul.f32 1.0, %v3724
      %v3726 = vrcp.pop %v3593
      %v3727 = vmul.f32 1.0, %v3726
      %v3728 = vrcp.pop %v3594
      %v3729 = vmul.f32 1.0, %v3728
      %v3730 = vrcp.pop %v3595
      %v3731 = vmul.f32 1.0, %v3730
      %v3732 = vrcp.pop %v3596
      %v3733 = vmul.f32 1.0, %v3732
      %v3734 = vrcp.pop %v3597
      %v3735 = vmul.f32 1.0, %v3734
      %v3736 = vrcp.pop %v3598
      %v3737 = vmul.f32 1.0, %v3736
      %v3738 = vrcp.pop %v3599
      %v3739 = vmul.f32 1.0, %v3738
      %v3740 = vrcp.pop %v3600
      %v3741 = vmul.f32 1.0, %v3740
      %v3742 = vrcp.pop %v3601
      %v3743 = vmul.f32 1.0, %v3742
      %v3744 = vrcp.pop %v3602
      %v3745 = vmul.f32 1.0, %v3744
      %v3746 = vrcp.pop %v3603
      %v3747 = vmul.f32 1.0, %v3746
      %v3748 = vrcp.pop %v3604
      %v3749 = vmul.f32 1.0, %v3748
      %v3750 = vrcp.pop %v3605
      %v3751 = vmul.f32 1.0, %v3750
      %v3752 = vrcp.pop %v3606
      %v3753 = vmul.f32 1.0, %v3752
      %v3754 = vrcp.pop %v3607
      %v3755 = vmul.f32 1.0, %v3754
      %v3756 = vrcp.pop %v3608
      %v3757 = vmul.f32 1.0, %v3756
      %v3758 = vrcp.pop %v3609
      %v3759 = vmul.f32 1.0, %v3758
      %v3760 = vrcp.pop %v3610
      %v3761 = vmul.f32 1.0, %v3760
      %v3762 = vrcp.pop %v3611
      %v3763 = vmul.f32 1.0, %v3762
      %v3764 = vrcp.pop %v3612
      %v3765 = vmul.f32 1.0, %v3764
      %v3766 = vrcp.pop %v3613
      %v3767 = vmul.f32 1.0, %v3766
      %v3768 = vld [vmem:[%s249] sm:$0xff]
      %v3769 = vld [vmem:[%s249 + $0x8] sm:$0xff]
      %v3770 = vld [vmem:[%s249 + $0x10] sm:$0xff]
      %v3771 = vld [vmem:[%s249 + $0x18] sm:$0xff]
      %v3772 = vld [vmem:[%s249 + $0x20] sm:$0xff]
      %v3773 = vld [vmem:[%s249 + $0x28] sm:$0xff]
      %v3774 = vld [vmem:[%s249 + $0x30] sm:$0xff]
      %v3775 = vld [vmem:[%s249 + $0x38] sm:$0xff]
      %v3776 = vld [vmem:[%s249 + $0x40] sm:$0xff]
      %v3777 = vld [vmem:[%s249 + $0x48] sm:$0xff]
      %v3778 = vld [vmem:[%s249 + $0x50] sm:$0xff]
      %v3779 = vld [vmem:[%s249 + $0x58] sm:$0xff]
      %v3780 = vld [vmem:[%s249 + $0x60] sm:$0xff]
      %v3781 = vld [vmem:[%s249 + $0x68] sm:$0xff]
      %v3782 = vld [vmem:[%s249 + $0x70] sm:$0xff]
      %v3783 = vld [vmem:[%s249 + $0x78] sm:$0xff]
      %v3784 = vld [vmem:[%s249 + $0x80] sm:$0xff]
      %v3785 = vld [vmem:[%s249 + $0x88] sm:$0xff]
      %v3786 = vld [vmem:[%s249 + $0x90] sm:$0xff]
      %v3787 = vld [vmem:[%s249 + $0x98] sm:$0xff]
      %v3788 = vld [vmem:[%s249 + $0xa0] sm:$0xff]
      %v3789 = vld [vmem:[%s249 + $0xa8] sm:$0xff]
      %v3790 = vld [vmem:[%s249 + $0xb0] sm:$0xff]
      %v3791 = vld [vmem:[%s249 + $0xb8] sm:$0xff]
      %v3792 = vld [vmem:[%s249 + $0xc0] sm:$0xff]
      %v3793 = vld [vmem:[%s249 + $0xc8] sm:$0xff]
      %v3794 = vld [vmem:[%s249 + $0xd0] sm:$0xff]
      %v3795 = vld [vmem:[%s249 + $0xd8] sm:$0xff]
      %v3796 = vld [vmem:[%s249 + $0xe0] sm:$0xff]
      %v3797 = vld [vmem:[%s249 + $0xe8] sm:$0xff]
      %v3798 = vld [vmem:[%s249 + $0xf0] sm:$0xff]
      %v3799 = vld [vmem:[%s249 + $0xf8] sm:$0xff]
      %v3800 = vld [vmem:[%s249 + $0x100] sm:$0xff]
      %v3801 = vld [vmem:[%s249 + $0x108] sm:$0xff]
      %v3802 = vld [vmem:[%s249 + $0x110] sm:$0xff]
      %v3803 = vld [vmem:[%s249 + $0x118] sm:$0xff]
      %v3804 = vld [vmem:[%s249 + $0x120] sm:$0xff]
      %v3805 = vld [vmem:[%s249 + $0x128] sm:$0xff]
      %v3806 = vld [vmem:[%s249 + $0x130] sm:$0xff]
      %v3807 = vld [vmem:[%s249 + $0x138] sm:$0xff]
      %v3808 = vld [vmem:[%s249 + $0x140] sm:$0xff]
      %v3809 = vld [vmem:[%s249 + $0x148] sm:$0xff]
      %v3810 = vld [vmem:[%s249 + $0x150] sm:$0xff]
      %v3811 = vld [vmem:[%s249 + $0x158] sm:$0xff]
      %v3812 = vld [vmem:[%s249 + $0x160] sm:$0xff]
      %v3813 = vld [vmem:[%s249 + $0x168] sm:$0xff]
      %v3814 = vld [vmem:[%s249 + $0x170] sm:$0xff]
      %v3815 = vld [vmem:[%s249 + $0x178] sm:$0xff]
      %v3816 = vld [vmem:[%s249 + $0x180] sm:$0xff]
      %v3817 = vld [vmem:[%s249 + $0x188] sm:$0xff]
      %v3818 = vld [vmem:[%s249 + $0x190] sm:$0xff]
      %v3819 = vld [vmem:[%s249 + $0x198] sm:$0xff]
      %v3820 = vld [vmem:[%s249 + $0x1a0] sm:$0xff]
      %v3821 = vld [vmem:[%s249 + $0x1a8] sm:$0xff]
      %v3822 = vld [vmem:[%s249 + $0x1b0] sm:$0xff]
      %v3823 = vld [vmem:[%s249 + $0x1b8] sm:$0xff]
      %v3824 = vld [vmem:[%s249 + $0x1c0] sm:$0xff]
      %v3825 = vld [vmem:[%s249 + $0x1c8] sm:$0xff]
      %v3826 = vld [vmem:[%s249 + $0x1d0] sm:$0xff]
      %v3827 = vld [vmem:[%s249 + $0x1d8] sm:$0xff]
      %v3828 = vld [vmem:[%s249 + $0x1e0] sm:$0xff]
      %v3829 = vld [vmem:[%s249 + $0x1e8] sm:$0xff]
      %v3830 = vld [vmem:[%s249 + $0x1f0] sm:$0xff]
      %v3831 = vld [vmem:[%s249 + $0x1f8] sm:$0xff]
      %v3832 = vld [vmem:[%s249 + $0x200] sm:$0xff]
      %v3833 = vld [vmem:[%s249 + $0x208] sm:$0xff]
      %v3834 = vld [vmem:[%s249 + $0x210] sm:$0xff]
      %v3835 = vld [vmem:[%s249 + $0x218] sm:$0xff]
      %v3836 = vld [vmem:[%s249 + $0x220] sm:$0xff]
      %v3837 = vld [vmem:[%s249 + $0x228] sm:$0xff]
      %v3838 = vld [vmem:[%s249 + $0x230] sm:$0xff]
      %v3839 = vld [vmem:[%s249 + $0x238] sm:$0xff]
      %v3840 = vld [vmem:[%s249 + $0x240] sm:$0xff]
      %v3841 = vld [vmem:[%s249 + $0x248] sm:$0xff]
      %v3842 = vld [vmem:[%s249 + $0x250] sm:$0xff]
      %v3843 = vld [vmem:[%s249 + $0x258] sm:$0xff]
      %v3844 = vld [vmem:[%s249 + $0x260] sm:$0xff]
      %v3845 = vld [vmem:[%s249 + $0x268] sm:$0xff]
      %v3846 = vld [vmem:[%s249 + $0x270] sm:$0xff]
      %v3847 = vld [vmem:[%s249 + $0x278] sm:$0xff]
      %v3848 = vld [vmem:[%s249 + $0x280] sm:$0xff]
      %v3849 = vld [vmem:[%s249 + $0x288] sm:$0xff]
      %v3850 = vld [vmem:[%s249 + $0x290] sm:$0xff]
      %v3851 = vld [vmem:[%s249 + $0x298] sm:$0xff]
      %v3852 = vld [vmem:[%s249 + $0x2a0] sm:$0xff]
      %v3853 = vld [vmem:[%s249 + $0x2a8] sm:$0xff]
      %v3854 = vld [vmem:[%s249 + $0x2b0] sm:$0xff]
      %v3855 = vld [vmem:[%s249 + $0x2b8] sm:$0xff]
      %v3856 = vld [vmem:[%s249 + $0x2c0] sm:$0xff]
      %v3857 = vld [vmem:[%s249 + $0x2c8] sm:$0xff]
      %v3858 = vld [vmem:[%s249 + $0x2d0] sm:$0xff]
      %v3859 = vld [vmem:[%s249 + $0x2d8] sm:$0xff]
      %v3860 = vld [vmem:[%s249 + $0x2e0] sm:$0xff]
      %v3861 = vld [vmem:[%s249 + $0x2e8] sm:$0xff]
      %v3862 = vld [vmem:[%s249 + $0x2f0] sm:$0xff]
      %v3863 = vld [vmem:[%s249 + $0x2f8] sm:$0xff]
      %v3864 = vld [vmem:[%s249 + $0x300] sm:$0xff]
      %v3865 = vld [vmem:[%s249 + $0x308] sm:$0xff]
      %v3866 = vld [vmem:[%s249 + $0x310] sm:$0xff]
      %v3867 = vld [vmem:[%s249 + $0x318] sm:$0xff]
      %v3868 = vld [vmem:[%s249 + $0x320] sm:$0xff]
      %v3869 = vld [vmem:[%s249 + $0x328] sm:$0xff]
      %v3870 = vld [vmem:[%s249 + $0x330] sm:$0xff]
      %v3871 = vld [vmem:[%s249 + $0x338] sm:$0xff]
      %v3872 = vld [vmem:[%s249 + $0x340] sm:$0xff]
      %v3873 = vld [vmem:[%s249 + $0x348] sm:$0xff]
      %v3874 = vld [vmem:[%s249 + $0x350] sm:$0xff]
      %v3875 = vld [vmem:[%s249 + $0x358] sm:$0xff]
      %v3876 = vld [vmem:[%s249 + $0x360] sm:$0xff]
      %v3877 = vld [vmem:[%s249 + $0x368] sm:$0xff]
      %v3878 = vld [vmem:[%s249 + $0x370] sm:$0xff]
      %v3879 = vld [vmem:[%s249 + $0x378] sm:$0xff]
      %v3880 = vld [vmem:[%s249 + $0x380] sm:$0xff]
      %v3881 = vld [vmem:[%s249 + $0x388] sm:$0xff]
      %v3882 = vld [vmem:[%s249 + $0x390] sm:$0xff]
      %v3883 = vld [vmem:[%s249 + $0x398] sm:$0xff]
      %v3884 = vld [vmem:[%s249 + $0x3a0] sm:$0xff]
      %v3885 = vld [vmem:[%s249 + $0x3a8] sm:$0xff]
      %v3886 = vld [vmem:[%s249 + $0x3b0] sm:$0xff]
      %v3887 = vld [vmem:[%s249 + $0x3b8] sm:$0xff]
      %v3888 = vld [vmem:[%s249 + $0x3c0] sm:$0xff]
      %v3889 = vld [vmem:[%s249 + $0x3c8] sm:$0xff]
      %v3890 = vld [vmem:[%s249 + $0x3d0] sm:$0xff]
      %v3891 = vld [vmem:[%s249 + $0x3d8] sm:$0xff]
      %v3892 = vld [vmem:[%s249 + $0x3e0] sm:$0xff]
      %v3893 = vld [vmem:[%s249 + $0x3e8] sm:$0xff]
      %v3894 = vld [vmem:[%s249 + $0x3f0] sm:$0xff]
      %v3895 = vld [vmem:[%s249 + $0x3f8] sm:$0xff]
      %v3896 = vld [vmem:[%s249 + $0x400] sm:$0xff]
      %v3897 = vld [vmem:[%s249 + $0x408] sm:$0xff]
      %v3898 = vld [vmem:[%s249 + $0x410] sm:$0xff]
      %v3899 = vld [vmem:[%s249 + $0x418] sm:$0xff]
      %v3900 = vld [vmem:[%s249 + $0x420] sm:$0xff]
      %v3901 = vld [vmem:[%s249 + $0x428] sm:$0xff]
      %v3902 = vld [vmem:[%s249 + $0x430] sm:$0xff]
      %v3903 = vld [vmem:[%s249 + $0x438] sm:$0xff]
      %v3904 = vld [vmem:[%s249 + $0x440] sm:$0xff]
      %v3905 = vld [vmem:[%s249 + $0x448] sm:$0xff]
      %v3906 = vld [vmem:[%s249 + $0x450] sm:$0xff]
      %v3907 = vld [vmem:[%s249 + $0x458] sm:$0xff]
      %v3908 = vld [vmem:[%s249 + $0x460] sm:$0xff]
      %v3909 = vld [vmem:[%s249 + $0x468] sm:$0xff]
      %v3910 = vld [vmem:[%s249 + $0x470] sm:$0xff]
      %v3911 = vld [vmem:[%s249 + $0x478] sm:$0xff]
      %v3912 = vld [vmem:[%s249 + $0x480] sm:$0xff]
      %v3913 = vld [vmem:[%s249 + $0x488] sm:$0xff]
      %v3914 = vld [vmem:[%s249 + $0x490] sm:$0xff]
      %v3915 = vld [vmem:[%s249 + $0x498] sm:$0xff]
      %v3916 = vld [vmem:[%s249 + $0x4a0] sm:$0xff]
      %v3917 = vld [vmem:[%s249 + $0x4a8] sm:$0xff]
      %v3918 = vld [vmem:[%s249 + $0x4b0] sm:$0xff]
      %v3919 = vld [vmem:[%s249 + $0x4b8] sm:$0xff]
      %v3920 = vld [vmem:[%s249 + $0x4c0] sm:$0xff]
      %v3921 = vld [vmem:[%s249 + $0x4c8] sm:$0xff]
      %v3922 = vmul.f32 %v3768, %v3615
      %v3923 = vmul.f32 %v3769, %v3615
      %v3924 = vmul.f32 %v3770, %v3617
      %v3925 = vmul.f32 %v3771, %v3617
      %v3926 = vmul.f32 %v3772, %v3619
      %v3927 = vmul.f32 %v3773, %v3619
      %v3928 = vmul.f32 %v3774, %v3621
      %v3929 = vmul.f32 %v3775, %v3621
      %v3930 = vmul.f32 %v3776, %v3623
      %v3931 = vmul.f32 %v3777, %v3623
      %v3932 = vmul.f32 %v3778, %v3625
      %v3933 = vmul.f32 %v3779, %v3625
      %v3934 = vmul.f32 %v3780, %v3627
      %v3935 = vmul.f32 %v3781, %v3627
      %v3936 = vmul.f32 %v3782, %v3629
      %v3937 = vmul.f32 %v3783, %v3629
      %v3938 = vmul.f32 %v3784, %v3631
      %v3939 = vmul.f32 %v3785, %v3631
      %v3940 = vmul.f32 %v3786, %v3633
      %v3941 = vmul.f32 %v3787, %v3633
      %v3942 = vmul.f32 %v3788, %v3635
      %v3943 = vmul.f32 %v3789, %v3635
      %v3944 = vmul.f32 %v3790, %v3637
      %v3945 = vmul.f32 %v3791, %v3637
      %v3946 = vmul.f32 %v3792, %v3639
      %v3947 = vmul.f32 %v3793, %v3639
      %v3948 = vmul.f32 %v3794, %v3641
      %v3949 = vmul.f32 %v3795, %v3641
      %v3950 = vmul.f32 %v3796, %v3643
      %v3951 = vmul.f32 %v3797, %v3643
      %v3952 = vmul.f32 %v3798, %v3645
      %v3953 = vmul.f32 %v3799, %v3645
      %v3954 = vmul.f32 %v3800, %v3647
      %v3955 = vmul.f32 %v3801, %v3647
      %v3956 = vmul.f32 %v3802, %v3649
      %v3957 = vmul.f32 %v3803, %v3649
      %v3958 = vmul.f32 %v3804, %v3651
      %v3959 = vmul.f32 %v3805, %v3651
      %v3960 = vmul.f32 %v3806, %v3653
      %v3961 = vmul.f32 %v3807, %v3653
      %v3962 = vmul.f32 %v3808, %v3655
      %v3963 = vmul.f32 %v3809, %v3655
      %v3964 = vmul.f32 %v3810, %v3657
      %v3965 = vmul.f32 %v3811, %v3657
      %v3966 = vmul.f32 %v3812, %v3659
      %v3967 = vmul.f32 %v3813, %v3659
      %v3968 = vmul.f32 %v3814, %v3661
      %v3969 = vmul.f32 %v3815, %v3661
      %v3970 = vmul.f32 %v3816, %v3663
      %v3971 = vmul.f32 %v3817, %v3663
      %v3972 = vmul.f32 %v3818, %v3665
      %v3973 = vmul.f32 %v3819, %v3665
      %v3974 = vmul.f32 %v3820, %v3667
      %v3975 = vmul.f32 %v3821, %v3667
      %v3976 = vmul.f32 %v3822, %v3669
      %v3977 = vmul.f32 %v3823, %v3669
      %v3978 = vmul.f32 %v3824, %v3671
      %v3979 = vmul.f32 %v3825, %v3671
      %v3980 = vmul.f32 %v3826, %v3673
      %v3981 = vmul.f32 %v3827, %v3673
      %v3982 = vmul.f32 %v3828, %v3675
      %v3983 = vmul.f32 %v3829, %v3675
      %v3984 = vmul.f32 %v3830, %v3677
      %v3985 = vmul.f32 %v3831, %v3677
      %v3986 = vmul.f32 %v3832, %v3679
      %v3987 = vmul.f32 %v3833, %v3679
      %v3988 = vmul.f32 %v3834, %v3681
      %v3989 = vmul.f32 %v3835, %v3681
      %v3990 = vmul.f32 %v3836, %v3683
      %v3991 = vmul.f32 %v3837, %v3683
      %v3992 = vmul.f32 %v3838, %v3685
      %v3993 = vmul.f32 %v3839, %v3685
      %v3994 = vmul.f32 %v3840, %v3687
      %v3995 = vmul.f32 %v3841, %v3687
      %v3996 = vmul.f32 %v3842, %v3689
      %v3997 = vmul.f32 %v3843, %v3689
      %v3998 = vmul.f32 %v3844, %v3691
      %v3999 = vmul.f32 %v3845, %v3691
      %v4000 = vmul.f32 %v3846, %v3693
      %v4001 = vmul.f32 %v3847, %v3693
      %v4002 = vmul.f32 %v3848, %v3695
      %v4003 = vmul.f32 %v3849, %v3695
      %v4004 = vmul.f32 %v3850, %v3697
      %v4005 = vmul.f32 %v3851, %v3697
      %v4006 = vmul.f32 %v3852, %v3699
      %v4007 = vmul.f32 %v3853, %v3699
      %v4008 = vmul.f32 %v3854, %v3701
      %v4009 = vmul.f32 %v3855, %v3701
      %v4010 = vmul.f32 %v3856, %v3703
      %v4011 = vmul.f32 %v3857, %v3703
      %v4012 = vmul.f32 %v3858, %v3705
      %v4013 = vmul.f32 %v3859, %v3705
      %v4014 = vmul.f32 %v3860, %v3707
      %v4015 = vmul.f32 %v3861, %v3707
      %v4016 = vmul.f32 %v3862, %v3709
      %v4017 = vmul.f32 %v3863, %v3709
      %v4018 = vmul.f32 %v3864, %v3711
      %v4019 = vmul.f32 %v3865, %v3711
      %v4020 = vmul.f32 %v3866, %v3713
      %v4021 = vmul.f32 %v3867, %v3713
      %v4022 = vmul.f32 %v3868, %v3715
      %v4023 = vmul.f32 %v3869, %v3715
      %v4024 = vmul.f32 %v3870, %v3717
      %v4025 = vmul.f32 %v3871, %v3717
      %v4026 = vmul.f32 %v3872, %v3719
      %v4027 = vmul.f32 %v3873, %v3719
      %v4028 = vmul.f32 %v3874, %v3721
      %v4029 = vmul.f32 %v3875, %v3721
      %v4030 = vmul.f32 %v3876, %v3723
      %v4031 = vmul.f32 %v3877, %v3723
      %v4032 = vmul.f32 %v3878, %v3725
      %v4033 = vmul.f32 %v3879, %v3725
      %v4034 = vmul.f32 %v3880, %v3727
      %v4035 = vmul.f32 %v3881, %v3727
      %v4036 = vmul.f32 %v3882, %v3729
      %v4037 = vmul.f32 %v3883, %v3729
      %v4038 = vmul.f32 %v3884, %v3731
      %v4039 = vmul.f32 %v3885, %v3731
      %v4040 = vmul.f32 %v3886, %v3733
      %v4041 = vmul.f32 %v3887, %v3733
      %v4042 = vmul.f32 %v3888, %v3735
      %v4043 = vmul.f32 %v3889, %v3735
      %v4044 = vmul.f32 %v3890, %v3737
      %v4045 = vmul.f32 %v3891, %v3737
      %v4046 = vmul.f32 %v3892, %v3739
      %v4047 = vmul.f32 %v3893, %v3739
      %v4048 = vmul.f32 %v3894, %v3741
      %v4049 = vmul.f32 %v3895, %v3741
      %v4050 = vmul.f32 %v3896, %v3743
      %v4051 = vmul.f32 %v3897, %v3743
      %v4052 = vmul.f32 %v3898, %v3745
      %v4053 = vmul.f32 %v3899, %v3745
      %v4054 = vmul.f32 %v3900, %v3747
      %v4055 = vmul.f32 %v3901, %v3747
      %v4056 = vmul.f32 %v3902, %v3749
      %v4057 = vmul.f32 %v3903, %v3749
      %v4058 = vmul.f32 %v3904, %v3751
      %v4059 = vmul.f32 %v3905, %v3751
      %v4060 = vmul.f32 %v3906, %v3753
      %v4061 = vmul.f32 %v3907, %v3753
      %v4062 = vmul.f32 %v3908, %v3755
      %v4063 = vmul.f32 %v3909, %v3755
      %v4064 = vmul.f32 %v3910, %v3757
      %v4065 = vmul.f32 %v3911, %v3757
      %v4066 = vmul.f32 %v3912, %v3759
      %v4067 = vmul.f32 %v3913, %v3759
      %v4068 = vmul.f32 %v3914, %v3761
      %v4069 = vmul.f32 %v3915, %v3761
      %v4070 = vmul.f32 %v3916, %v3763
      %v4071 = vmul.f32 %v3917, %v3763
      %v4072 = vmul.f32 %v3918, %v3765
      %v4073 = vmul.f32 %v3919, %v3765
      %v4074 = vmul.f32 %v3920, %v3767
      %v4075 = vmul.f32 %v3921, %v3767
      %4076 = vst [vmem:[%s256] sm:$0xff] %v3922
      %vm4077 = vcmask 556032
      %4078 = vst.msk [vmem:[%s256 + $0x8] sm:$0xff] %vm4077, %v3923
      %4079 = vst [vmem:[%s256 + $0x10] sm:$0xff] %v3924
      %4080 = vst.msk [vmem:[%s256 + $0x18] sm:$0xff] %vm4077, %v3925
      %4081 = vst [vmem:[%s256 + $0x20] sm:$0xff] %v3926
      %4082 = vst.msk [vmem:[%s256 + $0x28] sm:$0xff] %vm4077, %v3927
      %4083 = vst [vmem:[%s256 + $0x30] sm:$0xff] %v3928
      %4084 = vst.msk [vmem:[%s256 + $0x38] sm:$0xff] %vm4077, %v3929
      %4085 = vst [vmem:[%s256 + $0x40] sm:$0xff] %v3930
      %4086 = vst.msk [vmem:[%s256 + $0x48] sm:$0xff] %vm4077, %v3931
      %4087 = vst [vmem:[%s256 + $0x50] sm:$0xff] %v3932
      %4088 = vst.msk [vmem:[%s256 + $0x58] sm:$0xff] %vm4077, %v3933
      %4089 = vst [vmem:[%s256 + $0x60] sm:$0xff] %v3934
      %4090 = vst.msk [vmem:[%s256 + $0x68] sm:$0xff] %vm4077, %v3935
      %4091 = vst [vmem:[%s256 + $0x70] sm:$0xff] %v3936
      %4092 = vst.msk [vmem:[%s256 + $0x78] sm:$0xff] %vm4077, %v3937
      %4093 = vst [vmem:[%s256 + $0x80] sm:$0xff] %v3938
      %4094 = vst.msk [vmem:[%s256 + $0x88] sm:$0xff] %vm4077, %v3939
      %4095 = vst [vmem:[%s256 + $0x90] sm:$0xff] %v3940
      %4096 = vst.msk [vmem:[%s256 + $0x98] sm:$0xff] %vm4077, %v3941
      %4097 = vst [vmem:[%s256 + $0xa0] sm:$0xff] %v3942
      %4098 = vst.msk [vmem:[%s256 + $0xa8] sm:$0xff] %vm4077, %v3943
      %4099 = vst [vmem:[%s256 + $0xb0] sm:$0xff] %v3944
      %4100 = vst.msk [vmem:[%s256 + $0xb8] sm:$0xff] %vm4077, %v3945
      %4101 = vst [vmem:[%s256 + $0xc0] sm:$0xff] %v3946
      %4102 = vst.msk [vmem:[%s256 + $0xc8] sm:$0xff] %vm4077, %v3947
      %4103 = vst [vmem:[%s256 + $0xd0] sm:$0xff] %v3948
      %4104 = vst.msk [vmem:[%s256 + $0xd8] sm:$0xff] %vm4077, %v3949
      %4105 = vst [vmem:[%s256 + $0xe0] sm:$0xff] %v3950
      %4106 = vst.msk [vmem:[%s256 + $0xe8] sm:$0xff] %vm4077, %v3951
      %4107 = vst [vmem:[%s256 + $0xf0] sm:$0xff] %v3952
      %4108 = vst.msk [vmem:[%s256 + $0xf8] sm:$0xff] %vm4077, %v3953
      %4109 = vst [vmem:[%s256 + $0x100] sm:$0xff] %v3954
      %4110 = vst.msk [vmem:[%s256 + $0x108] sm:$0xff] %vm4077, %v3955
      %4111 = vst [vmem:[%s256 + $0x110] sm:$0xff] %v3956
      %4112 = vst.msk [vmem:[%s256 + $0x118] sm:$0xff] %vm4077, %v3957
      %4113 = vst [vmem:[%s256 + $0x120] sm:$0xff] %v3958
      %4114 = vst.msk [vmem:[%s256 + $0x128] sm:$0xff] %vm4077, %v3959
      %4115 = vst [vmem:[%s256 + $0x130] sm:$0xff] %v3960
      %4116 = vst.msk [vmem:[%s256 + $0x138] sm:$0xff] %vm4077, %v3961
      %4117 = vst [vmem:[%s256 + $0x140] sm:$0xff] %v3962
      %4118 = vst.msk [vmem:[%s256 + $0x148] sm:$0xff] %vm4077, %v3963
      %4119 = vst [vmem:[%s256 + $0x150] sm:$0xff] %v3964
      %4120 = vst.msk [vmem:[%s256 + $0x158] sm:$0xff] %vm4077, %v3965
      %4121 = vst [vmem:[%s256 + $0x160] sm:$0xff] %v3966
      %4122 = vst.msk [vmem:[%s256 + $0x168] sm:$0xff] %vm4077, %v3967
      %4123 = vst [vmem:[%s256 + $0x170] sm:$0xff] %v3968
      %4124 = vst.msk [vmem:[%s256 + $0x178] sm:$0xff] %vm4077, %v3969
      %4125 = vst [vmem:[%s256 + $0x180] sm:$0xff] %v3970
      %4126 = vst.msk [vmem:[%s256 + $0x188] sm:$0xff] %vm4077, %v3971
      %4127 = vst [vmem:[%s256 + $0x190] sm:$0xff] %v3972
      %4128 = vst.msk [vmem:[%s256 + $0x198] sm:$0xff] %vm4077, %v3973
      %4129 = vst [vmem:[%s256 + $0x1a0] sm:$0xff] %v3974
      %4130 = vst.msk [vmem:[%s256 + $0x1a8] sm:$0xff] %vm4077, %v3975
      %4131 = vst [vmem:[%s256 + $0x1b0] sm:$0xff] %v3976
      %4132 = vst.msk [vmem:[%s256 + $0x1b8] sm:$0xff] %vm4077, %v3977
      %4133 = vst [vmem:[%s256 + $0x1c0] sm:$0xff] %v3978
      %4134 = vst.msk [vmem:[%s256 + $0x1c8] sm:$0xff] %vm4077, %v3979
      %4135 = vst [vmem:[%s256 + $0x1d0] sm:$0xff] %v3980
      %4136 = vst.msk [vmem:[%s256 + $0x1d8] sm:$0xff] %vm4077, %v3981
      %4137 = vst [vmem:[%s256 + $0x1e0] sm:$0xff] %v3982
      %4138 = vst.msk [vmem:[%s256 + $0x1e8] sm:$0xff] %vm4077, %v3983
      %4139 = vst [vmem:[%s256 + $0x1f0] sm:$0xff] %v3984
      %4140 = vst.msk [vmem:[%s256 + $0x1f8] sm:$0xff] %vm4077, %v3985
      %4141 = vst [vmem:[%s256 + $0x200] sm:$0xff] %v3986
      %4142 = vst.msk [vmem:[%s256 + $0x208] sm:$0xff] %vm4077, %v3987
      %4143 = vst [vmem:[%s256 + $0x210] sm:$0xff] %v3988
      %4144 = vst.msk [vmem:[%s256 + $0x218] sm:$0xff] %vm4077, %v3989
      %4145 = vst [vmem:[%s256 + $0x220] sm:$0xff] %v3990
      %4146 = vst.msk [vmem:[%s256 + $0x228] sm:$0xff] %vm4077, %v3991
      %4147 = vst [vmem:[%s256 + $0x230] sm:$0xff] %v3992
      %4148 = vst.msk [vmem:[%s256 + $0x238] sm:$0xff] %vm4077, %v3993
      %4149 = vst [vmem:[%s256 + $0x240] sm:$0xff] %v3994
      %4150 = vst.msk [vmem:[%s256 + $0x248] sm:$0xff] %vm4077, %v3995
      %4151 = vst [vmem:[%s256 + $0x250] sm:$0xff] %v3996
      %4152 = vst.msk [vmem:[%s256 + $0x258] sm:$0xff] %vm4077, %v3997
      %4153 = vst [vmem:[%s256 + $0x260] sm:$0xff] %v3998
      %4154 = vst.msk [vmem:[%s256 + $0x268] sm:$0xff] %vm4077, %v3999
      %4155 = vst [vmem:[%s256 + $0x270] sm:$0xff] %v4000
      %4156 = vst.msk [vmem:[%s256 + $0x278] sm:$0xff] %vm4077, %v4001
      %4157 = vst [vmem:[%s256 + $0x280] sm:$0xff] %v4002
      %4158 = vst.msk [vmem:[%s256 + $0x288] sm:$0xff] %vm4077, %v4003
      %4159 = vst [vmem:[%s256 + $0x290] sm:$0xff] %v4004
      %4160 = vst.msk [vmem:[%s256 + $0x298] sm:$0xff] %vm4077, %v4005
      %4161 = vst [vmem:[%s256 + $0x2a0] sm:$0xff] %v4006
      %4162 = vst.msk [vmem:[%s256 + $0x2a8] sm:$0xff] %vm4077, %v4007
      %4163 = vst [vmem:[%s256 + $0x2b0] sm:$0xff] %v4008
      %4164 = vst.msk [vmem:[%s256 + $0x2b8] sm:$0xff] %vm4077, %v4009
      %4165 = vst [vmem:[%s256 + $0x2c0] sm:$0xff] %v4010
      %4166 = vst.msk [vmem:[%s256 + $0x2c8] sm:$0xff] %vm4077, %v4011
      %4167 = vst [vmem:[%s256 + $0x2d0] sm:$0xff] %v4012
      %4168 = vst.msk [vmem:[%s256 + $0x2d8] sm:$0xff] %vm4077, %v4013
      %4169 = vst [vmem:[%s256 + $0x2e0] sm:$0xff] %v4014
      %4170 = vst.msk [vmem:[%s256 + $0x2e8] sm:$0xff] %vm4077, %v4015
      %4171 = vst [vmem:[%s256 + $0x2f0] sm:$0xff] %v4016
      %4172 = vst.msk [vmem:[%s256 + $0x2f8] sm:$0xff] %vm4077, %v4017
      %4173 = vst [vmem:[%s256 + $0x300] sm:$0xff] %v4018
      %4174 = vst.msk [vmem:[%s256 + $0x308] sm:$0xff] %vm4077, %v4019
      %4175 = vst [vmem:[%s256 + $0x310] sm:$0xff] %v4020
      %4176 = vst.msk [vmem:[%s256 + $0x318] sm:$0xff] %vm4077, %v4021
      %4177 = vst [vmem:[%s256 + $0x320] sm:$0xff] %v4022
      %4178 = vst.msk [vmem:[%s256 + $0x328] sm:$0xff] %vm4077, %v4023
      %4179 = vst [vmem:[%s256 + $0x330] sm:$0xff] %v4024
      %4180 = vst.msk [vmem:[%s256 + $0x338] sm:$0xff] %vm4077, %v4025
      %4181 = vst [vmem:[%s256 + $0x340] sm:$0xff] %v4026
      %4182 = vst.msk [vmem:[%s256 + $0x348] sm:$0xff] %vm4077, %v4027
      %4183 = vst [vmem:[%s256 + $0x350] sm:$0xff] %v4028
      %4184 = vst.msk [vmem:[%s256 + $0x358] sm:$0xff] %vm4077, %v4029
      %4185 = vst [vmem:[%s256 + $0x360] sm:$0xff] %v4030
      %4186 = vst.msk [vmem:[%s256 + $0x368] sm:$0xff] %vm4077, %v4031
      %4187 = vst [vmem:[%s256 + $0x370] sm:$0xff] %v4032
      %4188 = vst.msk [vmem:[%s256 + $0x378] sm:$0xff] %vm4077, %v4033
      %4189 = vst [vmem:[%s256 + $0x380] sm:$0xff] %v4034
      %4190 = vst.msk [vmem:[%s256 + $0x388] sm:$0xff] %vm4077, %v4035
      %4191 = vst [vmem:[%s256 + $0x390] sm:$0xff] %v4036
      %4192 = vst.msk [vmem:[%s256 + $0x398] sm:$0xff] %vm4077, %v4037
      %4193 = vst [vmem:[%s256 + $0x3a0] sm:$0xff] %v4038
      %4194 = vst.msk [vmem:[%s256 + $0x3a8] sm:$0xff] %vm4077, %v4039
      %4195 = vst [vmem:[%s256 + $0x3b0] sm:$0xff] %v4040
      %4196 = vst.msk [vmem:[%s256 + $0x3b8] sm:$0xff] %vm4077, %v4041
      %4197 = vst [vmem:[%s256 + $0x3c0] sm:$0xff] %v4042
      %4198 = vst.msk [vmem:[%s256 + $0x3c8] sm:$0xff] %vm4077, %v4043
      %4199 = vst [vmem:[%s256 + $0x3d0] sm:$0xff] %v4044
      %4200 = vst.msk [vmem:[%s256 + $0x3d8] sm:$0xff] %vm4077, %v4045
      %4201 = vst [vmem:[%s256 + $0x3e0] sm:$0xff] %v4046
      %4202 = vst.msk [vmem:[%s256 + $0x3e8] sm:$0xff] %vm4077, %v4047
      %4203 = vst [vmem:[%s256 + $0x3f0] sm:$0xff] %v4048
      %4204 = vst.msk [vmem:[%s256 + $0x3f8] sm:$0xff] %vm4077, %v4049
      %4205 = vst [vmem:[%s256 + $0x400] sm:$0xff] %v4050
      %4206 = vst.msk [vmem:[%s256 + $0x408] sm:$0xff] %vm4077, %v4051
      %4207 = vst [vmem:[%s256 + $0x410] sm:$0xff] %v4052
      %4208 = vst.msk [vmem:[%s256 + $0x418] sm:$0xff] %vm4077, %v4053
      %4209 = vst [vmem:[%s256 + $0x420] sm:$0xff] %v4054
      %4210 = vst.msk [vmem:[%s256 + $0x428] sm:$0xff] %vm4077, %v4055
      %4211 = vst [vmem:[%s256 + $0x430] sm:$0xff] %v4056
      %4212 = vst.msk [vmem:[%s256 + $0x438] sm:$0xff] %vm4077, %v4057
      %4213 = vst [vmem:[%s256 + $0x440] sm:$0xff] %v4058
      %4214 = vst.msk [vmem:[%s256 + $0x448] sm:$0xff] %vm4077, %v4059
      %4215 = vst [vmem:[%s256 + $0x450] sm:$0xff] %v4060
      %4216 = vst.msk [vmem:[%s256 + $0x458] sm:$0xff] %vm4077, %v4061
      %4217 = vst [vmem:[%s256 + $0x460] sm:$0xff] %v4062
      %4218 = vst.msk [vmem:[%s256 + $0x468] sm:$0xff] %vm4077, %v4063
      %4219 = vst [vmem:[%s256 + $0x470] sm:$0xff] %v4064
      %4220 = vst.msk [vmem:[%s256 + $0x478] sm:$0xff] %vm4077, %v4065
      %4221 = vst [vmem:[%s256 + $0x480] sm:$0xff] %v4066
      %4222 = vst.msk [vmem:[%s256 + $0x488] sm:$0xff] %vm4077, %v4067
      %4223 = vst [vmem:[%s256 + $0x490] sm:$0xff] %v4068
      %4224 = vst.msk [vmem:[%s256 + $0x498] sm:$0xff] %vm4077, %v4069
      %4225 = vst [vmem:[%s256 + $0x4a0] sm:$0xff] %v4070
      %4226 = vst.msk [vmem:[%s256 + $0x4a8] sm:$0xff] %vm4077, %v4071
      %4227 = vst [vmem:[%s256 + $0x4b0] sm:$0xff] %v4072
      %4228 = vst.msk [vmem:[%s256 + $0x4b8] sm:$0xff] %vm4077, %v4073
      %4229 = vst [vmem:[%s256 + $0x4c0] sm:$0xff] %v4074
      %4230 = vst.msk [vmem:[%s256 + $0x4c8] sm:$0xff] %vm4077, %v4075
      %s4231 = smul.u32 77, %s16
      %p4232 = scmp.lt.s32.totalorder %s4231, 153
      %s4233 = scalar_select %p4232, %s4231, 153
      %s4234 = smul.addr %s4233, 2
      %s4235 = smul.addr %s4234, 8
      %s4236 = scalar_lea.vmem %s5, %s4235
      // Predicated region
      $region41: #{se_block.1} parent=39 // pred_check
        %p4237 = pneg %p149
      $region42: #{se_block.1} parent=39 // pred_check_branch
        %4239 = sbr.rel (%p4237) target = $region44
      $region43: #{se_block.1} parent=39 // pred_region
        %s4240 = smul.u32 77, %s16
      $region44: #{se_block.1} parent=39 // pred_fallthru
        _
    $region40: #{se_block.1} parent=5 // pred_fallthru
      _
    %p4241 = scmp.le.s32.totalorder 2, %s11
    // Predicated region
    $region45: #{se_block.1} parent=5 // pred_check
      %p4242 = pneg %p4241
    $region46: #{se_block.1} parent=5 // pred_check_branch
      %4244 = sbr.rel (%p4242) target = $region48
    $region47: #{se_block.1} parent=5 // pred_region
      %s4245 = ssub.s32 %s11, 2
      // Predicated region
      $region49: #{se_block.1} parent=47 // pred_check
        %p4246 = pneg %p155
      $region50: #{se_block.1} parent=47 // pred_check_branch
        %4248 = sbr.rel (%p4246) target = $region52
      $region51: #{se_block.1} parent=47 // pred_region
        %s4249 = smul.u32 77, %s17
        %p4250 = scmp.lt.s32.totalorder %s4249, 153
        %s4251 = scalar_select %p4250, %s4249, 153
        %s4252 = smul.addr %s4251, 2
        %s4253 = smul.addr %s4252, 8
        %s4254 = scalar_lea.vmem %s5, %s4253
      $region52: #{se_block.1} parent=47 // pred_fallthru
        _
    $region48: #{se_block.1} parent=5 // pred_fallthru
      _
  $region6: #{se_block.1} parent=0 // loop_footer
    %s15 = sadd.s32 1, %s11
  $region7: #{se_block.1} parent=0 // loop_footer_branch
    %10 = sbr.rel target = $region3
  $region8: #{se_block.1} parent=0 // loop_exit
    _

</llo_original>
